<compile_context>
chip_gen: v7x
topology: tpu7x:2x2x1
jax: 0.10.0
libtpu: 0.0.40
codegen_flags: <defaults>
</compile_context>

<pallas_src>
import jax
import jax.numpy as jnp
from jax.experimental import pallas as pl
from jax.experimental.pallas import tpu as pltpu

LANE = 128
NUM_LAYERS = 5


def _round_up(x, m):
    return ((x + m - 1) // m) * m


# ----------------------------------------------------------------------------
# Fused per-graph kernel: 5 x (GIN layer + ReLU) + mean-readout + tanh
# ----------------------------------------------------------------------------
def _make_netgin_kernel(num_layers, d_pad, o_pad):
    def kernel(a_ref, h_ref, w1_ref, b1_ref, w2_ref, b2_ref, l_ref, o_ref):
        a = a_ref[...]                       # [N, N], already includes (1+eps)*I
        x = h_ref[...]                       # [N, d_pad] padded features, f32
        n = a.shape[0]
        # mean over nodes as a matmul (MXU is idle; keeps the XLU reduce off
        # the critical path). Hoisted out of the layer loop.
        mean_row = jnp.full((1, n), 1.0 / n, dtype=jnp.float32)
        acc = jnp.zeros((1, o_pad), dtype=jnp.float32)

        for k in range(num_layers):          # static unroll over the 5 layers
            w1 = w1_ref[k].astype(jnp.float32)   # bf16 -> f32 (exact cast)
            w2 = w2_ref[k].astype(jnp.float32)
            # agg = (A + (1+eps) I) @ x   (self term folded into A)
            agg = jnp.dot(a, x, preferred_element_type=jnp.float32)
            z1 = jnp.dot(agg, w1, preferred_element_type=jnp.float32) + b1_ref[k]
            z1 = jnp.maximum(z1, 0.0)        # ReLU inside the Sequential MLP
            z2 = jnp.dot(z1, w2, preferred_element_type=jnp.float32) + b2_ref[k]
            x = jnp.maximum(z2, 0.0)         # F.relu in NetGIN.forward
            # per-layer graph readout, accumulated in registers (no scratch)
            mk = jnp.dot(mean_row, x, preferred_element_type=jnp.float32)   # [1, d_pad]
            acc = acc + jnp.dot(mk, l_ref[k].astype(jnp.float32),
                                preferred_element_type=jnp.float32)

        o_ref[...] = jnp.tanh(acc)           # [1, o_pad], lane-dense store
    return kernel


def net_gin_forward(a_batch, h_batch, padded_params, eps=0.0):
    """a_batch: [B, N, N] dense adjacencies, h_batch: [B, N, num_features].
    Returns [B, o_pad] (first `output_size` lanes are the real outputs)."""
    w1s, b1s, w2s, b2s, lstack = padded_params
    num_layers, d_pad, _ = w1s.shape
    o_pad = lstack.shape[-1]

    b, n, f = h_batch.shape
    assert a_batch.shape == (b, n, n)
    assert n % 8 == 0, "node count must be a multiple of 8 (sublane width)"

    h_pad = jnp.pad(h_batch, ((0, 0), (0, 0), (0, d_pad - f)))
    # fold the GIN self term (1 + eps) * I into the adjacency once
    a_self = a_batch + (1.0 + eps) * jnp.eye(n, dtype=a_batch.dtype)[None]

    kernel = _make_netgin_kernel(num_layers, d_pad, o_pad)
    const3 = lambda shp: pl.BlockSpec(shp, lambda g: (0, 0, 0))  # VMEM-resident

    out = pl.pallas_call(
        kernel,
        out_shape=jax.ShapeDtypeStruct((b, 1, o_pad), jnp.float32),
        grid=(b,),
        in_specs=[
            pl.BlockSpec((None, n, n), lambda g: (g, 0, 0)),       # A (per graph)
            pl.BlockSpec((None, n, d_pad), lambda g: (g, 0, 0)),   # H (per graph)
            const3(w1s.shape),     # W1 stacked  [L, d_pad, d_pad]  bf16, resident
            const3(b1s.shape),     # b1 stacked  [L, 1, d_pad]      f32,  resident
            const3(w2s.shape),     # W2 stacked  [L, d_pad, d_pad]  bf16, resident
            const3(b2s.shape),     # b2 stacked  [L, 1, d_pad]      f32,  resident
            const3(lstack.shape),  # readout     [L, d_pad, o_pad]  bf16, resident
        ],
        out_specs=pl.BlockSpec((None, 1, o_pad), lambda g: (g, 0, 0)),
        compiler_params=pltpu.CompilerParams(
            dimension_semantics=("parallel",)),
    )(a_self, h_pad, w1s, b1s, w2s, b2s, lstack)
    return out[:, 0, :]                       # [B, o_pad]


# ----------------------------------------------------------------------------
# Parameters (torch-Linear equivalent, stored pre-transposed as [in, out])
# ----------------------------------------------------------------------------
def init_params(key, num_features, dim, output_size):
    keys = jax.random.split(key, 25)
    params = {"convs": [], "readout": []}
    ki = 0
    in_f = num_features
    for _ in range(NUM_LAYERS):
        w1 = jax.random.normal(keys[ki], (in_f, dim), jnp.float32) * 0.1; ki += 1
        b1 = jax.random.normal(keys[ki], (1, dim), jnp.float32) * 0.1; ki += 1
        w2 = jax.random.normal(keys[ki], (dim, dim), jnp.float32) * 0.1; ki += 1
        b2 = jax.random.normal(keys[ki], (1, dim), jnp.float32) * 0.1; ki += 1
        params["convs"].append((w1, b1, w2, b2))
        in_f = dim
    for _ in range(NUM_LAYERS):
        # l_k: Linear(dim, output_size, bias=False), pre-transposed [dim, out]
        lw = jax.random.normal(keys[ki], (dim, output_size), jnp.float32) * 0.1; ki += 1
        params["readout"].append(lw)
    return params


def _bf16_round(w):
    return w.astype(jnp.bfloat16).astype(jnp.float32)


def pad_params(params, num_features, dim, output_size):
    """Zero-pad feature dims to the 128-lane width, stack per-layer weights,
    and quantize the matmul weights to bf16 (biases stay f32). Zero padding is
    numerically exact. Also returns a 'dequantized' param set (bf16-rounded,
    unpadded, f32) for a tight-tolerance reference check."""
    d_pad = max(_round_up(num_features, LANE), _round_up(dim, LANE))
    o_pad = _round_up(output_size, LANE)

    w1s, b1s, w2s, b2s, ls = [], [], [], [], []
    deq = {"convs": [], "readout": []}
    for (w1, b1, w2, b2) in params["convs"]:
        w1s.append(jnp.pad(w1, ((0, d_pad - w1.shape[0]), (0, d_pad - w1.shape[1]))))
        b1s.append(jnp.pad(b1, ((0, 0), (0, d_pad - b1.shape[1]))))
        w2s.append(jnp.pad(w2, ((0, d_pad - w2.shape[0]), (0, d_pad - w2.shape[1]))))
        b2s.append(jnp.pad(b2, ((0, 0), (0, d_pad - b2.shape[1]))))
        deq["convs"].append((_bf16_round(w1), b1, _bf16_round(w2), b2))
    for lw in params["readout"]:
        ls.append(jnp.pad(lw, ((0, d_pad - lw.shape[0]), (0, o_pad - lw.shape[1]))))
        deq["readout"].append(_bf16_round(lw))

    padded = (jnp.stack(w1s).astype(jnp.bfloat16),
              jnp.stack(b1s),
              jnp.stack(w2s).astype(jnp.bfloat16),
              jnp.stack(b2s),
              jnp.stack(ls).astype(jnp.bfloat16))
    return padded, deq, d_pad, o_pad


# ----------------------------------------------------------------------------
# Pure-JAX reference (single graph, unpadded) for correctness checks
# ----------------------------------------------------------------------------
def reference_forward(a, h, params):
    x = h
    outs = []
    for (w1, b1, w2, b2) in params["convs"]:
        agg = a @ x + x
        z = jnp.maximum(agg @ w1 + b1, 0.0) @ w2 + b2
        x = jnp.maximum(z, 0.0)
        outs.append(x)
    acc = 0.0
    for xk, lk in zip(outs, params["readout"]):
        acc = acc + jnp.mean(xk, axis=0, keepdims=True) @ lk
    return jnp.tanh(acc)


if __name__ == "__main__":
    B = 4             # batch of graphs (grid axis; weights stay VMEM-resident)
    N = 32            # nodes per graph
    NUM_FEATURES = 16
    DIM = 10          # default dim of NetGIN
    OUTPUT_SIZE = 8   # output_size; activation = 'tanh'

    key = jax.random.PRNGKey(0)
    k_a, k_h, k_p = jax.random.split(key, 3)

    # random adjacencies (no self loops), float32 0/1
    a = (jax.random.uniform(k_a, (B, N, N)) < 0.2).astype(jnp.float32)
    a = a * (1.0 - jnp.eye(N, dtype=jnp.float32)[None])

    h = jax.random.normal(k_h, (B, N, NUM_FEATURES), jnp.float32)
    params = init_params(k_p, NUM_FEATURES, DIM, OUTPUT_SIZE)
    padded, deq_params, d_pad, o_pad = pad_params(params, NUM_FEATURES, DIM,
                                                  OUTPUT_SIZE)

    out_full = net_gin_forward(a, h, padded)          # [B, o_pad]
    out_full = jax.block_until_ready(out_full)
    out = out_full[:, :OUTPUT_SIZE]
    assert out.shape == (B, OUTPUT_SIZE)

    for g in range(B):
        # tight check vs reference that uses the same bf16-rounded weights
        ref_q = reference_forward(a[g], h[g], deq_params)
        assert jnp.allclose(out[g:g + 1], ref_q, atol=1e-4, rtol=1e-4), (g, out[g], ref_q)
        # loose check vs the full-f32 reference (bf16 weight quantization)
        ref32 = reference_forward(a[g], h[g], params)
        assert jnp.allclose(out[g:g + 1], ref32, atol=3e-2, rtol=3e-2), (g, out[g], ref32)

    # padded output columns must be exactly tanh(0) = 0
    assert jnp.all(out_full[:, OUTPUT_SIZE:] == 0.0)

    print("KERNEL_OK")
</pallas_src>

<mosaic_0001>
module attributes {stable_mosaic.version = 11 : i64} {
  func.func @kernel(%arg0: i32, %arg1: memref<1x32x32xf32, #tpu.memory_space<vmem>>, %arg2: memref<1x32x128xf32, #tpu.memory_space<vmem>>, %arg3: memref<5x128x128xbf16, #tpu.memory_space<vmem>>, %arg4: memref<5x1x128xf32, #tpu.memory_space<vmem>>, %arg5: memref<5x128x128xbf16, #tpu.memory_space<vmem>>, %arg6: memref<5x1x128xf32, #tpu.memory_space<vmem>>, %arg7: memref<5x128x128xbf16, #tpu.memory_space<vmem>>, %arg8: memref<1x1x128xf32, #tpu.memory_space<vmem>>) attributes {dimension_semantics = [#tpu.dimension_semantics<parallel>], iteration_bounds = array<i64: 4>, scalar_prefetch = 0 : i64, scratch_operands = 0 : i64, tpu.core_type = #tpu.core_type<tc>, window_params = [{transform_indices = @transform_0, window_bounds = array<i64: 1, 32, 32>}, {transform_indices = @transform_1, window_bounds = array<i64: 1, 32, 128>}, {pipeline_mode = #tpu.pipeline_mode<synchronous>, transform_indices = @transform_2, window_bounds = array<i64: 5, 128, 128>}, {pipeline_mode = #tpu.pipeline_mode<synchronous>, transform_indices = @transform_3, window_bounds = array<i64: 5, 1, 128>}, {pipeline_mode = #tpu.pipeline_mode<synchronous>, transform_indices = @transform_4, window_bounds = array<i64: 5, 128, 128>}, {pipeline_mode = #tpu.pipeline_mode<synchronous>, transform_indices = @transform_5, window_bounds = array<i64: 5, 1, 128>}, {pipeline_mode = #tpu.pipeline_mode<synchronous>, transform_indices = @transform_6, window_bounds = array<i64: 5, 128, 128>}, {transform_indices = @transform_7, window_bounds = array<i64: 1, 1, 128>}]} {
    %c0 = arith.constant 0 : index
    %c0_0 = arith.constant 0 : index
    %c0_1 = arith.constant 0 : index
    %0 = vector.load %arg1[%c0, %c0_0, %c0_1] : memref<1x32x32xf32, #tpu.memory_space<vmem>>, vector<1x32x32xf32>
    %1 = vector.shape_cast %0 : vector<1x32x32xf32> to vector<32x32xf32>
    %c0_2 = arith.constant 0 : index
    %c0_3 = arith.constant 0 : index
    %c0_4 = arith.constant 0 : index
    %2 = vector.load %arg2[%c0_2, %c0_3, %c0_4] : memref<1x32x128xf32, #tpu.memory_space<vmem>>, vector<1x32x128xf32>
    %3 = vector.shape_cast %2 : vector<1x32x128xf32> to vector<32x128xf32>
    %cst = arith.constant 3.125000e-02 : f32
    %4 = vector.broadcast %cst : f32 to vector<1x32xf32>
    %cst_5 = arith.constant 0.000000e+00 : f32
    %5 = vector.broadcast %cst_5 : f32 to vector<1x128xf32>
    %c0_6 = arith.constant 0 : index
    %c0_7 = arith.constant 0 : index
    %c0_8 = arith.constant 0 : index
    %6 = vector.load %arg3[%c0_6, %c0_7, %c0_8] : memref<5x128x128xbf16, #tpu.memory_space<vmem>>, vector<1x128x128xbf16>
    %7 = vector.shape_cast %6 : vector<1x128x128xbf16> to vector<128x128xbf16>
    %8 = arith.extf %7 : vector<128x128xbf16> to vector<128x128xf32>
    %c0_9 = arith.constant 0 : index
    %c0_10 = arith.constant 0 : index
    %c0_11 = arith.constant 0 : index
    %9 = vector.load %arg5[%c0_9, %c0_10, %c0_11] : memref<5x128x128xbf16, #tpu.memory_space<vmem>>, vector<1x128x128xbf16>
    %10 = vector.shape_cast %9 : vector<1x128x128xbf16> to vector<128x128xbf16>
    %11 = arith.extf %10 : vector<128x128xbf16> to vector<128x128xf32>
    %cst_12 = arith.constant dense<0.000000e+00> : vector<32x128xf32>
    %12 = tpu.matmul %1, %3, %cst_12 {dimension_numbers = #tpu.dot_dimension_numbers<[1], [0], [0], [1], [0, 0, 1, 1], [], []>} : vector<32x32xf32>, vector<32x128xf32>, vector<32x128xf32> -> vector<32x128xf32>
    %cst_13 = arith.constant dense<0.000000e+00> : vector<32x128xf32>
    %13 = tpu.matmul %12, %8, %cst_13 {dimension_numbers = #tpu.dot_dimension_numbers<[1], [0], [0], [1], [0, 0, 1, 1], [], []>} : vector<32x128xf32>, vector<128x128xf32>, vector<32x128xf32> -> vector<32x128xf32>
    %c0_14 = arith.constant 0 : index
    %c0_15 = arith.constant 0 : index
    %c0_16 = arith.constant 0 : index
    %14 = vector.load %arg4[%c0_14, %c0_15, %c0_16] : memref<5x1x128xf32, #tpu.memory_space<vmem>>, vector<1x1x128xf32>
    %15 = vector.shape_cast %14 : vector<1x1x128xf32> to vector<1x128xf32>
    %16 = vector.broadcast %15 : vector<1x128xf32> to vector<32x128xf32>
    %17 = arith.addf %13, %16 : vector<32x128xf32>
    %cst_17 = arith.constant 0.000000e+00 : f32
    %18 = vector.broadcast %cst_17 : f32 to vector<32x128xf32>
    %19 = arith.maximumf %17, %18 : vector<32x128xf32>
    %cst_18 = arith.constant dense<0.000000e+00> : vector<32x128xf32>
    %20 = tpu.matmul %19, %11, %cst_18 {dimension_numbers = #tpu.dot_dimension_numbers<[1], [0], [0], [1], [0, 0, 1, 1], [], []>} : vector<32x128xf32>, vector<128x128xf32>, vector<32x128xf32> -> vector<32x128xf32>
    %c0_19 = arith.constant 0 : index
    %c0_20 = arith.constant 0 : index
    %c0_21 = arith.constant 0 : index
    %21 = vector.load %arg6[%c0_19, %c0_20, %c0_21] : memref<5x1x128xf32, #tpu.memory_space<vmem>>, vector<1x1x128xf32>
    %22 = vector.shape_cast %21 : vector<1x1x128xf32> to vector<1x128xf32>
    %23 = vector.broadcast %22 : vector<1x128xf32> to vector<32x128xf32>
    %24 = arith.addf %20, %23 : vector<32x128xf32>
    %cst_22 = arith.constant 0.000000e+00 : f32
    %25 = vector.broadcast %cst_22 : f32 to vector<32x128xf32>
    %26 = arith.maximumf %24, %25 : vector<32x128xf32>
    %cst_23 = arith.constant dense<0.000000e+00> : vector<1x128xf32>
    %27 = tpu.matmul %4, %26, %cst_23 {dimension_numbers = #tpu.dot_dimension_numbers<[1], [0], [0], [1], [0, 0, 1, 1], [], []>} : vector<1x32xf32>, vector<32x128xf32>, vector<1x128xf32> -> vector<1x128xf32>
    %c0_24 = arith.constant 0 : index
    %c0_25 = arith.constant 0 : index
    %c0_26 = arith.constant 0 : index
    %28 = vector.load %arg7[%c0_24, %c0_25, %c0_26] : memref<5x128x128xbf16, #tpu.memory_space<vmem>>, vector<1x128x128xbf16>
    %29 = vector.shape_cast %28 : vector<1x128x128xbf16> to vector<128x128xbf16>
    %30 = arith.extf %29 : vector<128x128xbf16> to vector<128x128xf32>
    %cst_27 = arith.constant dense<0.000000e+00> : vector<1x128xf32>
    %31 = tpu.matmul %27, %30, %cst_27 {dimension_numbers = #tpu.dot_dimension_numbers<[1], [0], [0], [1], [0, 0, 1, 1], [], []>} : vector<1x128xf32>, vector<128x128xf32>, vector<1x128xf32> -> vector<1x128xf32>
    %32 = arith.addf %5, %31 : vector<1x128xf32>
    %c1 = arith.constant 1 : index
    %c0_28 = arith.constant 0 : index
    %c0_29 = arith.constant 0 : index
    %33 = vector.load %arg3[%c1, %c0_28, %c0_29] : memref<5x128x128xbf16, #tpu.memory_space<vmem>>, vector<1x128x128xbf16>
    %34 = vector.shape_cast %33 : vector<1x128x128xbf16> to vector<128x128xbf16>
    %35 = arith.extf %34 : vector<128x128xbf16> to vector<128x128xf32>
    %c1_30 = arith.constant 1 : index
    %c0_31 = arith.constant 0 : index
    %c0_32 = arith.constant 0 : index
    %36 = vector.load %arg5[%c1_30, %c0_31, %c0_32] : memref<5x128x128xbf16, #tpu.memory_space<vmem>>, vector<1x128x128xbf16>
    %37 = vector.shape_cast %36 : vector<1x128x128xbf16> to vector<128x128xbf16>
    %38 = arith.extf %37 : vector<128x128xbf16> to vector<128x128xf32>
    %cst_33 = arith.constant dense<0.000000e+00> : vector<32x128xf32>
    %39 = tpu.matmul %1, %26, %cst_33 {dimension_numbers = #tpu.dot_dimension_numbers<[1], [0], [0], [1], [0, 0, 1, 1], [], []>} : vector<32x32xf32>, vector<32x128xf32>, vector<32x128xf32> -> vector<32x128xf32>
    %cst_34 = arith.constant dense<0.000000e+00> : vector<32x128xf32>
    %40 = tpu.matmul %39, %35, %cst_34 {dimension_numbers = #tpu.dot_dimension_numbers<[1], [0], [0], [1], [0, 0, 1, 1], [], []>} : vector<32x128xf32>, vector<128x128xf32>, vector<32x128xf32> -> vector<32x128xf32>
    %c1_35 = arith.constant 1 : index
    %c0_36 = arith.constant 0 : index
    %c0_37 = arith.constant 0 : index
    %41 = vector.load %arg4[%c1_35, %c0_36, %c0_37] : memref<5x1x128xf32, #tpu.memory_space<vmem>>, vector<1x1x128xf32>
    %42 = vector.shape_cast %41 : vector<1x1x128xf32> to vector<1x128xf32>
    %43 = vector.broadcast %42 : vector<1x128xf32> to vector<32x128xf32>
    %44 = arith.addf %40, %43 : vector<32x128xf32>
    %cst_38 = arith.constant 0.000000e+00 : f32
    %45 = vector.broadcast %cst_38 : f32 to vector<32x128xf32>
    %46 = arith.maximumf %44, %45 : vector<32x128xf32>
    %cst_39 = arith.constant dense<0.000000e+00> : vector<32x128xf32>
    %47 = tpu.matmul %46, %38, %cst_39 {dimension_numbers = #tpu.dot_dimension_numbers<[1], [0], [0], [1], [0, 0, 1, 1], [], []>} : vector<32x128xf32>, vector<128x128xf32>, vector<32x128xf32> -> vector<32x128xf32>
    %c1_40 = arith.constant 1 : index
    %c0_41 = arith.constant 0 : index
    %c0_42 = arith.constant 0 : index
    %48 = vector.load %arg6[%c1_40, %c0_41, %c0_42] : memref<5x1x128xf32, #tpu.memory_space<vmem>>, vector<1x1x128xf32>
    %49 = vector.shape_cast %48 : vector<1x1x128xf32> to vector<1x128xf32>
    %50 = vector.broadcast %49 : vector<1x128xf32> to vector<32x128xf32>
    %51 = arith.addf %47, %50 : vector<32x128xf32>
    %cst_43 = arith.constant 0.000000e+00 : f32
    %52 = vector.broadcast %cst_43 : f32 to vector<32x128xf32>
    %53 = arith.maximumf %51, %52 : vector<32x128xf32>
    %cst_44 = arith.constant dense<0.000000e+00> : vector<1x128xf32>
    %54 = tpu.matmul %4, %53, %cst_44 {dimension_numbers = #tpu.dot_dimension_numbers<[1], [0], [0], [1], [0, 0, 1, 1], [], []>} : vector<1x32xf32>, vector<32x128xf32>, vector<1x128xf32> -> vector<1x128xf32>
    %c1_45 = arith.constant 1 : index
    %c0_46 = arith.constant 0 : index
    %c0_47 = arith.constant 0 : index
    %55 = vector.load %arg7[%c1_45, %c0_46, %c0_47] : memref<5x128x128xbf16, #tpu.memory_space<vmem>>, vector<1x128x128xbf16>
    %56 = vector.shape_cast %55 : vector<1x128x128xbf16> to vector<128x128xbf16>
    %57 = arith.extf %56 : vector<128x128xbf16> to vector<128x128xf32>
    %cst_48 = arith.constant dense<0.000000e+00> : vector<1x128xf32>
    %58 = tpu.matmul %54, %57, %cst_48 {dimension_numbers = #tpu.dot_dimension_numbers<[1], [0], [0], [1], [0, 0, 1, 1], [], []>} : vector<1x128xf32>, vector<128x128xf32>, vector<1x128xf32> -> vector<1x128xf32>
    %59 = arith.addf %32, %58 : vector<1x128xf32>
    %c2 = arith.constant 2 : index
    %c0_49 = arith.constant 0 : index
    %c0_50 = arith.constant 0 : index
    %60 = vector.load %arg3[%c2, %c0_49, %c0_50] : memref<5x128x128xbf16, #tpu.memory_space<vmem>>, vector<1x128x128xbf16>
    %61 = vector.shape_cast %60 : vector<1x128x128xbf16> to vector<128x128xbf16>
    %62 = arith.extf %61 : vector<128x128xbf16> to vector<128x128xf32>
    %c2_51 = arith.constant 2 : index
    %c0_52 = arith.constant 0 : index
    %c0_53 = arith.constant 0 : index
    %63 = vector.load %arg5[%c2_51, %c0_52, %c0_53] : memref<5x128x128xbf16, #tpu.memory_space<vmem>>, vector<1x128x128xbf16>
    %64 = vector.shape_cast %63 : vector<1x128x128xbf16> to vector<128x128xbf16>
    %65 = arith.extf %64 : vector<128x128xbf16> to vector<128x128xf32>
    %cst_54 = arith.constant dense<0.000000e+00> : vector<32x128xf32>
    %66 = tpu.matmul %1, %53, %cst_54 {dimension_numbers = #tpu.dot_dimension_numbers<[1], [0], [0], [1], [0, 0, 1, 1], [], []>} : vector<32x32xf32>, vector<32x128xf32>, vector<32x128xf32> -> vector<32x128xf32>
    %cst_55 = arith.constant dense<0.000000e+00> : vector<32x128xf32>
    %67 = tpu.matmul %66, %62, %cst_55 {dimension_numbers = #tpu.dot_dimension_numbers<[1], [0], [0], [1], [0, 0, 1, 1], [], []>} : vector<32x128xf32>, vector<128x128xf32>, vector<32x128xf32> -> vector<32x128xf32>
    %c2_56 = arith.constant 2 : index
    %c0_57 = arith.constant 0 : index
    %c0_58 = arith.constant 0 : index
    %68 = vector.load %arg4[%c2_56, %c0_57, %c0_58] : memref<5x1x128xf32, #tpu.memory_space<vmem>>, vector<1x1x128xf32>
    %69 = vector.shape_cast %68 : vector<1x1x128xf32> to vector<1x128xf32>
    %70 = vector.broadcast %69 : vector<1x128xf32> to vector<32x128xf32>
    %71 = arith.addf %67, %70 : vector<32x128xf32>
    %cst_59 = arith.constant 0.000000e+00 : f32
    %72 = vector.broadcast %cst_59 : f32 to vector<32x128xf32>
    %73 = arith.maximumf %71, %72 : vector<32x128xf32>
    %cst_60 = arith.constant dense<0.000000e+00> : vector<32x128xf32>
    %74 = tpu.matmul %73, %65, %cst_60 {dimension_numbers = #tpu.dot_dimension_numbers<[1], [0], [0], [1], [0, 0, 1, 1], [], []>} : vector<32x128xf32>, vector<128x128xf32>, vector<32x128xf32> -> vector<32x128xf32>
    %c2_61 = arith.constant 2 : index
    %c0_62 = arith.constant 0 : index
    %c0_63 = arith.constant 0 : index
    %75 = vector.load %arg6[%c2_61, %c0_62, %c0_63] : memref<5x1x128xf32, #tpu.memory_space<vmem>>, vector<1x1x128xf32>
    %76 = vector.shape_cast %75 : vector<1x1x128xf32> to vector<1x128xf32>
    %77 = vector.broadcast %76 : vector<1x128xf32> to vector<32x128xf32>
    %78 = arith.addf %74, %77 : vector<32x128xf32>
    %cst_64 = arith.constant 0.000000e+00 : f32
    %79 = vector.broadcast %cst_64 : f32 to vector<32x128xf32>
    %80 = arith.maximumf %78, %79 : vector<32x128xf32>
    %cst_65 = arith.constant dense<0.000000e+00> : vector<1x128xf32>
    %81 = tpu.matmul %4, %80, %cst_65 {dimension_numbers = #tpu.dot_dimension_numbers<[1], [0], [0], [1], [0, 0, 1, 1], [], []>} : vector<1x32xf32>, vector<32x128xf32>, vector<1x128xf32> -> vector<1x128xf32>
    %c2_66 = arith.constant 2 : index
    %c0_67 = arith.constant 0 : index
    %c0_68 = arith.constant 0 : index
    %82 = vector.load %arg7[%c2_66, %c0_67, %c0_68] : memref<5x128x128xbf16, #tpu.memory_space<vmem>>, vector<1x128x128xbf16>
    %83 = vector.shape_cast %82 : vector<1x128x128xbf16> to vector<128x128xbf16>
    %84 = arith.extf %83 : vector<128x128xbf16> to vector<128x128xf32>
    %cst_69 = arith.constant dense<0.000000e+00> : vector<1x128xf32>
    %85 = tpu.matmul %81, %84, %cst_69 {dimension_numbers = #tpu.dot_dimension_numbers<[1], [0], [0], [1], [0, 0, 1, 1], [], []>} : vector<1x128xf32>, vector<128x128xf32>, vector<1x128xf32> -> vector<1x128xf32>
    %86 = arith.addf %59, %85 : vector<1x128xf32>
    %c3 = arith.constant 3 : index
    %c0_70 = arith.constant 0 : index
    %c0_71 = arith.constant 0 : index
    %87 = vector.load %arg3[%c3, %c0_70, %c0_71] : memref<5x128x128xbf16, #tpu.memory_space<vmem>>, vector<1x128x128xbf16>
    %88 = vector.shape_cast %87 : vector<1x128x128xbf16> to vector<128x128xbf16>
    %89 = arith.extf %88 : vector<128x128xbf16> to vector<128x128xf32>
    %c3_72 = arith.constant 3 : index
    %c0_73 = arith.constant 0 : index
    %c0_74 = arith.constant 0 : index
    %90 = vector.load %arg5[%c3_72, %c0_73, %c0_74] : memref<5x128x128xbf16, #tpu.memory_space<vmem>>, vector<1x128x128xbf16>
    %91 = vector.shape_cast %90 : vector<1x128x128xbf16> to vector<128x128xbf16>
    %92 = arith.extf %91 : vector<128x128xbf16> to vector<128x128xf32>
    %cst_75 = arith.constant dense<0.000000e+00> : vector<32x128xf32>
    %93 = tpu.matmul %1, %80, %cst_75 {dimension_numbers = #tpu.dot_dimension_numbers<[1], [0], [0], [1], [0, 0, 1, 1], [], []>} : vector<32x32xf32>, vector<32x128xf32>, vector<32x128xf32> -> vector<32x128xf32>
    %cst_76 = arith.constant dense<0.000000e+00> : vector<32x128xf32>
    %94 = tpu.matmul %93, %89, %cst_76 {dimension_numbers = #tpu.dot_dimension_numbers<[1], [0], [0], [1], [0, 0, 1, 1], [], []>} : vector<32x128xf32>, vector<128x128xf32>, vector<32x128xf32> -> vector<32x128xf32>
    %c3_77 = arith.constant 3 : index
    %c0_78 = arith.constant 0 : index
    %c0_79 = arith.constant 0 : index
    %95 = vector.load %arg4[%c3_77, %c0_78, %c0_79] : memref<5x1x128xf32, #tpu.memory_space<vmem>>, vector<1x1x128xf32>
    %96 = vector.shape_cast %95 : vector<1x1x128xf32> to vector<1x128xf32>
    %97 = vector.broadcast %96 : vector<1x128xf32> to vector<32x128xf32>
    %98 = arith.addf %94, %97 : vector<32x128xf32>
    %cst_80 = arith.constant 0.000000e+00 : f32
    %99 = vector.broadcast %cst_80 : f32 to vector<32x128xf32>
    %100 = arith.maximumf %98, %99 : vector<32x128xf32>
    %cst_81 = arith.constant dense<0.000000e+00> : vector<32x128xf32>
    %101 = tpu.matmul %100, %92, %cst_81 {dimension_numbers = #tpu.dot_dimension_numbers<[1], [0], [0], [1], [0, 0, 1, 1], [], []>} : vector<32x128xf32>, vector<128x128xf32>, vector<32x128xf32> -> vector<32x128xf32>
    %c3_82 = arith.constant 3 : index
    %c0_83 = arith.constant 0 : index
    %c0_84 = arith.constant 0 : index
    %102 = vector.load %arg6[%c3_82, %c0_83, %c0_84] : memref<5x1x128xf32, #tpu.memory_space<vmem>>, vector<1x1x128xf32>
    %103 = vector.shape_cast %102 : vector<1x1x128xf32> to vector<1x128xf32>
    %104 = vector.broadcast %103 : vector<1x128xf32> to vector<32x128xf32>
    %105 = arith.addf %101, %104 : vector<32x128xf32>
    %cst_85 = arith.constant 0.000000e+00 : f32
    %106 = vector.broadcast %cst_85 : f32 to vector<32x128xf32>
    %107 = arith.maximumf %105, %106 : vector<32x128xf32>
    %cst_86 = arith.constant dense<0.000000e+00> : vector<1x128xf32>
    %108 = tpu.matmul %4, %107, %cst_86 {dimension_numbers = #tpu.dot_dimension_numbers<[1], [0], [0], [1], [0, 0, 1, 1], [], []>} : vector<1x32xf32>, vector<32x128xf32>, vector<1x128xf32> -> vector<1x128xf32>
    %c3_87 = arith.constant 3 : index
    %c0_88 = arith.constant 0 : index
    %c0_89 = arith.constant 0 : index
    %109 = vector.load %arg7[%c3_87, %c0_88, %c0_89] : memref<5x128x128xbf16, #tpu.memory_space<vmem>>, vector<1x128x128xbf16>
    %110 = vector.shape_cast %109 : vector<1x128x128xbf16> to vector<128x128xbf16>
    %111 = arith.extf %110 : vector<128x128xbf16> to vector<128x128xf32>
    %cst_90 = arith.constant dense<0.000000e+00> : vector<1x128xf32>
    %112 = tpu.matmul %108, %111, %cst_90 {dimension_numbers = #tpu.dot_dimension_numbers<[1], [0], [0], [1], [0, 0, 1, 1], [], []>} : vector<1x128xf32>, vector<128x128xf32>, vector<1x128xf32> -> vector<1x128xf32>
    %113 = arith.addf %86, %112 : vector<1x128xf32>
    %c4 = arith.constant 4 : index
    %c0_91 = arith.constant 0 : index
    %c0_92 = arith.constant 0 : index
    %114 = vector.load %arg3[%c4, %c0_91, %c0_92] : memref<5x128x128xbf16, #tpu.memory_space<vmem>>, vector<1x128x128xbf16>
    %115 = vector.shape_cast %114 : vector<1x128x128xbf16> to vector<128x128xbf16>
    %116 = arith.extf %115 : vector<128x128xbf16> to vector<128x128xf32>
    %c4_93 = arith.constant 4 : index
    %c0_94 = arith.constant 0 : index
    %c0_95 = arith.constant 0 : index
    %117 = vector.load %arg5[%c4_93, %c0_94, %c0_95] : memref<5x128x128xbf16, #tpu.memory_space<vmem>>, vector<1x128x128xbf16>
    %118 = vector.shape_cast %117 : vector<1x128x128xbf16> to vector<128x128xbf16>
    %119 = arith.extf %118 : vector<128x128xbf16> to vector<128x128xf32>
    %cst_96 = arith.constant dense<0.000000e+00> : vector<32x128xf32>
    %120 = tpu.matmul %1, %107, %cst_96 {dimension_numbers = #tpu.dot_dimension_numbers<[1], [0], [0], [1], [0, 0, 1, 1], [], []>} : vector<32x32xf32>, vector<32x128xf32>, vector<32x128xf32> -> vector<32x128xf32>
    %cst_97 = arith.constant dense<0.000000e+00> : vector<32x128xf32>
    %121 = tpu.matmul %120, %116, %cst_97 {dimension_numbers = #tpu.dot_dimension_numbers<[1], [0], [0], [1], [0, 0, 1, 1], [], []>} : vector<32x128xf32>, vector<128x128xf32>, vector<32x128xf32> -> vector<32x128xf32>
    %c4_98 = arith.constant 4 : index
    %c0_99 = arith.constant 0 : index
    %c0_100 = arith.constant 0 : index
    %122 = vector.load %arg4[%c4_98, %c0_99, %c0_100] : memref<5x1x128xf32, #tpu.memory_space<vmem>>, vector<1x1x128xf32>
    %123 = vector.shape_cast %122 : vector<1x1x128xf32> to vector<1x128xf32>
    %124 = vector.broadcast %123 : vector<1x128xf32> to vector<32x128xf32>
    %125 = arith.addf %121, %124 : vector<32x128xf32>
    %cst_101 = arith.constant 0.000000e+00 : f32
    %126 = vector.broadcast %cst_101 : f32 to vector<32x128xf32>
    %127 = arith.maximumf %125, %126 : vector<32x128xf32>
    %cst_102 = arith.constant dense<0.000000e+00> : vector<32x128xf32>
    %128 = tpu.matmul %127, %119, %cst_102 {dimension_numbers = #tpu.dot_dimension_numbers<[1], [0], [0], [1], [0, 0, 1, 1], [], []>} : vector<32x128xf32>, vector<128x128xf32>, vector<32x128xf32> -> vector<32x128xf32>
    %c4_103 = arith.constant 4 : index
    %c0_104 = arith.constant 0 : index
    %c0_105 = arith.constant 0 : index
    %129 = vector.load %arg6[%c4_103, %c0_104, %c0_105] : memref<5x1x128xf32, #tpu.memory_space<vmem>>, vector<1x1x128xf32>
    %130 = vector.shape_cast %129 : vector<1x1x128xf32> to vector<1x128xf32>
    %131 = vector.broadcast %130 : vector<1x128xf32> to vector<32x128xf32>
    %132 = arith.addf %128, %131 : vector<32x128xf32>
    %cst_106 = arith.constant 0.000000e+00 : f32
    %133 = vector.broadcast %cst_106 : f32 to vector<32x128xf32>
    %134 = arith.maximumf %132, %133 : vector<32x128xf32>
    %cst_107 = arith.constant dense<0.000000e+00> : vector<1x128xf32>
    %135 = tpu.matmul %4, %134, %cst_107 {dimension_numbers = #tpu.dot_dimension_numbers<[1], [0], [0], [1], [0, 0, 1, 1], [], []>} : vector<1x32xf32>, vector<32x128xf32>, vector<1x128xf32> -> vector<1x128xf32>
    %c4_108 = arith.constant 4 : index
    %c0_109 = arith.constant 0 : index
    %c0_110 = arith.constant 0 : index
    %136 = vector.load %arg7[%c4_108, %c0_109, %c0_110] : memref<5x128x128xbf16, #tpu.memory_space<vmem>>, vector<1x128x128xbf16>
    %137 = vector.shape_cast %136 : vector<1x128x128xbf16> to vector<128x128xbf16>
    %138 = arith.extf %137 : vector<128x128xbf16> to vector<128x128xf32>
    %cst_111 = arith.constant dense<0.000000e+00> : vector<1x128xf32>
    %139 = tpu.matmul %135, %138, %cst_111 {dimension_numbers = #tpu.dot_dimension_numbers<[1], [0], [0], [1], [0, 0, 1, 1], [], []>} : vector<1x128xf32>, vector<128x128xf32>, vector<1x128xf32> -> vector<1x128xf32>
    %140 = arith.addf %113, %139 : vector<1x128xf32>
    %141 = math.tanh %140 : vector<1x128xf32>
    %c0_112 = arith.constant 0 : index
    %c0_113 = arith.constant 0 : index
    %c0_114 = arith.constant 0 : index
    %142 = vector.load %arg8[%c0_112, %c0_113, %c0_114] : memref<1x1x128xf32, #tpu.memory_space<vmem>>, vector<1x1x128xf32>
    %143 = vector.shape_cast %142 : vector<1x1x128xf32> to vector<1x128xf32>
    %144 = vector.shape_cast %141 : vector<1x128xf32> to vector<1x1x128xf32>
    tpu.vector_store %arg8[%c0_112, %c0_113, %c0_114], %144 {strides = array<i32>} : memref<1x1x128xf32, #tpu.memory_space<vmem>>, vector<1x1x128xf32>,
    return
  }
  func.func @transform_0(%arg0: i32) -> (i32, i32, i32) {
    %c0_i32 = arith.constant 0 : i32
    %c0_i32_0 = arith.constant 0 : i32
    %c0_i32_1 = arith.constant 0 : i32
    return %arg0, %c0_i32, %c0_i32_0 : i32, i32, i32
  }
  func.func @transform_1(%arg0: i32) -> (i32, i32, i32) {
    %c0_i32 = arith.constant 0 : i32
    %c0_i32_0 = arith.constant 0 : i32
    %c0_i32_1 = arith.constant 0 : i32
    return %arg0, %c0_i32, %c0_i32_0 : i32, i32, i32
  }
  func.func @transform_2(%arg0: i32) -> (i32, i32, i32) {
    %c0_i32 = arith.constant 0 : i32
    %c0_i32_0 = arith.constant 0 : i32
    %c0_i32_1 = arith.constant 0 : i32
    %c0_i32_2 = arith.constant 0 : i32
    return %c0_i32, %c0_i32_0, %c0_i32_1 : i32, i32, i32
  }
  func.func @transform_3(%arg0: i32) -> (i32, i32, i32) {
    %c0_i32 = arith.constant 0 : i32
    %c0_i32_0 = arith.constant 0 : i32
    %c0_i32_1 = arith.constant 0 : i32
    %c0_i32_2 = arith.constant 0 : i32
    return %c0_i32, %c0_i32_0, %c0_i32_1 : i32, i32, i32
  }
  func.func @transform_4(%arg0: i32) -> (i32, i32, i32) {
    %c0_i32 = arith.constant 0 : i32
    %c0_i32_0 = arith.constant 0 : i32
    %c0_i32_1 = arith.constant 0 : i32
    %c0_i32_2 = arith.constant 0 : i32
    return %c0_i32, %c0_i32_0, %c0_i32_1 : i32, i32, i32
  }
  func.func @transform_5(%arg0: i32) -> (i32, i32, i32) {
    %c0_i32 = arith.constant 0 : i32
    %c0_i32_0 = arith.constant 0 : i32
    %c0_i32_1 = arith.constant 0 : i32
    %c0_i32_2 = arith.constant 0 : i32
    return %c0_i32, %c0_i32_0, %c0_i32_1 : i32, i32, i32
  }
  func.func @transform_6(%arg0: i32) -> (i32, i32, i32) {
    %c0_i32 = arith.constant 0 : i32
    %c0_i32_0 = arith.constant 0 : i32
    %c0_i32_1 = arith.constant 0 : i32
    %c0_i32_2 = arith.constant 0 : i32
    return %c0_i32, %c0_i32_0, %c0_i32_1 : i32, i32, i32
  }
  func.func @transform_7(%arg0: i32) -> (i32, i32, i32) {
    %c0_i32 = arith.constant 0 : i32
    %c0_i32_0 = arith.constant 0 : i32
    %c0_i32_1 = arith.constant 0 : i32
    return %arg0, %c0_i32, %c0_i32_0 : i32, i32, i32
  }
}

</mosaic_0001>

<llo_original>
// kernel: tpu_custom_call.1
$region0: #{tpu_custom_call.1}
  #allocation0 [shape = 'u32[]', space=smem, size = 0x4, offset = 0x4, fixed_abs, tag = 'smem constant byte address 0x4 - core index']
  #allocation1 [shape = 'u32[144,128]{1,0:T(1,128)}', space=vmem, size = 0x12000, scoped, tag = 'internal scratch']
  %s0 = inlined_call_operand.hbm [shape: f32[4,32,32], index: 0, kind: input, shape index: {}]
  %s1 = inlined_call_operand.hbm [shape: f32[4,32,128], index: 1, kind: input, shape index: {}]
  %s2 = inlined_call_operand.hbm [shape: bf16[5,128,128], index: 2, kind: input, shape index: {}]
  %s3 = inlined_call_operand.vmem [shape: f32[5,1,128], index: 3, kind: input, shape index: {}]
  %s4 = inlined_call_operand.hbm [shape: bf16[5,128,128], index: 4, kind: input, shape index: {}]
  %s5 = inlined_call_operand.vmem [shape: f32[5,1,128], index: 5, kind: input, shape index: {}]
  %s6 = inlined_call_operand.hbm [shape: bf16[5,128,128], index: 6, kind: input, shape index: {}]
  %s7 = inlined_call_operand.hbm [shape: f32[4,1,128], index: 7, kind: output, shape index: {}]
  %s8 = sld [smem:[#allocation0]]
  $region81: #{tpu_custom_call.1} parent=0
    _
  %s10 = ssub.s32 1, %s8
  %s11 = scalar_select 0, %s10, %s8
  $region1: #{tpu_custom_call.1} parent=0
    #allocation2 [shape = 'u8[32768]{0}', space=vmem, size = 0x8000, scoped, tag = 'input window, operand 0']
    #allocation3 [shape = 's32[2]{0}', space=sflag, size = 0x8, scoped, tag = 'scoped memory for tpu_custom_call.1']
    #allocation4 [shape = 's32[2]{0}', space=sflag, size = 0x8, scoped, tag = 'scoped memory for tpu_custom_call.1']
    #allocation5 [shape = 'u8[32768]{0}', space=vmem, size = 0x8000, scoped, tag = 'input window, operand 1']
    #allocation6 [shape = 's32[2]{0}', space=sflag, size = 0x8, scoped, tag = 'scoped memory for tpu_custom_call.1']
    #allocation7 [shape = 'u8[163840]{0}', space=vmem, size = 0x28000, scoped, tag = 'input window, operand 2, single buffered']
    #allocation8 [shape = 'u8[163840]{0}', space=vmem, size = 0x28000, scoped, tag = 'input window, operand 4, single buffered']
    #allocation9 [shape = 's32[1]{0}', space=sflag, size = 0x4, scoped, tag = 'scoped memory for tpu_custom_call.1']
    #allocation10 [shape = 'u8[163840]{0}', space=vmem, size = 0x28000, scoped, tag = 'input window, operand 6, single buffered']
    #allocation11 [shape = 'u8[1024]{0}', space=vmem, size = 0x400, scoped, tag = 'output window, operand 0']
    %12 = vsyncpa [#allocation3], 0
    %s13 = scalar_lea.sflag [#allocation3], 1
    %14 = vsyncpa %s13, 0
    %15 = vsyncpa [#allocation6], 0
    %s16 = scalar_lea.sflag [#allocation6], 1
    %17 = vsyncpa %s16, 0
    %18 = vsyncpa [#allocation9], 0
    %19 = vsyncpa [#allocation4], 0
    %s20 = scalar_lea.sflag [#allocation4], 1
    %21 = vsyncpa %s20, 0
    loop: start=0, step=1, limit=6
    $region2: #{tpu_custom_call.1} parent=1 // loop_pre_header
      _
    $region3: #{tpu_custom_call.1} parent=1 // loop_header
      %s23 = sphi 0, %s27
      %p24 = scmp.ge.s32.totalorder %s23, 6
      %s33 = sphi 0, %s35
      %s36 = sphi 0, %s33
      %s37 = sphi 0, %s36
      %s53 = sphi 0, %s37
      %s59 = sphi 0, %s61
      %s62 = sphi 0, %s59
      %s63 = sphi 0, %s62
      %s79 = sphi 0, %s63
      %s83 = sphi 0, %s83
      %s85 = sphi 0, %s83
      %s86 = sphi 0, %s85
      %s100 = sphi 0, %s86
      %s104 = sphi 0, %s104
      %s106 = sphi 0, %s104
      %s107 = sphi 0, %s106
      %s121 = sphi 0, %s107
      %s125 = sphi 0, %s125
      %s127 = sphi 0, %s125
      %s128 = sphi 0, %s127
      %s142 = sphi 0, %s128
      %s146 = sphi 0, %s146
      %s148 = sphi 0, %s146
      %s149 = sphi 0, %s148
      %s163 = sphi 0, %s149
      %s167 = sphi 0, %s167
      %s169 = sphi 0, %s167
      %s170 = sphi 0, %s169
      %s184 = sphi 0, %s170
      %s190 = sphi 0, %s192
      %s193 = sphi 0, %s190
      %s194 = sphi 0, %s193
      %s210 = sphi 0, %s194
    $region4: #{tpu_custom_call.1} parent=1 // loop_header_branch
      %26 = sbr.rel (%p24) target = $region8
    $region5: #{tpu_custom_call.1} parent=1 // loop_body
      %s28 = ssub.s32 %s23, 1
      %s29 = ssub.s32 %s23, 2
      %s30 = sadd.s32 %s23, 1
      %s31 = ssub.s32 %s23, %s30
      %p32 = scmp.eq.s32.totalorder %s31, 0
      %s34 = sadd.s32 %s33, 1
      %s35 = scalar_select %p32, %s33, %s34
      %p38 = pneg %p32
      %p39 = scmp.eq.s32.totalorder %s23, 3
      %p40 = por %p38, %p39
      %p41 = scmp.ne.s32.totalorder %s33, %s36
      %p42 = scmp.eq.s32.totalorder %s23, 0
      %p43 = por %p41, %p42
      %p44 = scmp.ne.s32.totalorder %s33, %s36
      %p45 = scmp.eq.s32.totalorder %s28, 3
      %p46 = por %p44, %p45
      %p47 = scmp.ne.s32.totalorder %s36, %s37
      %p48 = scmp.eq.s32.totalorder %s28, 0
      %p49 = por %p47, %p48
      %p50 = scmp.ne.s32.totalorder %s36, %s37
      %p51 = scmp.eq.s32.totalorder %s29, 3
      %p52 = por %p50, %p51
      %p54 = scmp.ne.s32.totalorder %s37, %s53
      %p55 = scmp.eq.s32.totalorder %s29, 0
      %p56 = por %p54, %p55
      %s57 = ssub.s32 %s23, %s30
      %p58 = scmp.eq.s32.totalorder %s57, 0
      %s60 = sadd.s32 %s59, 1
      %s61 = scalar_select %p58, %s59, %s60
      %p64 = pneg %p58
      %p65 = scmp.eq.s32.totalorder %s23, 3
      %p66 = por %p64, %p65
      %p67 = scmp.ne.s32.totalorder %s59, %s62
      %p68 = scmp.eq.s32.totalorder %s23, 0
      %p69 = por %p67, %p68
      %p70 = scmp.ne.s32.totalorder %s59, %s62
      %p71 = scmp.eq.s32.totalorder %s28, 3
      %p72 = por %p70, %p71
      %p73 = scmp.ne.s32.totalorder %s62, %s63
      %p74 = scmp.eq.s32.totalorder %s28, 0
      %p75 = por %p73, %p74
      %p76 = scmp.ne.s32.totalorder %s62, %s63
      %p77 = scmp.eq.s32.totalorder %s29, 3
      %p78 = por %p76, %p77
      %p80 = scmp.ne.s32.totalorder %s63, %s79
      %p81 = scmp.eq.s32.totalorder %s29, 0
      %p82 = por %p80, %p81
      %s84 = sadd.s32 %s83, 1
      %p87 = scmp.eq.s32.totalorder %s23, 3
      %p88 = scmp.ne.s32.totalorder %s83, %s85
      %p89 = scmp.eq.s32.totalorder %s23, 0
      %p90 = por %p88, %p89
      %p91 = scmp.ne.s32.totalorder %s83, %s85
      %p92 = scmp.eq.s32.totalorder %s28, 3
      %p93 = por %p91, %p92
      %p94 = scmp.ne.s32.totalorder %s85, %s86
      %p95 = scmp.eq.s32.totalorder %s28, 0
      %p96 = por %p94, %p95
      %p97 = scmp.ne.s32.totalorder %s85, %s86
      %p98 = scmp.eq.s32.totalorder %s29, 3
      %p99 = por %p97, %p98
      %p101 = scmp.ne.s32.totalorder %s86, %s100
      %p102 = scmp.eq.s32.totalorder %s29, 0
      %p103 = por %p101, %p102
      %s105 = sadd.s32 %s104, 1
      %p108 = scmp.eq.s32.totalorder %s23, 3
      %p109 = scmp.ne.s32.totalorder %s104, %s106
      %p110 = scmp.eq.s32.totalorder %s23, 0
      %p111 = por %p109, %p110
      %p112 = scmp.ne.s32.totalorder %s104, %s106
      %p113 = scmp.eq.s32.totalorder %s28, 3
      %p114 = por %p112, %p113
      %p115 = scmp.ne.s32.totalorder %s106, %s107
      %p116 = scmp.eq.s32.totalorder %s28, 0
      %p117 = por %p115, %p116
      %p118 = scmp.ne.s32.totalorder %s106, %s107
      %p119 = scmp.eq.s32.totalorder %s29, 3
      %p120 = por %p118, %p119
      %p122 = scmp.ne.s32.totalorder %s107, %s121
      %p123 = scmp.eq.s32.totalorder %s29, 0
      %p124 = por %p122, %p123
      %s126 = sadd.s32 %s125, 1
      %p129 = scmp.eq.s32.totalorder %s23, 3
      %p130 = scmp.ne.s32.totalorder %s125, %s127
      %p131 = scmp.eq.s32.totalorder %s23, 0
      %p132 = por %p130, %p131
      %p133 = scmp.ne.s32.totalorder %s125, %s127
      %p134 = scmp.eq.s32.totalorder %s28, 3
      %p135 = por %p133, %p134
      %p136 = scmp.ne.s32.totalorder %s127, %s128
      %p137 = scmp.eq.s32.totalorder %s28, 0
      %p138 = por %p136, %p137
      %p139 = scmp.ne.s32.totalorder %s127, %s128
      %p140 = scmp.eq.s32.totalorder %s29, 3
      %p141 = por %p139, %p140
      %p143 = scmp.ne.s32.totalorder %s128, %s142
      %p144 = scmp.eq.s32.totalorder %s29, 0
      %p145 = por %p143, %p144
      %s147 = sadd.s32 %s146, 1
      %p150 = scmp.eq.s32.totalorder %s23, 3
      %p151 = scmp.ne.s32.totalorder %s146, %s148
      %p152 = scmp.eq.s32.totalorder %s23, 0
      %p153 = por %p151, %p152
      %p154 = scmp.ne.s32.totalorder %s146, %s148
      %p155 = scmp.eq.s32.totalorder %s28, 3
      %p156 = por %p154, %p155
      %p157 = scmp.ne.s32.totalorder %s148, %s149
      %p158 = scmp.eq.s32.totalorder %s28, 0
      %p159 = por %p157, %p158
      %p160 = scmp.ne.s32.totalorder %s148, %s149
      %p161 = scmp.eq.s32.totalorder %s29, 3
      %p162 = por %p160, %p161
      %p164 = scmp.ne.s32.totalorder %s149, %s163
      %p165 = scmp.eq.s32.totalorder %s29, 0
      %p166 = por %p164, %p165
      %s168 = sadd.s32 %s167, 1
      %p171 = scmp.eq.s32.totalorder %s23, 3
      %p172 = scmp.ne.s32.totalorder %s167, %s169
      %p173 = scmp.eq.s32.totalorder %s23, 0
      %p174 = por %p172, %p173
      %p175 = scmp.ne.s32.totalorder %s167, %s169
      %p176 = scmp.eq.s32.totalorder %s28, 3
      %p177 = por %p175, %p176
      %p178 = scmp.ne.s32.totalorder %s169, %s170
      %p179 = scmp.eq.s32.totalorder %s28, 0
      %p180 = por %p178, %p179
      %p181 = scmp.ne.s32.totalorder %s169, %s170
      %p182 = scmp.eq.s32.totalorder %s29, 3
      %p183 = por %p181, %p182
      %p185 = scmp.ne.s32.totalorder %s170, %s184
      %p186 = scmp.eq.s32.totalorder %s29, 0
      %p187 = por %p185, %p186
      %s188 = ssub.s32 %s23, %s30
      %p189 = scmp.eq.s32.totalorder %s188, 0
      %s191 = sadd.s32 %s190, 1
      %s192 = scalar_select %p189, %s190, %s191
      %p195 = pneg %p189
      %p196 = scmp.eq.s32.totalorder %s23, 3
      %p197 = por %p195, %p196
      %p198 = scmp.ne.s32.totalorder %s190, %s193
      %p199 = scmp.eq.s32.totalorder %s23, 0
      %p200 = por %p198, %p199
      %p201 = scmp.ne.s32.totalorder %s190, %s193
      %p202 = scmp.eq.s32.totalorder %s28, 3
      %p203 = por %p201, %p202
      %p204 = scmp.ne.s32.totalorder %s193, %s194
      %p205 = scmp.eq.s32.totalorder %s28, 0
      %p206 = por %p204, %p205
      %p207 = scmp.ne.s32.totalorder %s193, %s194
      %p208 = scmp.eq.s32.totalorder %s29, 3
      %p209 = por %p207, %p208
      %p211 = scmp.ne.s32.totalorder %s194, %s210
      %p212 = scmp.eq.s32.totalorder %s29, 0
      %p213 = por %p211, %p212
      %p214 = scmp.le.s32.totalorder 1, %s23
      %p215 = scmp.lt.s32.totalorder %s23, 5
      %p216 = pnand %p214, %p215
      %p217 = pneg %p216
      // Predicated region
      $region9: #{tpu_custom_call.1} parent=5 // pred_check
        _
      $region10: #{tpu_custom_call.1} parent=5 // pred_check_branch
        %219 = sbr.rel (%p216) target = $region12
      $region11: #{tpu_custom_call.1} parent=5 // pred_region
        %s220 = ssub.s32 %s23, 1
        // Predicated region
        $region13: #{tpu_custom_call.1} parent=11 // pred_check
          %p221 = pneg %p96
        $region14: #{tpu_custom_call.1} parent=11 // pred_check_branch
          %223 = sbr.rel (%p221) target = $region16
        $region15: #{tpu_custom_call.1} parent=11 // pred_region
          %s225 = ssub.s32 5120, 5120
          %226 = vsyncadd [#allocation6], %s225
          %s227 = sshll.u32 [#allocation7], 4
          %s228 = int_to_ptr.vmem [resolvable:$true] %s227
          %233 = dma.hbm_to_vmem [thread:$0]  %s2, 5120, %s228, [#allocation6], 64, 64, 4
        $region16: #{tpu_custom_call.1} parent=11 // pred_fallthru
          _
        // Predicated region
        $region17: #{tpu_custom_call.1} parent=11 // pred_check
          %p234 = pneg %p117
        $region18: #{tpu_custom_call.1} parent=11 // pred_check_branch
          %236 = sbr.rel (%p234) target = $region20
        $region19: #{tpu_custom_call.1} parent=11 // pred_region
          _
        $region20: #{tpu_custom_call.1} parent=11 // pred_fallthru
          _
        // Predicated region
        $region21: #{tpu_custom_call.1} parent=11 // pred_check
          %p237 = pneg %p138
        $region22: #{tpu_custom_call.1} parent=11 // pred_check_branch
          %239 = sbr.rel (%p237) target = $region24
        $region23: #{tpu_custom_call.1} parent=11 // pred_region
          %s241 = ssub.s32 5120, 5120
          %242 = vsyncadd [#allocation9], %s241
          %s243 = sshll.u32 [#allocation8], 4
          %s244 = int_to_ptr.vmem [resolvable:$true] %s243
          %249 = dma.hbm_to_vmem [thread:$0]  %s4, 5120, %s244, [#allocation9], 64, 64, 4
        $region24: #{tpu_custom_call.1} parent=11 // pred_fallthru
          _
        // Predicated region
        $region25: #{tpu_custom_call.1} parent=11 // pred_check
          %p250 = pneg %p159
        $region26: #{tpu_custom_call.1} parent=11 // pred_check_branch
          %252 = sbr.rel (%p250) target = $region28
        $region27: #{tpu_custom_call.1} parent=11 // pred_region
          _
        $region28: #{tpu_custom_call.1} parent=11 // pred_fallthru
          _
        // Predicated region
        $region29: #{tpu_custom_call.1} parent=11 // pred_check
          %p253 = pneg %p180
        $region30: #{tpu_custom_call.1} parent=11 // pred_check_branch
          %255 = sbr.rel (%p253) target = $region32
        $region31: #{tpu_custom_call.1} parent=11 // pred_region
          %s257 = ssub.s32 5120, 5120
          %258 = vsyncadd [#allocation9], %s257
          %s259 = sshll.u32 [#allocation10], 4
          %s260 = int_to_ptr.vmem [resolvable:$true] %s259
          %265 = dma.hbm_to_vmem [thread:$0]  %s6, 5120, %s260, [#allocation9], 64, 64, 4
        $region32: #{tpu_custom_call.1} parent=11 // pred_fallthru
          _
      $region12: #{tpu_custom_call.1} parent=5 // pred_fallthru
        _
      %p266 = scmp.lt.s32.totalorder %s23, 4
      // Predicated region
      $region33: #{tpu_custom_call.1} parent=5 // pred_check
        %p267 = pneg %p266
      $region34: #{tpu_custom_call.1} parent=5 // pred_check_branch
        %269 = sbr.rel (%p267) target = $region36
      $region35: #{tpu_custom_call.1} parent=5 // pred_region
        // Predicated region
        $region37: #{tpu_custom_call.1} parent=35 // pred_check
          %p270 = pneg %p43
        $region38: #{tpu_custom_call.1} parent=35 // pred_check_branch
          %272 = sbr.rel (%p270) target = $region40
        $region39: #{tpu_custom_call.1} parent=35 // pred_region
          %s273 = sand.u32 %s33, 1
          %s274 = scalar_lea.sflag [#allocation3], %s273
          %s275 = sand.u32 %s33, 1
          %s276 = smul.addr %s275, 32
          %s277 = scalar_lea.vmem [#allocation2], %s276
          %s279 = ssub.s32 512, 512
          %280 = vsyncadd %s274, %s279
          %s281 = smul.addr %s23, 4
          %s282 = smul.addr %s281, 128
          %s283 = scalar_lea.hbm %s0, %s282
          %s284 = sshll.u32 %s277, 4
          %s285 = int_to_ptr.vmem [resolvable:$true] %s284
          %290 = dma.hbm_to_vmem [thread:$0]  %s283, 512, %s285, %s274, 128, 128, 8
        $region40: #{tpu_custom_call.1} parent=35 // pred_fallthru
          _
        // Predicated region
        $region41: #{tpu_custom_call.1} parent=35 // pred_check
          %p291 = pneg %p69
        $region42: #{tpu_custom_call.1} parent=35 // pred_check_branch
          %293 = sbr.rel (%p291) target = $region44
        $region43: #{tpu_custom_call.1} parent=35 // pred_region
          %s294 = sand.u32 %s23, 1
          %s295 = scalar_lea.sflag [#allocation6], %s294
          %s296 = sand.u32 %s59, 1
          %s297 = smul.addr %s296, 32
          %s298 = scalar_lea.vmem [#allocation5], %s297
          %s300 = ssub.s32 512, 512
          %301 = vsyncadd %s295, %s300
          %s302 = smul.addr %s23, 4
          %s303 = smul.addr %s302, 128
          %s304 = scalar_lea.hbm %s1, %s303
          %s305 = sshll.u32 %s298, 4
          %s306 = int_to_ptr.vmem [resolvable:$true] %s305
          %311 = dma.hbm_to_vmem [thread:$0]  %s304, 512, %s306, %s295, 128, 128, 8
        $region44: #{tpu_custom_call.1} parent=35 // pred_fallthru
          _
      $region36: #{tpu_custom_call.1} parent=5 // pred_fallthru
        _
      %p312 = scmp.le.s32.totalorder 1, %s23
      %p313 = scmp.lt.s32.totalorder %s23, 5
      %p314 = pnand %p312, %p313
      %p315 = pneg %p314
      // Predicated region
      $region45: #{tpu_custom_call.1} parent=5 // pred_check
        _
      $region46: #{tpu_custom_call.1} parent=5 // pred_check_branch
        %317 = sbr.rel (%p314) target = $region48
      $region47: #{tpu_custom_call.1} parent=5 // pred_region
        %s318 = ssub.s32 %s23, 1
        %s319 = sand.u32 %s36, 1
        %s320 = scalar_lea.sflag [#allocation3], %s319
        %s321 = sand.u32 %s36, 1
        %s322 = smul.addr %s321, 32
        %s323 = scalar_lea.vmem [#allocation2], %s322
        // Predicated region
        $region49: #{tpu_custom_call.1} parent=47 // pred_check
          %p324 = pneg %p49
        $region50: #{tpu_custom_call.1} parent=47 // pred_check_branch
          %326 = sbr.rel (%p324) target = $region52
        $region51: #{tpu_custom_call.1} parent=47 // pred_region
          %327 = dma.done %s320, 512
        $region52: #{tpu_custom_call.1} parent=47 // pred_fallthru
          _
        %s328 = sand.u32 %s28, 1
        %s329 = scalar_lea.sflag [#allocation6], %s328
        %s330 = sand.u32 %s62, 1
        %s331 = smul.addr %s330, 32
        %s332 = scalar_lea.vmem [#allocation5], %s331
        // Predicated region
        $region53: #{tpu_custom_call.1} parent=47 // pred_check
          %p333 = pneg %p75
        $region54: #{tpu_custom_call.1} parent=47 // pred_check_branch
          %335 = sbr.rel (%p333) target = $region56
        $region55: #{tpu_custom_call.1} parent=47 // pred_region
          %336 = dma.done %s329, 512
        $region56: #{tpu_custom_call.1} parent=47 // pred_fallthru
          _
        // Predicated region
        $region57: #{tpu_custom_call.1} parent=47 // pred_check
          %p337 = pneg %p96
        $region58: #{tpu_custom_call.1} parent=47 // pred_check_branch
          %339 = sbr.rel (%p337) target = $region60
        $region59: #{tpu_custom_call.1} parent=47 // pred_region
          %340 = dma.done [#allocation6], 5120
        $region60: #{tpu_custom_call.1} parent=47 // pred_fallthru
          _
        // Predicated region
        $region61: #{tpu_custom_call.1} parent=47 // pred_check
          %p341 = pneg %p138
        $region62: #{tpu_custom_call.1} parent=47 // pred_check_branch
          %343 = sbr.rel (%p341) target = $region64
        $region63: #{tpu_custom_call.1} parent=47 // pred_region
          %344 = dma.done [#allocation9], 5120
        $region64: #{tpu_custom_call.1} parent=47 // pred_fallthru
          _
        // Predicated region
        $region65: #{tpu_custom_call.1} parent=47 // pred_check
          %p345 = pneg %p180
        $region66: #{tpu_custom_call.1} parent=47 // pred_check_branch
          %347 = sbr.rel (%p345) target = $region68
        $region67: #{tpu_custom_call.1} parent=47 // pred_region
          %348 = dma.done [#allocation9], 5120
        $region68: #{tpu_custom_call.1} parent=47 // pred_fallthru
          _
        %s349 = sand.u32 %s36, 1
        %s350 = scalar_lea.sflag [#allocation3], %s349
        %s351 = sand.u32 %s36, 1
        %s352 = smul.addr %s351, 32
        %s353 = scalar_lea.vmem [#allocation2], %s352
        %p354 = pneg %p49
        %p355 = pneg %p46
        %s356 = sand.u32 %s28, 1
        %s357 = scalar_lea.sflag [#allocation6], %s356
        %s358 = sand.u32 %s62, 1
        %s359 = smul.addr %s358, 32
        %s360 = scalar_lea.vmem [#allocation5], %s359
        %p361 = pneg %p75
        %p362 = pneg %p72
        %p363 = pneg %p96
        %p364 = pneg %p93
        %p365 = pneg %p117
        %p366 = pneg %p114
        %p367 = pneg %p138
        %p368 = pneg %p135
        %p369 = pneg %p159
        %p370 = pneg %p156
        %p371 = pneg %p180
        %p372 = pneg %p177
        %p373 = pneg %p206
        %p374 = pneg %p203
        %s375 = sand.u32 %s193, 1
        %s376 = scalar_lea.sflag [#allocation4], %s375
        %s377 = sand.u32 %s193, 1
        %s378 = scalar_lea.vmem [#allocation11], %s377
        %v379 = vld [vmem:[%s323] sm:$0xff]
        %v380 = vld [vmem:[%s323 + $0x8] sm:$0xff]
        %v381 = vld [vmem:[%s323 + $0x10] sm:$0xff]
        %v382 = vld [vmem:[%s323 + $0x18] sm:$0xff]
        %v383 = vld [vmem:[%s332] sm:$0xff]
        %v384 = vld [vmem:[%s332 + $0x8] sm:$0xff]
        %v385 = vld [vmem:[%s332 + $0x10] sm:$0xff]
        %v386 = vld [vmem:[%s332 + $0x18] sm:$0xff]
        %v387 = vld [vmem:[#allocation7] sm:$0xf]
        %v388 = vld [vmem:[#allocation7 + $0x4] sm:$0xf]
        %v389 = vld [vmem:[#allocation7 + $0x8] sm:$0xf]
        %v390 = vld [vmem:[#allocation7 + $0xc] sm:$0xf]
        %v391 = vld [vmem:[#allocation7 + $0x10] sm:$0xf]
        %v392 = vld [vmem:[#allocation7 + $0x14] sm:$0xf]
        %v393 = vld [vmem:[#allocation7 + $0x18] sm:$0xf]
        %v394 = vld [vmem:[#allocation7 + $0x1c] sm:$0xf]
        %v395 = vld [vmem:[#allocation7 + $0x20] sm:$0xf]
        %v396 = vld [vmem:[#allocation7 + $0x24] sm:$0xf]
        %v397 = vld [vmem:[#allocation7 + $0x28] sm:$0xf]
        %v398 = vld [vmem:[#allocation7 + $0x2c] sm:$0xf]
        %v399 = vld [vmem:[#allocation7 + $0x30] sm:$0xf]
        %v400 = vld [vmem:[#allocation7 + $0x34] sm:$0xf]
        %v401 = vld [vmem:[#allocation7 + $0x38] sm:$0xf]
        %v402 = vld [vmem:[#allocation7 + $0x3c] sm:$0xf]
        %v403 = vunpack.c.l.bf16 %v387
        %v404 = vunpack.c.l.bf16 %v388
        %v405 = vunpack.c.l.bf16 %v389
        %v406 = vunpack.c.l.bf16 %v390
        %v407 = vunpack.c.l.bf16 %v391
        %v408 = vunpack.c.l.bf16 %v392
        %v409 = vunpack.c.l.bf16 %v393
        %v410 = vunpack.c.l.bf16 %v394
        %v411 = vunpack.c.l.bf16 %v395
        %v412 = vunpack.c.l.bf16 %v396
        %v413 = vunpack.c.l.bf16 %v397
        %v414 = vunpack.c.l.bf16 %v398
        %v415 = vunpack.c.l.bf16 %v399
        %v416 = vunpack.c.l.bf16 %v400
        %v417 = vunpack.c.l.bf16 %v401
        %v418 = vunpack.c.l.bf16 %v402
        %v419 = vld [vmem:[#allocation8] sm:$0xf]
        %v420 = vld [vmem:[#allocation8 + $0x4] sm:$0xf]
        %v421 = vld [vmem:[#allocation8 + $0x8] sm:$0xf]
        %v422 = vld [vmem:[#allocation8 + $0xc] sm:$0xf]
        %v423 = vld [vmem:[#allocation8 + $0x10] sm:$0xf]
        %v424 = vld [vmem:[#allocation8 + $0x14] sm:$0xf]
        %v425 = vld [vmem:[#allocation8 + $0x18] sm:$0xf]
        %v426 = vld [vmem:[#allocation8 + $0x1c] sm:$0xf]
        %v427 = vld [vmem:[#allocation8 + $0x20] sm:$0xf]
        %v428 = vld [vmem:[#allocation8 + $0x24] sm:$0xf]
        %v429 = vld [vmem:[#allocation8 + $0x28] sm:$0xf]
        %v430 = vld [vmem:[#allocation8 + $0x2c] sm:$0xf]
        %v431 = vld [vmem:[#allocation8 + $0x30] sm:$0xf]
        %v432 = vld [vmem:[#allocation8 + $0x34] sm:$0xf]
        %v433 = vld [vmem:[#allocation8 + $0x38] sm:$0xf]
        %v434 = vld [vmem:[#allocation8 + $0x3c] sm:$0xf]
        %v435 = vunpack.c.l.bf16 %v419
        %v436 = vunpack.c.l.bf16 %v420
        %v437 = vunpack.c.l.bf16 %v421
        %v438 = vunpack.c.l.bf16 %v422
        %v439 = vunpack.c.l.bf16 %v423
        %v440 = vunpack.c.l.bf16 %v424
        %v441 = vunpack.c.l.bf16 %v425
        %v442 = vunpack.c.l.bf16 %v426
        %v443 = vunpack.c.l.bf16 %v427
        %v444 = vunpack.c.l.bf16 %v428
        %v445 = vunpack.c.l.bf16 %v429
        %v446 = vunpack.c.l.bf16 %v430
        %v447 = vunpack.c.l.bf16 %v431
        %v448 = vunpack.c.l.bf16 %v432
        %v449 = vunpack.c.l.bf16 %v433
        %v450 = vunpack.c.l.bf16 %v434
        %vm451 = vcmask 261120
        %v453 = vsel %vm451, %v379, 0
        %v456 = vsel %vm451, %v380, 0
        %v459 = vsel %vm451, %v381, 0
        %v462 = vsel %vm451, %v382, 0
        %464 = vmatprep.subr.mxu0 0.0
        %465 = vmatpush1.msra.mxu0 %v383
        %466 = vmatprep.subr.mxu0 0.0
        %467 = vmatpush1.msra.mxu0 %v384
        %468 = vmatprep.subr.mxu0 0.0
        %469 = vmatpush1.msra.mxu0 %v385
        %470 = vmatprep.subr.mxu0 0.0
        %471 = vmatpush1.msra.mxu0 %v386
        %472 = vmatprep.subr.mxu0 0.0
        %473 = vmatpush1.msra.mxu0 0.0
        %474 = vmatprep.subr.mxu0 0.0
        %475 = vmatpush1.msra.mxu0 0.0
        %476 = vmatprep.subr.mxu0 0.0
        %477 = vmatpush1.msra.mxu0 0.0
        %478 = vmatprep.subr.mxu0 0.0
        %479 = vmatpush1.msra.mxu0 0.0
        %480 = vmatprep.subr.mxu0 0.0
        %481 = vmatpush1.msra.mxu0 0.0
        %482 = vmatprep.subr.mxu0 0.0
        %483 = vmatpush1.msra.mxu0 0.0
        %484 = vmatprep.subr.mxu0 0.0
        %485 = vmatpush1.msra.mxu0 0.0
        %486 = vmatprep.subr.mxu0 0.0
        %487 = vmatpush1.msra.mxu0 0.0
        %488 = vmatprep.subr.mxu0 0.0
        %489 = vmatpush1.msra.mxu0 0.0
        %490 = vmatprep.subr.mxu0 0.0
        %491 = vmatpush1.msra.mxu0 0.0
        %492 = vmatprep.subr.mxu0 0.0
        %493 = vmatpush1.msra.mxu0 0.0
        %494 = vmatprep.subr.mxu0 0.0
        %495 = vmatpush1.msra.mxu0 0.0
        %496 = vmatprep.subr.mxu0 0.0
        %497 = vmatpush1.msra.mxu0 0.0
        %498 = vmatprep.subr.mxu0 0.0
        %499 = vmatpush1.msra.mxu0 0.0
        %500 = vmatprep.subr.mxu0 0.0
        %501 = vmatpush1.msra.mxu0 0.0
        %502 = vmatprep.subr.mxu0 0.0
        %503 = vmatpush1.msra.mxu0 0.0
        %504 = vmatprep.subr.mxu0 0.0
        %505 = vmatpush1.msra.mxu0 0.0
        %506 = vmatprep.subr.mxu0 0.0
        %507 = vmatpush1.msra.mxu0 0.0
        %508 = vmatprep.subr.mxu0 0.0
        %509 = vmatpush1.msra.mxu0 0.0
        %510 = vmatprep.subr.mxu0 0.0
        %511 = vmatpush1.msra.mxu0 0.0
        %512 = vmatprep.subr.mxu0 0.0
        %513 = vmatpush1.msra.mxu0 0.0
        %514 = vmatprep.subr.mxu0 0.0
        %515 = vmatpush1.msra.mxu0 0.0
        %516 = vmatprep.subr.mxu0 0.0
        %517 = vmatpush1.msra.mxu0 0.0
        %518 = vmatprep.subr.mxu0 0.0
        %519 = vmatpush1.msra.mxu0 0.0
        %520 = vmatprep.subr.mxu0 0.0
        %521 = vmatpush1.msra.mxu0 0.0
        %522 = vmatprep.subr.mxu0 0.0
        %523 = vmatpush1.msra.mxu0 0.0
        %524 = vmatprep.subr.mxu0 0.0
        %525 = vmatpush1.msra.mxu0 0.0
        %526 = vmatprep.subr.mxu0 0.0
        %527 = vmatpush1.msra.mxu0 0.0
        %528 = vmatprep.mubr.f32.mxu0 0.0
        %529 = vmatmul.mubr.f32.gmra.mrb[0].mxu0 %v453
        %v530 = vpop.f32.mrb[0].mxu0
        %v531 = vadd.f32 0.0, %v530
        %v532 = vpop.f32.mrb[0].mxu0
        %533 = vmatprep.mubr.f32.mxu0 0.0
        %534 = vmatmul.mubr.f32.gmra.mrb[0].mxu0 %v456
        %v535 = vpop.f32.mrb[0].mxu0
        %v536 = vadd.f32 0.0, %v535
        %v537 = vpop.f32.mrb[0].mxu0
        %538 = vmatprep.mubr.f32.mxu0 0.0
        %539 = vmatmul.mubr.f32.gmra.mrb[0].mxu0 %v459
        %v540 = vpop.f32.mrb[0].mxu0
        %v541 = vadd.f32 0.0, %v540
        %v542 = vpop.f32.mrb[0].mxu0
        %543 = vmatprep.mubr.f32.mxu0 0.0
        %544 = vmatmul.mubr.f32.gmra.mrb[0].mxu0 %v462
        %v545 = vpop.f32.mrb[0].mxu0
        %v546 = vadd.f32 0.0, %v545
        %v547 = vpop.f32.mrb[0].mxu0
        %548 = vdwg.mxu0
        %v549 = vld [vmem:[%s3] sm:$0x1]
        %v551 = vlaneseq
        %v552 = vshrl.u32 %v551, 7
        %v553 = vsub.s32 0, %v552
        %v554 = vrot.slane %v549, %v553
        %556 = vmatprep.subr.mxu0 0.0
        %557 = vmatpush1.msra.mxu0 %v403
        %558 = vmatprep.subr.mxu0 0.0
        %559 = vmatpush1.msra.mxu0 %v404
        %560 = vmatprep.subr.mxu0 0.0
        %561 = vmatpush1.msra.mxu0 %v405
        %562 = vmatprep.subr.mxu0 0.0
        %563 = vmatpush1.msra.mxu0 %v406
        %564 = vmatprep.subr.mxu0 0.0
        %565 = vmatpush1.msra.mxu0 %v407
        %566 = vmatprep.subr.mxu0 0.0
        %567 = vmatpush1.msra.mxu0 %v408
        %568 = vmatprep.subr.mxu0 0.0
        %569 = vmatpush1.msra.mxu0 %v409
        %570 = vmatprep.subr.mxu0 0.0
        %571 = vmatpush1.msra.mxu0 %v410
        %572 = vmatprep.subr.mxu0 0.0
        %573 = vmatpush1.msra.mxu0 %v411
        %574 = vmatprep.subr.mxu0 0.0
        %575 = vmatpush1.msra.mxu0 %v412
        %576 = vmatprep.subr.mxu0 0.0
        %577 = vmatpush1.msra.mxu0 %v413
        %578 = vmatprep.subr.mxu0 0.0
        %579 = vmatpush1.msra.mxu0 %v414
        %580 = vmatprep.subr.mxu0 0.0
        %581 = vmatpush1.msra.mxu0 %v415
        %582 = vmatprep.subr.mxu0 0.0
        %583 = vmatpush1.msra.mxu0 %v416
        %584 = vmatprep.subr.mxu0 0.0
        %585 = vmatpush1.msra.mxu0 %v417
        %586 = vmatprep.subr.mxu0 0.0
        %587 = vmatpush1.msra.mxu0 %v418
        %588 = vmatprep.subr.mxu0 0.0
        %589 = vmatpush1.msra.mxu0 0.0
        %590 = vmatprep.subr.mxu0 0.0
        %591 = vmatpush1.msra.mxu0 0.0
        %592 = vmatprep.subr.mxu0 0.0
        %593 = vmatpush1.msra.mxu0 0.0
        %594 = vmatprep.subr.mxu0 0.0
        %595 = vmatpush1.msra.mxu0 0.0
        %596 = vmatprep.subr.mxu0 0.0
        %597 = vmatpush1.msra.mxu0 0.0
        %598 = vmatprep.subr.mxu0 0.0
        %599 = vmatpush1.msra.mxu0 0.0
        %600 = vmatprep.subr.mxu0 0.0
        %601 = vmatpush1.msra.mxu0 0.0
        %602 = vmatprep.subr.mxu0 0.0
        %603 = vmatpush1.msra.mxu0 0.0
        %604 = vmatprep.subr.mxu0 0.0
        %605 = vmatpush1.msra.mxu0 0.0
        %606 = vmatprep.subr.mxu0 0.0
        %607 = vmatpush1.msra.mxu0 0.0
        %608 = vmatprep.subr.mxu0 0.0
        %609 = vmatpush1.msra.mxu0 0.0
        %610 = vmatprep.subr.mxu0 0.0
        %611 = vmatpush1.msra.mxu0 0.0
        %612 = vmatprep.subr.mxu0 0.0
        %613 = vmatpush1.msra.mxu0 0.0
        %614 = vmatprep.subr.mxu0 0.0
        %615 = vmatpush1.msra.mxu0 0.0
        %616 = vmatprep.subr.mxu0 0.0
        %617 = vmatpush1.msra.mxu0 0.0
        %618 = vmatprep.subr.mxu0 0.0
        %619 = vmatpush1.msra.mxu0 0.0
        %620 = vmatprep.mubr.f32.mxu0 0.0
        %621 = vmatmul.mubr.f32.gmra.mrb[0].mxu0 %v531
        %v622 = vpop.f32.mrb[0].mxu0
        %v623 = vadd.f32 %v554, %v622
        %v624 = vpop.f32.mrb[0].mxu0
        %625 = vmatprep.mubr.f32.mxu0 0.0
        %626 = vmatmul.mubr.f32.gmra.mrb[0].mxu0 %v536
        %v627 = vpop.f32.mrb[0].mxu0
        %v628 = vadd.f32 %v554, %v627
        %v629 = vpop.f32.mrb[0].mxu0
        %630 = vmatprep.mubr.f32.mxu0 0.0
        %631 = vmatmul.mubr.f32.gmra.mrb[0].mxu0 %v541
        %v632 = vpop.f32.mrb[0].mxu0
        %v633 = vadd.f32 %v554, %v632
        %v634 = vpop.f32.mrb[0].mxu0
        %635 = vmatprep.mubr.f32.mxu0 0.0
        %636 = vmatmul.mubr.f32.gmra.mrb[0].mxu0 %v546
        %v637 = vpop.f32.mrb[0].mxu0
        %v638 = vadd.f32 %v554, %v637
        %v639 = vpop.f32.mrb[0].mxu0
        %640 = vdwg.mxu0
        %v641 = vmax.f32 %v623, 0.0
        %v642 = vmax.f32 %v628, 0.0
        %v643 = vmax.f32 %v633, 0.0
        %v644 = vmax.f32 %v638, 0.0
        %v645 = vld [vmem:[%s5] sm:$0x1]
        %v647 = vlaneseq
        %v648 = vshrl.u32 %v647, 7
        %v649 = vsub.s32 0, %v648
        %v650 = vrot.slane %v645, %v649
        %652 = vmatprep.subr.mxu0 0.0
        %653 = vmatpush1.msra.mxu0 %v435
        %654 = vmatprep.subr.mxu0 0.0
        %655 = vmatpush1.msra.mxu0 %v436
        %656 = vmatprep.subr.mxu0 0.0
        %657 = vmatpush1.msra.mxu0 %v437
        %658 = vmatprep.subr.mxu0 0.0
        %659 = vmatpush1.msra.mxu0 %v438
        %660 = vmatprep.subr.mxu0 0.0
        %661 = vmatpush1.msra.mxu0 %v439
        %662 = vmatprep.subr.mxu0 0.0
        %663 = vmatpush1.msra.mxu0 %v440
        %664 = vmatprep.subr.mxu0 0.0
        %665 = vmatpush1.msra.mxu0 %v441
        %666 = vmatprep.subr.mxu0 0.0
        %667 = vmatpush1.msra.mxu0 %v442
        %668 = vmatprep.subr.mxu0 0.0
        %669 = vmatpush1.msra.mxu0 %v443
        %670 = vmatprep.subr.mxu0 0.0
        %671 = vmatpush1.msra.mxu0 %v444
        %672 = vmatprep.subr.mxu0 0.0
        %673 = vmatpush1.msra.mxu0 %v445
        %674 = vmatprep.subr.mxu0 0.0
        %675 = vmatpush1.msra.mxu0 %v446
        %676 = vmatprep.subr.mxu0 0.0
        %677 = vmatpush1.msra.mxu0 %v447
        %678 = vmatprep.subr.mxu0 0.0
        %679 = vmatpush1.msra.mxu0 %v448
        %680 = vmatprep.subr.mxu0 0.0
        %681 = vmatpush1.msra.mxu0 %v449
        %682 = vmatprep.subr.mxu0 0.0
        %683 = vmatpush1.msra.mxu0 %v450
        %684 = vmatprep.subr.mxu0 0.0
        %685 = vmatpush1.msra.mxu0 0.0
        %686 = vmatprep.subr.mxu0 0.0
        %687 = vmatpush1.msra.mxu0 0.0
        %688 = vmatprep.subr.mxu0 0.0
        %689 = vmatpush1.msra.mxu0 0.0
        %690 = vmatprep.subr.mxu0 0.0
        %691 = vmatpush1.msra.mxu0 0.0
        %692 = vmatprep.subr.mxu0 0.0
        %693 = vmatpush1.msra.mxu0 0.0
        %694 = vmatprep.subr.mxu0 0.0
        %695 = vmatpush1.msra.mxu0 0.0
        %696 = vmatprep.subr.mxu0 0.0
        %697 = vmatpush1.msra.mxu0 0.0
        %698 = vmatprep.subr.mxu0 0.0
        %699 = vmatpush1.msra.mxu0 0.0
        %700 = vmatprep.subr.mxu0 0.0
        %701 = vmatpush1.msra.mxu0 0.0
        %702 = vmatprep.subr.mxu0 0.0
        %703 = vmatpush1.msra.mxu0 0.0
        %704 = vmatprep.subr.mxu0 0.0
        %705 = vmatpush1.msra.mxu0 0.0
        %706 = vmatprep.subr.mxu0 0.0
        %707 = vmatpush1.msra.mxu0 0.0
        %708 = vmatprep.subr.mxu0 0.0
        %709 = vmatpush1.msra.mxu0 0.0
        %710 = vmatprep.subr.mxu0 0.0
        %711 = vmatpush1.msra.mxu0 0.0
        %712 = vmatprep.subr.mxu0 0.0
        %713 = vmatpush1.msra.mxu0 0.0
        %714 = vmatprep.subr.mxu0 0.0
        %715 = vmatpush1.msra.mxu0 0.0
        %716 = vmatprep.mubr.f32.mxu0 0.0
        %717 = vmatmul.mubr.f32.gmra.mrb[0].mxu0 %v641
        %v718 = vpop.f32.mrb[0].mxu0
        %v719 = vadd.f32 %v650, %v718
        %v720 = vpop.f32.mrb[0].mxu0
        %721 = vmatprep.mubr.f32.mxu0 0.0
        %722 = vmatmul.mubr.f32.gmra.mrb[0].mxu0 %v642
        %v723 = vpop.f32.mrb[0].mxu0
        %v724 = vadd.f32 %v650, %v723
        %v725 = vpop.f32.mrb[0].mxu0
        %726 = vmatprep.mubr.f32.mxu0 0.0
        %727 = vmatmul.mubr.f32.gmra.mrb[0].mxu0 %v643
        %v728 = vpop.f32.mrb[0].mxu0
        %v729 = vadd.f32 %v650, %v728
        %v730 = vpop.f32.mrb[0].mxu0
        %731 = vmatprep.mubr.f32.mxu0 0.0
        %732 = vmatmul.mubr.f32.gmra.mrb[0].mxu0 %v644
        %v733 = vpop.f32.mrb[0].mxu0
        %v734 = vadd.f32 %v650, %v733
        %v735 = vpop.f32.mrb[0].mxu0
        %736 = vdwg.mxu0
        %v737 = vmax.f32 %v719, 0.0
        %v738 = vmax.f32 %v724, 0.0
        %v739 = vmax.f32 %v729, 0.0
        %v740 = vmax.f32 %v734, 0.0
        %v742 = vsel %vm451, 0.03125, 0
        %744 = vmatprep.subr.mxu0 0.0
        %745 = vmatpush1.msra.mxu0 %v737
        %746 = vmatprep.subr.mxu0 0.0
        %747 = vmatpush1.msra.mxu0 %v738
        %748 = vmatprep.subr.mxu0 0.0
        %749 = vmatpush1.msra.mxu0 %v739
        %750 = vmatprep.subr.mxu0 0.0
        %751 = vmatpush1.msra.mxu0 %v740
        %752 = vmatprep.subr.mxu0 0.0
        %753 = vmatpush1.msra.mxu0 0.0
        %754 = vmatprep.subr.mxu0 0.0
        %755 = vmatpush1.msra.mxu0 0.0
        %756 = vmatprep.subr.mxu0 0.0
        %757 = vmatpush1.msra.mxu0 0.0
        %758 = vmatprep.subr.mxu0 0.0
        %759 = vmatpush1.msra.mxu0 0.0
        %760 = vmatprep.subr.mxu0 0.0
        %761 = vmatpush1.msra.mxu0 0.0
        %762 = vmatprep.subr.mxu0 0.0
        %763 = vmatpush1.msra.mxu0 0.0
        %764 = vmatprep.subr.mxu0 0.0
        %765 = vmatpush1.msra.mxu0 0.0
        %766 = vmatprep.subr.mxu0 0.0
        %767 = vmatpush1.msra.mxu0 0.0
        %768 = vmatprep.subr.mxu0 0.0
        %769 = vmatpush1.msra.mxu0 0.0
        %770 = vmatprep.subr.mxu0 0.0
        %771 = vmatpush1.msra.mxu0 0.0
        %772 = vmatprep.subr.mxu0 0.0
        %773 = vmatpush1.msra.mxu0 0.0
        %774 = vmatprep.subr.mxu0 0.0
        %775 = vmatpush1.msra.mxu0 0.0
        %776 = vmatprep.subr.mxu0 0.0
        %777 = vmatpush1.msra.mxu0 0.0
        %778 = vmatprep.subr.mxu0 0.0
        %779 = vmatpush1.msra.mxu0 0.0
        %780 = vmatprep.subr.mxu0 0.0
        %781 = vmatpush1.msra.mxu0 0.0
        %782 = vmatprep.subr.mxu0 0.0
        %783 = vmatpush1.msra.mxu0 0.0
        %784 = vmatprep.subr.mxu0 0.0
        %785 = vmatpush1.msra.mxu0 0.0
        %786 = vmatprep.subr.mxu0 0.0
        %787 = vmatpush1.msra.mxu0 0.0
        %788 = vmatprep.subr.mxu0 0.0
        %789 = vmatpush1.msra.mxu0 0.0
        %790 = vmatprep.subr.mxu0 0.0
        %791 = vmatpush1.msra.mxu0 0.0
        %792 = vmatprep.subr.mxu0 0.0
        %793 = vmatpush1.msra.mxu0 0.0
        %794 = vmatprep.subr.mxu0 0.0
        %795 = vmatpush1.msra.mxu0 0.0
        %796 = vmatprep.subr.mxu0 0.0
        %797 = vmatpush1.msra.mxu0 0.0
        %798 = vmatprep.subr.mxu0 0.0
        %799 = vmatpush1.msra.mxu0 0.0
        %800 = vmatprep.subr.mxu0 0.0
        %801 = vmatpush1.msra.mxu0 0.0
        %802 = vmatprep.subr.mxu0 0.0
        %803 = vmatpush1.msra.mxu0 0.0
        %804 = vmatprep.subr.mxu0 0.0
        %805 = vmatpush1.msra.mxu0 0.0
        %806 = vmatprep.subr.mxu0 0.0
        %807 = vmatpush1.msra.mxu0 0.0
        %808 = vmatprep.mubr.f32.mxu0 0.0
        %809 = vmatmul.mubr.f32.gmra.mrb[0].mxu0 %v742
        %v810 = vpop.f32.mrb[0].mxu0
        %v811 = vadd.f32 0.0, %v810
        %v812 = vpop.f32.mrb[0].mxu0
        %813 = vdwg.mxu0
        %v814 = vld [vmem:[#allocation10] sm:$0xf]
        %v815 = vld [vmem:[#allocation10 + $0x4] sm:$0xf]
        %v816 = vld [vmem:[#allocation10 + $0x8] sm:$0xf]
        %v817 = vld [vmem:[#allocation10 + $0xc] sm:$0xf]
        %v818 = vld [vmem:[#allocation10 + $0x10] sm:$0xf]
        %v819 = vld [vmem:[#allocation10 + $0x14] sm:$0xf]
        %v820 = vld [vmem:[#allocation10 + $0x18] sm:$0xf]
        %v821 = vld [vmem:[#allocation10 + $0x1c] sm:$0xf]
        %v822 = vld [vmem:[#allocation10 + $0x20] sm:$0xf]
        %v823 = vld [vmem:[#allocation10 + $0x24] sm:$0xf]
        %v824 = vld [vmem:[#allocation10 + $0x28] sm:$0xf]
        %v825 = vld [vmem:[#allocation10 + $0x2c] sm:$0xf]
        %v826 = vld [vmem:[#allocation10 + $0x30] sm:$0xf]
        %v827 = vld [vmem:[#allocation10 + $0x34] sm:$0xf]
        %v828 = vld [vmem:[#allocation10 + $0x38] sm:$0xf]
        %v829 = vld [vmem:[#allocation10 + $0x3c] sm:$0xf]
        %v830 = vunpack.c.l.bf16 %v814
        %v831 = vunpack.c.l.bf16 %v815
        %v832 = vunpack.c.l.bf16 %v816
        %v833 = vunpack.c.l.bf16 %v817
        %v834 = vunpack.c.l.bf16 %v818
        %v835 = vunpack.c.l.bf16 %v819
        %v836 = vunpack.c.l.bf16 %v820
        %v837 = vunpack.c.l.bf16 %v821
        %v838 = vunpack.c.l.bf16 %v822
        %v839 = vunpack.c.l.bf16 %v823
        %v840 = vunpack.c.l.bf16 %v824
        %v841 = vunpack.c.l.bf16 %v825
        %v842 = vunpack.c.l.bf16 %v826
        %v843 = vunpack.c.l.bf16 %v827
        %v844 = vunpack.c.l.bf16 %v828
        %v845 = vunpack.c.l.bf16 %v829
        %s846 = scalar_lea.vmem [#allocation7], 64
        %v847 = vld [vmem:[%s846] sm:$0xf]
        %v848 = vld [vmem:[%s846 + $0x4] sm:$0xf]
        %v849 = vld [vmem:[%s846 + $0x8] sm:$0xf]
        %v850 = vld [vmem:[%s846 + $0xc] sm:$0xf]
        %v851 = vld [vmem:[%s846 + $0x10] sm:$0xf]
        %v852 = vld [vmem:[%s846 + $0x14] sm:$0xf]
        %v853 = vld [vmem:[%s846 + $0x18] sm:$0xf]
        %v854 = vld [vmem:[%s846 + $0x1c] sm:$0xf]
        %v855 = vld [vmem:[%s846 + $0x20] sm:$0xf]
        %v856 = vld [vmem:[%s846 + $0x24] sm:$0xf]
        %v857 = vld [vmem:[%s846 + $0x28] sm:$0xf]
        %v858 = vld [vmem:[%s846 + $0x2c] sm:$0xf]
        %v859 = vld [vmem:[%s846 + $0x30] sm:$0xf]
        %v860 = vld [vmem:[%s846 + $0x34] sm:$0xf]
        %v861 = vld [vmem:[%s846 + $0x38] sm:$0xf]
        %v862 = vld [vmem:[%s846 + $0x3c] sm:$0xf]
        %v863 = vunpack.c.l.bf16 %v847
        %v864 = vunpack.c.l.bf16 %v848
        %v865 = vunpack.c.l.bf16 %v849
        %v866 = vunpack.c.l.bf16 %v850
        %v867 = vunpack.c.l.bf16 %v851
        %v868 = vunpack.c.l.bf16 %v852
        %v869 = vunpack.c.l.bf16 %v853
        %v870 = vunpack.c.l.bf16 %v854
        %v871 = vunpack.c.l.bf16 %v855
        %v872 = vunpack.c.l.bf16 %v856
        %v873 = vunpack.c.l.bf16 %v857
        %v874 = vunpack.c.l.bf16 %v858
        %v875 = vunpack.c.l.bf16 %v859
        %v876 = vunpack.c.l.bf16 %v860
        %v877 = vunpack.c.l.bf16 %v861
        %v878 = vunpack.c.l.bf16 %v862
        %s879 = scalar_lea.vmem [#allocation8], 64
        %v880 = vld [vmem:[%s879] sm:$0xf]
        %v881 = vld [vmem:[%s879 + $0x4] sm:$0xf]
        %v882 = vld [vmem:[%s879 + $0x8] sm:$0xf]
        %v883 = vld [vmem:[%s879 + $0xc] sm:$0xf]
        %v884 = vld [vmem:[%s879 + $0x10] sm:$0xf]
        %v885 = vld [vmem:[%s879 + $0x14] sm:$0xf]
        %v886 = vld [vmem:[%s879 + $0x18] sm:$0xf]
        %v887 = vld [vmem:[%s879 + $0x1c] sm:$0xf]
        %v888 = vld [vmem:[%s879 + $0x20] sm:$0xf]
        %v889 = vld [vmem:[%s879 + $0x24] sm:$0xf]
        %v890 = vld [vmem:[%s879 + $0x28] sm:$0xf]
        %v891 = vld [vmem:[%s879 + $0x2c] sm:$0xf]
        %v892 = vld [vmem:[%s879 + $0x30] sm:$0xf]
        %v893 = vld [vmem:[%s879 + $0x34] sm:$0xf]
        %v894 = vld [vmem:[%s879 + $0x38] sm:$0xf]
        %v895 = vld [vmem:[%s879 + $0x3c] sm:$0xf]
        %v896 = vunpack.c.l.bf16 %v880
        %v897 = vunpack.c.l.bf16 %v881
        %v898 = vunpack.c.l.bf16 %v882
        %v899 = vunpack.c.l.bf16 %v883
        %v900 = vunpack.c.l.bf16 %v884
        %v901 = vunpack.c.l.bf16 %v885
        %v902 = vunpack.c.l.bf16 %v886
        %v903 = vunpack.c.l.bf16 %v887
        %v904 = vunpack.c.l.bf16 %v888
        %v905 = vunpack.c.l.bf16 %v889
        %v906 = vunpack.c.l.bf16 %v890
        %v907 = vunpack.c.l.bf16 %v891
        %v908 = vunpack.c.l.bf16 %v892
        %v909 = vunpack.c.l.bf16 %v893
        %v910 = vunpack.c.l.bf16 %v894
        %v911 = vunpack.c.l.bf16 %v895
        %912 = vmatprep.subr.mxu0 0.0
        %913 = vmatpush1.msra.mxu0 %v737
        %914 = vmatprep.subr.mxu0 0.0
        %915 = vmatpush1.msra.mxu0 %v738
        %916 = vmatprep.subr.mxu0 0.0
        %917 = vmatpush1.msra.mxu0 %v739
        %918 = vmatprep.subr.mxu0 0.0
        %919 = vmatpush1.msra.mxu0 %v740
        %920 = vmatprep.subr.mxu0 0.0
        %921 = vmatpush1.msra.mxu0 0.0
        %922 = vmatprep.subr.mxu0 0.0
        %923 = vmatpush1.msra.mxu0 0.0
        %924 = vmatprep.subr.mxu0 0.0
        %925 = vmatpush1.msra.mxu0 0.0
        %926 = vmatprep.subr.mxu0 0.0
        %927 = vmatpush1.msra.mxu0 0.0
        %928 = vmatprep.subr.mxu0 0.0
        %929 = vmatpush1.msra.mxu0 0.0
        %930 = vmatprep.subr.mxu0 0.0
        %931 = vmatpush1.msra.mxu0 0.0
        %932 = vmatprep.subr.mxu0 0.0
        %933 = vmatpush1.msra.mxu0 0.0
        %934 = vmatprep.subr.mxu0 0.0
        %935 = vmatpush1.msra.mxu0 0.0
        %936 = vmatprep.subr.mxu0 0.0
        %937 = vmatpush1.msra.mxu0 0.0
        %938 = vmatprep.subr.mxu0 0.0
        %939 = vmatpush1.msra.mxu0 0.0
        %940 = vmatprep.subr.mxu0 0.0
        %941 = vmatpush1.msra.mxu0 0.0
        %942 = vmatprep.subr.mxu0 0.0
        %943 = vmatpush1.msra.mxu0 0.0
        %944 = vmatprep.subr.mxu0 0.0
        %945 = vmatpush1.msra.mxu0 0.0
        %946 = vmatprep.subr.mxu0 0.0
        %947 = vmatpush1.msra.mxu0 0.0
        %948 = vmatprep.subr.mxu0 0.0
        %949 = vmatpush1.msra.mxu0 0.0
        %950 = vmatprep.subr.mxu0 0.0
        %951 = vmatpush1.msra.mxu0 0.0
        %952 = vmatprep.subr.mxu0 0.0
        %953 = vmatpush1.msra.mxu0 0.0
        %954 = vmatprep.subr.mxu0 0.0
        %955 = vmatpush1.msra.mxu0 0.0
        %956 = vmatprep.subr.mxu0 0.0
        %957 = vmatpush1.msra.mxu0 0.0
        %958 = vmatprep.subr.mxu0 0.0
        %959 = vmatpush1.msra.mxu0 0.0
        %960 = vmatprep.subr.mxu0 0.0
        %961 = vmatpush1.msra.mxu0 0.0
        %962 = vmatprep.subr.mxu0 0.0
        %963 = vmatpush1.msra.mxu0 0.0
        %964 = vmatprep.subr.mxu0 0.0
        %965 = vmatpush1.msra.mxu0 0.0
        %966 = vmatprep.subr.mxu0 0.0
        %967 = vmatpush1.msra.mxu0 0.0
        %968 = vmatprep.subr.mxu0 0.0
        %969 = vmatpush1.msra.mxu0 0.0
        %970 = vmatprep.subr.mxu0 0.0
        %971 = vmatpush1.msra.mxu0 0.0
        %972 = vmatprep.subr.mxu0 0.0
        %973 = vmatpush1.msra.mxu0 0.0
        %974 = vmatprep.subr.mxu0 0.0
        %975 = vmatpush1.msra.mxu0 0.0
        %976 = vmatprep.mubr.f32.mxu0 0.0
        %977 = vmatmul.mubr.f32.gmra.mrb[0].mxu0 %v453
        %v978 = vpop.f32.mrb[0].mxu0
        %v979 = vadd.f32 0.0, %v978
        %v980 = vpop.f32.mrb[0].mxu0
        %981 = vmatprep.mubr.f32.mxu0 0.0
        %982 = vmatmul.mubr.f32.gmra.mrb[0].mxu0 %v456
        %v983 = vpop.f32.mrb[0].mxu0
        %v984 = vadd.f32 0.0, %v983
        %v985 = vpop.f32.mrb[0].mxu0
        %986 = vmatprep.mubr.f32.mxu0 0.0
        %987 = vmatmul.mubr.f32.gmra.mrb[0].mxu0 %v459
        %v988 = vpop.f32.mrb[0].mxu0
        %v989 = vadd.f32 0.0, %v988
        %v990 = vpop.f32.mrb[0].mxu0
        %991 = vmatprep.mubr.f32.mxu0 0.0
        %992 = vmatmul.mubr.f32.gmra.mrb[0].mxu0 %v462
        %v993 = vpop.f32.mrb[0].mxu0
        %v994 = vadd.f32 0.0, %v993
        %v995 = vpop.f32.mrb[0].mxu0
        %996 = vdwg.mxu0
        %s997 = scalar_lea.vmem %s3, 1
        %v998 = vld [vmem:[%s997] sm:$0x1]
        %v1000 = vlaneseq
        %v1001 = vshrl.u32 %v1000, 7
        %v1002 = vsub.s32 0, %v1001
        %v1003 = vrot.slane %v998, %v1002
        %1005 = vmatprep.subr.mxu0 0.0
        %1006 = vmatpush1.msra.mxu0 %v863
        %1007 = vmatprep.subr.mxu0 0.0
        %1008 = vmatpush1.msra.mxu0 %v864
        %1009 = vmatprep.subr.mxu0 0.0
        %1010 = vmatpush1.msra.mxu0 %v865
        %1011 = vmatprep.subr.mxu0 0.0
        %1012 = vmatpush1.msra.mxu0 %v866
        %1013 = vmatprep.subr.mxu0 0.0
        %1014 = vmatpush1.msra.mxu0 %v867
        %1015 = vmatprep.subr.mxu0 0.0
        %1016 = vmatpush1.msra.mxu0 %v868
        %1017 = vmatprep.subr.mxu0 0.0
        %1018 = vmatpush1.msra.mxu0 %v869
        %1019 = vmatprep.subr.mxu0 0.0
        %1020 = vmatpush1.msra.mxu0 %v870
        %1021 = vmatprep.subr.mxu0 0.0
        %1022 = vmatpush1.msra.mxu0 %v871
        %1023 = vmatprep.subr.mxu0 0.0
        %1024 = vmatpush1.msra.mxu0 %v872
        %1025 = vmatprep.subr.mxu0 0.0
        %1026 = vmatpush1.msra.mxu0 %v873
        %1027 = vmatprep.subr.mxu0 0.0
        %1028 = vmatpush1.msra.mxu0 %v874
        %1029 = vmatprep.subr.mxu0 0.0
        %1030 = vmatpush1.msra.mxu0 %v875
        %1031 = vmatprep.subr.mxu0 0.0
        %1032 = vmatpush1.msra.mxu0 %v876
        %1033 = vmatprep.subr.mxu0 0.0
        %1034 = vmatpush1.msra.mxu0 %v877
        %1035 = vmatprep.subr.mxu0 0.0
        %1036 = vmatpush1.msra.mxu0 %v878
        %1037 = vmatprep.subr.mxu0 0.0
        %1038 = vmatpush1.msra.mxu0 0.0
        %1039 = vmatprep.subr.mxu0 0.0
        %1040 = vmatpush1.msra.mxu0 0.0
        %1041 = vmatprep.subr.mxu0 0.0
        %1042 = vmatpush1.msra.mxu0 0.0
        %1043 = vmatprep.subr.mxu0 0.0
        %1044 = vmatpush1.msra.mxu0 0.0
        %1045 = vmatprep.subr.mxu0 0.0
        %1046 = vmatpush1.msra.mxu0 0.0
        %1047 = vmatprep.subr.mxu0 0.0
        %1048 = vmatpush1.msra.mxu0 0.0
        %1049 = vmatprep.subr.mxu0 0.0
        %1050 = vmatpush1.msra.mxu0 0.0
        %1051 = vmatprep.subr.mxu0 0.0
        %1052 = vmatpush1.msra.mxu0 0.0
        %1053 = vmatprep.subr.mxu0 0.0
        %1054 = vmatpush1.msra.mxu0 0.0
        %1055 = vmatprep.subr.mxu0 0.0
        %1056 = vmatpush1.msra.mxu0 0.0
        %1057 = vmatprep.subr.mxu0 0.0
        %1058 = vmatpush1.msra.mxu0 0.0
        %1059 = vmatprep.subr.mxu0 0.0
        %1060 = vmatpush1.msra.mxu0 0.0
        %1061 = vmatprep.subr.mxu0 0.0
        %1062 = vmatpush1.msra.mxu0 0.0
        %1063 = vmatprep.subr.mxu0 0.0
        %1064 = vmatpush1.msra.mxu0 0.0
        %1065 = vmatprep.subr.mxu0 0.0
        %1066 = vmatpush1.msra.mxu0 0.0
        %1067 = vmatprep.subr.mxu0 0.0
        %1068 = vmatpush1.msra.mxu0 0.0
        %1069 = vmatprep.mubr.f32.mxu0 0.0
        %1070 = vmatmul.mubr.f32.gmra.mrb[0].mxu0 %v979
        %v1071 = vpop.f32.mrb[0].mxu0
        %v1072 = vadd.f32 %v1003, %v1071
        %v1073 = vpop.f32.mrb[0].mxu0
        %1074 = vmatprep.mubr.f32.mxu0 0.0
        %1075 = vmatmul.mubr.f32.gmra.mrb[0].mxu0 %v984
        %v1076 = vpop.f32.mrb[0].mxu0
        %v1077 = vadd.f32 %v1003, %v1076
        %v1078 = vpop.f32.mrb[0].mxu0
        %1079 = vmatprep.mubr.f32.mxu0 0.0
        %1080 = vmatmul.mubr.f32.gmra.mrb[0].mxu0 %v989
        %v1081 = vpop.f32.mrb[0].mxu0
        %v1082 = vadd.f32 %v1003, %v1081
        %v1083 = vpop.f32.mrb[0].mxu0
        %1084 = vmatprep.mubr.f32.mxu0 0.0
        %1085 = vmatmul.mubr.f32.gmra.mrb[0].mxu0 %v994
        %v1086 = vpop.f32.mrb[0].mxu0
        %v1087 = vadd.f32 %v1003, %v1086
        %v1088 = vpop.f32.mrb[0].mxu0
        %1089 = vdwg.mxu0
        %v1090 = vmax.f32 %v1072, 0.0
        %v1091 = vmax.f32 %v1077, 0.0
        %v1092 = vmax.f32 %v1082, 0.0
        %v1093 = vmax.f32 %v1087, 0.0
        %s1094 = scalar_lea.vmem %s5, 1
        %v1095 = vld [vmem:[%s1094] sm:$0x1]
        %v1097 = vlaneseq
        %v1098 = vshrl.u32 %v1097, 7
        %v1099 = vsub.s32 0, %v1098
        %v1100 = vrot.slane %v1095, %v1099
        %1102 = vmatprep.subr.mxu0 0.0
        %1103 = vmatpush1.msra.mxu0 %v896
        %1104 = vmatprep.subr.mxu0 0.0
        %1105 = vmatpush1.msra.mxu0 %v897
        %1106 = vmatprep.subr.mxu0 0.0
        %1107 = vmatpush1.msra.mxu0 %v898
        %1108 = vmatprep.subr.mxu0 0.0
        %1109 = vmatpush1.msra.mxu0 %v899
        %1110 = vmatprep.subr.mxu0 0.0
        %1111 = vmatpush1.msra.mxu0 %v900
        %1112 = vmatprep.subr.mxu0 0.0
        %1113 = vmatpush1.msra.mxu0 %v901
        %1114 = vmatprep.subr.mxu0 0.0
        %1115 = vmatpush1.msra.mxu0 %v902
        %1116 = vmatprep.subr.mxu0 0.0
        %1117 = vmatpush1.msra.mxu0 %v903
        %1118 = vmatprep.subr.mxu0 0.0
        %1119 = vmatpush1.msra.mxu0 %v904
        %1120 = vmatprep.subr.mxu0 0.0
        %1121 = vmatpush1.msra.mxu0 %v905
        %1122 = vmatprep.subr.mxu0 0.0
        %1123 = vmatpush1.msra.mxu0 %v906
        %1124 = vmatprep.subr.mxu0 0.0
        %1125 = vmatpush1.msra.mxu0 %v907
        %1126 = vmatprep.subr.mxu0 0.0
        %1127 = vmatpush1.msra.mxu0 %v908
        %1128 = vmatprep.subr.mxu0 0.0
        %1129 = vmatpush1.msra.mxu0 %v909
        %1130 = vmatprep.subr.mxu0 0.0
        %1131 = vmatpush1.msra.mxu0 %v910
        %1132 = vmatprep.subr.mxu0 0.0
        %1133 = vmatpush1.msra.mxu0 %v911
        %1134 = vmatprep.subr.mxu0 0.0
        %1135 = vmatpush1.msra.mxu0 0.0
        %1136 = vmatprep.subr.mxu0 0.0
        %1137 = vmatpush1.msra.mxu0 0.0
        %1138 = vmatprep.subr.mxu0 0.0
        %1139 = vmatpush1.msra.mxu0 0.0
        %1140 = vmatprep.subr.mxu0 0.0
        %1141 = vmatpush1.msra.mxu0 0.0
        %1142 = vmatprep.subr.mxu0 0.0
        %1143 = vmatpush1.msra.mxu0 0.0
        %1144 = vmatprep.subr.mxu0 0.0
        %1145 = vmatpush1.msra.mxu0 0.0
        %1146 = vmatprep.subr.mxu0 0.0
        %1147 = vmatpush1.msra.mxu0 0.0
        %1148 = vmatprep.subr.mxu0 0.0
        %1149 = vmatpush1.msra.mxu0 0.0
        %1150 = vmatprep.subr.mxu0 0.0
        %1151 = vmatpush1.msra.mxu0 0.0
        %1152 = vmatprep.subr.mxu0 0.0
        %1153 = vmatpush1.msra.mxu0 0.0
        %1154 = vmatprep.subr.mxu0 0.0
        %1155 = vmatpush1.msra.mxu0 0.0
        %1156 = vmatprep.subr.mxu0 0.0
        %1157 = vmatpush1.msra.mxu0 0.0
        %1158 = vmatprep.subr.mxu0 0.0
        %1159 = vmatpush1.msra.mxu0 0.0
        %1160 = vmatprep.subr.mxu0 0.0
        %1161 = vmatpush1.msra.mxu0 0.0
        %1162 = vmatprep.subr.mxu0 0.0
        %1163 = vmatpush1.msra.mxu0 0.0
        %1164 = vmatprep.subr.mxu0 0.0
        %1165 = vmatpush1.msra.mxu0 0.0
        %1166 = vmatprep.mubr.f32.mxu0 0.0
        %1167 = vmatmul.mubr.f32.gmra.mrb[0].mxu0 %v1090
        %v1168 = vpop.f32.mrb[0].mxu0
        %v1169 = vadd.f32 %v1100, %v1168
        %v1170 = vpop.f32.mrb[0].mxu0
        %1171 = vmatprep.mubr.f32.mxu0 0.0
        %1172 = vmatmul.mubr.f32.gmra.mrb[0].mxu0 %v1091
        %v1173 = vpop.f32.mrb[0].mxu0
        %v1174 = vadd.f32 %v1100, %v1173
        %v1175 = vpop.f32.mrb[0].mxu0
        %1176 = vmatprep.mubr.f32.mxu0 0.0
        %1177 = vmatmul.mubr.f32.gmra.mrb[0].mxu0 %v1092
        %v1178 = vpop.f32.mrb[0].mxu0
        %v1179 = vadd.f32 %v1100, %v1178
        %v1180 = vpop.f32.mrb[0].mxu0
        %1181 = vmatprep.mubr.f32.mxu0 0.0
        %1182 = vmatmul.mubr.f32.gmra.mrb[0].mxu0 %v1093
        %v1183 = vpop.f32.mrb[0].mxu0
        %v1184 = vadd.f32 %v1100, %v1183
        %v1185 = vpop.f32.mrb[0].mxu0
        %1186 = vdwg.mxu0
        %v1187 = vmax.f32 %v1169, 0.0
        %v1188 = vmax.f32 %v1174, 0.0
        %v1189 = vmax.f32 %v1179, 0.0
        %v1190 = vmax.f32 %v1184, 0.0
        %1191 = vmatprep.subr.mxu0 0.0
        %1192 = vmatpush1.msra.mxu0 %v1187
        %1193 = vmatprep.subr.mxu0 0.0
        %1194 = vmatpush1.msra.mxu0 %v1188
        %1195 = vmatprep.subr.mxu0 0.0
        %1196 = vmatpush1.msra.mxu0 %v1189
        %1197 = vmatprep.subr.mxu0 0.0
        %1198 = vmatpush1.msra.mxu0 %v1190
        %1199 = vmatprep.subr.mxu0 0.0
        %1200 = vmatpush1.msra.mxu0 0.0
        %1201 = vmatprep.subr.mxu0 0.0
        %1202 = vmatpush1.msra.mxu0 0.0
        %1203 = vmatprep.subr.mxu0 0.0
        %1204 = vmatpush1.msra.mxu0 0.0
        %1205 = vmatprep.subr.mxu0 0.0
        %1206 = vmatpush1.msra.mxu0 0.0
        %1207 = vmatprep.subr.mxu0 0.0
        %1208 = vmatpush1.msra.mxu0 0.0
        %1209 = vmatprep.subr.mxu0 0.0
        %1210 = vmatpush1.msra.mxu0 0.0
        %1211 = vmatprep.subr.mxu0 0.0
        %1212 = vmatpush1.msra.mxu0 0.0
        %1213 = vmatprep.subr.mxu0 0.0
        %1214 = vmatpush1.msra.mxu0 0.0
        %1215 = vmatprep.subr.mxu0 0.0
        %1216 = vmatpush1.msra.mxu0 0.0
        %1217 = vmatprep.subr.mxu0 0.0
        %1218 = vmatpush1.msra.mxu0 0.0
        %1219 = vmatprep.subr.mxu0 0.0
        %1220 = vmatpush1.msra.mxu0 0.0
        %1221 = vmatprep.subr.mxu0 0.0
        %1222 = vmatpush1.msra.mxu0 0.0
        %1223 = vmatprep.subr.mxu0 0.0
        %1224 = vmatpush1.msra.mxu0 0.0
        %1225 = vmatprep.subr.mxu0 0.0
        %1226 = vmatpush1.msra.mxu0 0.0
        %1227 = vmatprep.subr.mxu0 0.0
        %1228 = vmatpush1.msra.mxu0 0.0
        %1229 = vmatprep.subr.mxu0 0.0
        %1230 = vmatpush1.msra.mxu0 0.0
        %1231 = vmatprep.subr.mxu0 0.0
        %1232 = vmatpush1.msra.mxu0 0.0
        %1233 = vmatprep.subr.mxu0 0.0
        %1234 = vmatpush1.msra.mxu0 0.0
        %1235 = vmatprep.subr.mxu0 0.0
        %1236 = vmatpush1.msra.mxu0 0.0
        %1237 = vmatprep.subr.mxu0 0.0
        %1238 = vmatpush1.msra.mxu0 0.0
        %1239 = vmatprep.subr.mxu0 0.0
        %1240 = vmatpush1.msra.mxu0 0.0
        %1241 = vmatprep.subr.mxu0 0.0
        %1242 = vmatpush1.msra.mxu0 0.0
        %1243 = vmatprep.subr.mxu0 0.0
        %1244 = vmatpush1.msra.mxu0 0.0
        %1245 = vmatprep.subr.mxu0 0.0
        %1246 = vmatpush1.msra.mxu0 0.0
        %1247 = vmatprep.subr.mxu0 0.0
        %1248 = vmatpush1.msra.mxu0 0.0
        %1249 = vmatprep.subr.mxu0 0.0
        %1250 = vmatpush1.msra.mxu0 0.0
        %1251 = vmatprep.subr.mxu0 0.0
        %1252 = vmatpush1.msra.mxu0 0.0
        %1253 = vmatprep.subr.mxu0 0.0
        %1254 = vmatpush1.msra.mxu0 0.0
        %1255 = vmatprep.mubr.f32.mxu0 0.0
        %1256 = vmatmul.mubr.f32.gmra.mrb[0].mxu0 %v742
        %v1257 = vpop.f32.mrb[0].mxu0
        %v1258 = vadd.f32 0.0, %v1257
        %v1259 = vpop.f32.mrb[0].mxu0
        %1260 = vdwg.mxu0
        %s1261 = scalar_lea.vmem [#allocation10], 64
        %v1262 = vld [vmem:[%s1261] sm:$0xf]
        %v1263 = vld [vmem:[%s1261 + $0x4] sm:$0xf]
        %v1264 = vld [vmem:[%s1261 + $0x8] sm:$0xf]
        %v1265 = vld [vmem:[%s1261 + $0xc] sm:$0xf]
        %v1266 = vld [vmem:[%s1261 + $0x10] sm:$0xf]
        %v1267 = vld [vmem:[%s1261 + $0x14] sm:$0xf]
        %v1268 = vld [vmem:[%s1261 + $0x18] sm:$0xf]
        %v1269 = vld [vmem:[%s1261 + $0x1c] sm:$0xf]
        %v1270 = vld [vmem:[%s1261 + $0x20] sm:$0xf]
        %v1271 = vld [vmem:[%s1261 + $0x24] sm:$0xf]
        %v1272 = vld [vmem:[%s1261 + $0x28] sm:$0xf]
        %v1273 = vld [vmem:[%s1261 + $0x2c] sm:$0xf]
        %v1274 = vld [vmem:[%s1261 + $0x30] sm:$0xf]
        %v1275 = vld [vmem:[%s1261 + $0x34] sm:$0xf]
        %v1276 = vld [vmem:[%s1261 + $0x38] sm:$0xf]
        %v1277 = vld [vmem:[%s1261 + $0x3c] sm:$0xf]
        %v1278 = vunpack.c.l.bf16 %v1262
        %v1279 = vunpack.c.l.bf16 %v1263
        %v1280 = vunpack.c.l.bf16 %v1264
        %v1281 = vunpack.c.l.bf16 %v1265
        %v1282 = vunpack.c.l.bf16 %v1266
        %v1283 = vunpack.c.l.bf16 %v1267
        %v1284 = vunpack.c.l.bf16 %v1268
        %v1285 = vunpack.c.l.bf16 %v1269
        %v1286 = vunpack.c.l.bf16 %v1270
        %v1287 = vunpack.c.l.bf16 %v1271
        %v1288 = vunpack.c.l.bf16 %v1272
        %v1289 = vunpack.c.l.bf16 %v1273
        %v1290 = vunpack.c.l.bf16 %v1274
        %v1291 = vunpack.c.l.bf16 %v1275
        %v1292 = vunpack.c.l.bf16 %v1276
        %v1293 = vunpack.c.l.bf16 %v1277
        %1294 = vmatprep.subr.mxu0 0.0
        %1295 = vmatpush1.msra.mxu0 %v1278
        %1296 = vmatprep.subr.mxu0 0.0
        %1297 = vmatpush1.msra.mxu0 %v1279
        %1298 = vmatprep.subr.mxu0 0.0
        %1299 = vmatpush1.msra.mxu0 %v1280
        %1300 = vmatprep.subr.mxu0 0.0
        %1301 = vmatpush1.msra.mxu0 %v1281
        %1302 = vmatprep.subr.mxu0 0.0
        %1303 = vmatpush1.msra.mxu0 %v1282
        %1304 = vmatprep.subr.mxu0 0.0
        %1305 = vmatpush1.msra.mxu0 %v1283
        %1306 = vmatprep.subr.mxu0 0.0
        %1307 = vmatpush1.msra.mxu0 %v1284
        %1308 = vmatprep.subr.mxu0 0.0
        %1309 = vmatpush1.msra.mxu0 %v1285
        %1310 = vmatprep.subr.mxu0 0.0
        %1311 = vmatpush1.msra.mxu0 %v1286
        %1312 = vmatprep.subr.mxu0 0.0
        %1313 = vmatpush1.msra.mxu0 %v1287
        %1314 = vmatprep.subr.mxu0 0.0
        %1315 = vmatpush1.msra.mxu0 %v1288
        %1316 = vmatprep.subr.mxu0 0.0
        %1317 = vmatpush1.msra.mxu0 %v1289
        %1318 = vmatprep.subr.mxu0 0.0
        %1319 = vmatpush1.msra.mxu0 %v1290
        %1320 = vmatprep.subr.mxu0 0.0
        %1321 = vmatpush1.msra.mxu0 %v1291
        %1322 = vmatprep.subr.mxu0 0.0
        %1323 = vmatpush1.msra.mxu0 %v1292
        %1324 = vmatprep.subr.mxu0 0.0
        %1325 = vmatpush1.msra.mxu0 %v1293
        %1326 = vmatprep.subr.mxu0 0.0
        %1327 = vmatpush1.msra.mxu0 0.0
        %1328 = vmatprep.subr.mxu0 0.0
        %1329 = vmatpush1.msra.mxu0 0.0
        %1330 = vmatprep.subr.mxu0 0.0
        %1331 = vmatpush1.msra.mxu0 0.0
        %1332 = vmatprep.subr.mxu0 0.0
        %1333 = vmatpush1.msra.mxu0 0.0
        %1334 = vmatprep.subr.mxu0 0.0
        %1335 = vmatpush1.msra.mxu0 0.0
        %1336 = vmatprep.subr.mxu0 0.0
        %1337 = vmatpush1.msra.mxu0 0.0
        %1338 = vmatprep.subr.mxu0 0.0
        %1339 = vmatpush1.msra.mxu0 0.0
        %1340 = vmatprep.subr.mxu0 0.0
        %1341 = vmatpush1.msra.mxu0 0.0
        %1342 = vmatprep.subr.mxu0 0.0
        %1343 = vmatpush1.msra.mxu0 0.0
        %1344 = vmatprep.subr.mxu0 0.0
        %1345 = vmatpush1.msra.mxu0 0.0
        %1346 = vmatprep.subr.mxu0 0.0
        %1347 = vmatpush1.msra.mxu0 0.0
        %1348 = vmatprep.subr.mxu0 0.0
        %1349 = vmatpush1.msra.mxu0 0.0
        %1350 = vmatprep.subr.mxu0 0.0
        %1351 = vmatpush1.msra.mxu0 0.0
        %1352 = vmatprep.subr.mxu0 0.0
        %1353 = vmatpush1.msra.mxu0 0.0
        %1354 = vmatprep.subr.mxu0 0.0
        %1355 = vmatpush1.msra.mxu0 0.0
        %1356 = vmatprep.subr.mxu0 0.0
        %1357 = vmatpush1.msra.mxu0 0.0
        %1358 = vmatprep.mubr.f32.mxu0 0.0
        %1359 = vmatmul.mubr.f32.gmra.mrb[0].mxu0 %v1258
        %v1360 = vpop.f32.mrb[0].mxu0
        %v1361 = vadd.f32 0.0, %v1360
        %v1362 = vpop.f32.mrb[0].mxu0
        %1363 = vdwg.mxu0
        %1364 = vmatprep.subr.mxu0 0.0
        %1365 = vmatpush1.msra.mxu0 %v830
        %1366 = vmatprep.subr.mxu0 0.0
        %1367 = vmatpush1.msra.mxu0 %v831
        %1368 = vmatprep.subr.mxu0 0.0
        %1369 = vmatpush1.msra.mxu0 %v832
        %1370 = vmatprep.subr.mxu0 0.0
        %1371 = vmatpush1.msra.mxu0 %v833
        %1372 = vmatprep.subr.mxu0 0.0
        %1373 = vmatpush1.msra.mxu0 %v834
        %1374 = vmatprep.subr.mxu0 0.0
        %1375 = vmatpush1.msra.mxu0 %v835
        %1376 = vmatprep.subr.mxu0 0.0
        %1377 = vmatpush1.msra.mxu0 %v836
        %1378 = vmatprep.subr.mxu0 0.0
        %1379 = vmatpush1.msra.mxu0 %v837
        %1380 = vmatprep.subr.mxu0 0.0
        %1381 = vmatpush1.msra.mxu0 %v838
        %1382 = vmatprep.subr.mxu0 0.0
        %1383 = vmatpush1.msra.mxu0 %v839
        %1384 = vmatprep.subr.mxu0 0.0
        %1385 = vmatpush1.msra.mxu0 %v840
        %1386 = vmatprep.subr.mxu0 0.0
        %1387 = vmatpush1.msra.mxu0 %v841
        %1388 = vmatprep.subr.mxu0 0.0
        %1389 = vmatpush1.msra.mxu0 %v842
        %1390 = vmatprep.subr.mxu0 0.0
        %1391 = vmatpush1.msra.mxu0 %v843
        %1392 = vmatprep.subr.mxu0 0.0
        %1393 = vmatpush1.msra.mxu0 %v844
        %1394 = vmatprep.subr.mxu0 0.0
        %1395 = vmatpush1.msra.mxu0 %v845
        %1396 = vmatprep.subr.mxu0 0.0
        %1397 = vmatpush1.msra.mxu0 0.0
        %1398 = vmatprep.subr.mxu0 0.0
        %1399 = vmatpush1.msra.mxu0 0.0
        %1400 = vmatprep.subr.mxu0 0.0
        %1401 = vmatpush1.msra.mxu0 0.0
        %1402 = vmatprep.subr.mxu0 0.0
        %1403 = vmatpush1.msra.mxu0 0.0
        %1404 = vmatprep.subr.mxu0 0.0
        %1405 = vmatpush1.msra.mxu0 0.0
        %1406 = vmatprep.subr.mxu0 0.0
        %1407 = vmatpush1.msra.mxu0 0.0
        %1408 = vmatprep.subr.mxu0 0.0
        %1409 = vmatpush1.msra.mxu0 0.0
        %1410 = vmatprep.subr.mxu0 0.0
        %1411 = vmatpush1.msra.mxu0 0.0
        %1412 = vmatprep.subr.mxu0 0.0
        %1413 = vmatpush1.msra.mxu0 0.0
        %1414 = vmatprep.subr.mxu0 0.0
        %1415 = vmatpush1.msra.mxu0 0.0
        %1416 = vmatprep.subr.mxu0 0.0
        %1417 = vmatpush1.msra.mxu0 0.0
        %1418 = vmatprep.subr.mxu0 0.0
        %1419 = vmatpush1.msra.mxu0 0.0
        %1420 = vmatprep.subr.mxu0 0.0
        %1421 = vmatpush1.msra.mxu0 0.0
        %1422 = vmatprep.subr.mxu0 0.0
        %1423 = vmatpush1.msra.mxu0 0.0
        %1424 = vmatprep.subr.mxu0 0.0
        %1425 = vmatpush1.msra.mxu0 0.0
        %1426 = vmatprep.subr.mxu0 0.0
        %1427 = vmatpush1.msra.mxu0 0.0
        %1428 = vmatprep.mubr.f32.mxu0 0.0
        %1429 = vmatmul.mubr.f32.gmra.mrb[0].mxu0 %v811
        %v1430 = vpop.f32.mrb[0].mxu0
        %v1431 = vadd.f32 %v1361, %v1430
        %v1432 = vpop.f32.mrb[0].mxu0
        %1433 = vdwg.mxu0
        %s1434 = scalar_lea.vmem [#allocation7], 128
        %v1435 = vld [vmem:[%s1434] sm:$0xf]
        %v1436 = vld [vmem:[%s1434 + $0x4] sm:$0xf]
        %v1437 = vld [vmem:[%s1434 + $0x8] sm:$0xf]
        %v1438 = vld [vmem:[%s1434 + $0xc] sm:$0xf]
        %v1439 = vld [vmem:[%s1434 + $0x10] sm:$0xf]
        %v1440 = vld [vmem:[%s1434 + $0x14] sm:$0xf]
        %v1441 = vld [vmem:[%s1434 + $0x18] sm:$0xf]
        %v1442 = vld [vmem:[%s1434 + $0x1c] sm:$0xf]
        %v1443 = vld [vmem:[%s1434 + $0x20] sm:$0xf]
        %v1444 = vld [vmem:[%s1434 + $0x24] sm:$0xf]
        %v1445 = vld [vmem:[%s1434 + $0x28] sm:$0xf]
        %v1446 = vld [vmem:[%s1434 + $0x2c] sm:$0xf]
        %v1447 = vld [vmem:[%s1434 + $0x30] sm:$0xf]
        %v1448 = vld [vmem:[%s1434 + $0x34] sm:$0xf]
        %v1449 = vld [vmem:[%s1434 + $0x38] sm:$0xf]
        %v1450 = vld [vmem:[%s1434 + $0x3c] sm:$0xf]
        %v1451 = vunpack.c.l.bf16 %v1435
        %v1452 = vunpack.c.l.bf16 %v1436
        %v1453 = vunpack.c.l.bf16 %v1437
        %v1454 = vunpack.c.l.bf16 %v1438
        %v1455 = vunpack.c.l.bf16 %v1439
        %v1456 = vunpack.c.l.bf16 %v1440
        %v1457 = vunpack.c.l.bf16 %v1441
        %v1458 = vunpack.c.l.bf16 %v1442
        %v1459 = vunpack.c.l.bf16 %v1443
        %v1460 = vunpack.c.l.bf16 %v1444
        %v1461 = vunpack.c.l.bf16 %v1445
        %v1462 = vunpack.c.l.bf16 %v1446
        %v1463 = vunpack.c.l.bf16 %v1447
        %v1464 = vunpack.c.l.bf16 %v1448
        %v1465 = vunpack.c.l.bf16 %v1449
        %v1466 = vunpack.c.l.bf16 %v1450
        %s1467 = scalar_lea.vmem [#allocation8], 128
        %v1468 = vld [vmem:[%s1467] sm:$0xf]
        %v1469 = vld [vmem:[%s1467 + $0x4] sm:$0xf]
        %v1470 = vld [vmem:[%s1467 + $0x8] sm:$0xf]
        %v1471 = vld [vmem:[%s1467 + $0xc] sm:$0xf]
        %v1472 = vld [vmem:[%s1467 + $0x10] sm:$0xf]
        %v1473 = vld [vmem:[%s1467 + $0x14] sm:$0xf]
        %v1474 = vld [vmem:[%s1467 + $0x18] sm:$0xf]
        %v1475 = vld [vmem:[%s1467 + $0x1c] sm:$0xf]
        %v1476 = vld [vmem:[%s1467 + $0x20] sm:$0xf]
        %v1477 = vld [vmem:[%s1467 + $0x24] sm:$0xf]
        %v1478 = vld [vmem:[%s1467 + $0x28] sm:$0xf]
        %v1479 = vld [vmem:[%s1467 + $0x2c] sm:$0xf]
        %v1480 = vld [vmem:[%s1467 + $0x30] sm:$0xf]
        %v1481 = vld [vmem:[%s1467 + $0x34] sm:$0xf]
        %v1482 = vld [vmem:[%s1467 + $0x38] sm:$0xf]
        %v1483 = vld [vmem:[%s1467 + $0x3c] sm:$0xf]
        %v1484 = vunpack.c.l.bf16 %v1468
        %v1485 = vunpack.c.l.bf16 %v1469
        %v1486 = vunpack.c.l.bf16 %v1470
        %v1487 = vunpack.c.l.bf16 %v1471
        %v1488 = vunpack.c.l.bf16 %v1472
        %v1489 = vunpack.c.l.bf16 %v1473
        %v1490 = vunpack.c.l.bf16 %v1474
        %v1491 = vunpack.c.l.bf16 %v1475
        %v1492 = vunpack.c.l.bf16 %v1476
        %v1493 = vunpack.c.l.bf16 %v1477
        %v1494 = vunpack.c.l.bf16 %v1478
        %v1495 = vunpack.c.l.bf16 %v1479
        %v1496 = vunpack.c.l.bf16 %v1480
        %v1497 = vunpack.c.l.bf16 %v1481
        %v1498 = vunpack.c.l.bf16 %v1482
        %v1499 = vunpack.c.l.bf16 %v1483
        %1500 = vmatprep.subr.mxu0 0.0
        %1501 = vmatpush1.msra.mxu0 %v1187
        %1502 = vmatprep.subr.mxu0 0.0
        %1503 = vmatpush1.msra.mxu0 %v1188
        %1504 = vmatprep.subr.mxu0 0.0
        %1505 = vmatpush1.msra.mxu0 %v1189
        %1506 = vmatprep.subr.mxu0 0.0
        %1507 = vmatpush1.msra.mxu0 %v1190
        %1508 = vmatprep.subr.mxu0 0.0
        %1509 = vmatpush1.msra.mxu0 0.0
        %1510 = vmatprep.subr.mxu0 0.0
        %1511 = vmatpush1.msra.mxu0 0.0
        %1512 = vmatprep.subr.mxu0 0.0
        %1513 = vmatpush1.msra.mxu0 0.0
        %1514 = vmatprep.subr.mxu0 0.0
        %1515 = vmatpush1.msra.mxu0 0.0
        %1516 = vmatprep.subr.mxu0 0.0
        %1517 = vmatpush1.msra.mxu0 0.0
        %1518 = vmatprep.subr.mxu0 0.0
        %1519 = vmatpush1.msra.mxu0 0.0
        %1520 = vmatprep.subr.mxu0 0.0
        %1521 = vmatpush1.msra.mxu0 0.0
        %1522 = vmatprep.subr.mxu0 0.0
        %1523 = vmatpush1.msra.mxu0 0.0
        %1524 = vmatprep.subr.mxu0 0.0
        %1525 = vmatpush1.msra.mxu0 0.0
        %1526 = vmatprep.subr.mxu0 0.0
        %1527 = vmatpush1.msra.mxu0 0.0
        %1528 = vmatprep.subr.mxu0 0.0
        %1529 = vmatpush1.msra.mxu0 0.0
        %1530 = vmatprep.subr.mxu0 0.0
        %1531 = vmatpush1.msra.mxu0 0.0
        %1532 = vmatprep.subr.mxu0 0.0
        %1533 = vmatpush1.msra.mxu0 0.0
        %1534 = vmatprep.subr.mxu0 0.0
        %1535 = vmatpush1.msra.mxu0 0.0
        %1536 = vmatprep.subr.mxu0 0.0
        %1537 = vmatpush1.msra.mxu0 0.0
        %1538 = vmatprep.subr.mxu0 0.0
        %1539 = vmatpush1.msra.mxu0 0.0
        %1540 = vmatprep.subr.mxu0 0.0
        %1541 = vmatpush1.msra.mxu0 0.0
        %1542 = vmatprep.subr.mxu0 0.0
        %1543 = vmatpush1.msra.mxu0 0.0
        %1544 = vmatprep.subr.mxu0 0.0
        %1545 = vmatpush1.msra.mxu0 0.0
        %1546 = vmatprep.subr.mxu0 0.0
        %1547 = vmatpush1.msra.mxu0 0.0
        %1548 = vmatprep.subr.mxu0 0.0
        %1549 = vmatpush1.msra.mxu0 0.0
        %1550 = vmatprep.subr.mxu0 0.0
        %1551 = vmatpush1.msra.mxu0 0.0
        %1552 = vmatprep.subr.mxu0 0.0
        %1553 = vmatpush1.msra.mxu0 0.0
        %1554 = vmatprep.subr.mxu0 0.0
        %1555 = vmatpush1.msra.mxu0 0.0
        %1556 = vmatprep.subr.mxu0 0.0
        %1557 = vmatpush1.msra.mxu0 0.0
        %1558 = vmatprep.subr.mxu0 0.0
        %1559 = vmatpush1.msra.mxu0 0.0
        %1560 = vmatprep.subr.mxu0 0.0
        %1561 = vmatpush1.msra.mxu0 0.0
        %1562 = vmatprep.subr.mxu0 0.0
        %1563 = vmatpush1.msra.mxu0 0.0
        %1564 = vmatprep.mubr.f32.mxu0 0.0
        %1565 = vmatmul.mubr.f32.gmra.mrb[0].mxu0 %v453
        %v1566 = vpop.f32.mrb[0].mxu0
        %v1567 = vadd.f32 0.0, %v1566
        %v1568 = vpop.f32.mrb[0].mxu0
        %1569 = vmatprep.mubr.f32.mxu0 0.0
        %1570 = vmatmul.mubr.f32.gmra.mrb[0].mxu0 %v456
        %v1571 = vpop.f32.mrb[0].mxu0
        %v1572 = vadd.f32 0.0, %v1571
        %v1573 = vpop.f32.mrb[0].mxu0
        %1574 = vmatprep.mubr.f32.mxu0 0.0
        %1575 = vmatmul.mubr.f32.gmra.mrb[0].mxu0 %v459
        %v1576 = vpop.f32.mrb[0].mxu0
        %v1577 = vadd.f32 0.0, %v1576
        %v1578 = vpop.f32.mrb[0].mxu0
        %1579 = vmatprep.mubr.f32.mxu0 0.0
        %1580 = vmatmul.mubr.f32.gmra.mrb[0].mxu0 %v462
        %v1581 = vpop.f32.mrb[0].mxu0
        %v1582 = vadd.f32 0.0, %v1581
        %v1583 = vpop.f32.mrb[0].mxu0
        %1584 = vdwg.mxu0
        %s1585 = scalar_lea.vmem %s3, 2
        %v1586 = vld [vmem:[%s1585] sm:$0x1]
        %v1588 = vlaneseq
        %v1589 = vshrl.u32 %v1588, 7
        %v1590 = vsub.s32 0, %v1589
        %v1591 = vrot.slane %v1586, %v1590
        %1593 = vmatprep.subr.mxu0 0.0
        %1594 = vmatpush1.msra.mxu0 %v1451
        %1595 = vmatprep.subr.mxu0 0.0
        %1596 = vmatpush1.msra.mxu0 %v1452
        %1597 = vmatprep.subr.mxu0 0.0
        %1598 = vmatpush1.msra.mxu0 %v1453
        %1599 = vmatprep.subr.mxu0 0.0
        %1600 = vmatpush1.msra.mxu0 %v1454
        %1601 = vmatprep.subr.mxu0 0.0
        %1602 = vmatpush1.msra.mxu0 %v1455
        %1603 = vmatprep.subr.mxu0 0.0
        %1604 = vmatpush1.msra.mxu0 %v1456
        %1605 = vmatprep.subr.mxu0 0.0
        %1606 = vmatpush1.msra.mxu0 %v1457
        %1607 = vmatprep.subr.mxu0 0.0
        %1608 = vmatpush1.msra.mxu0 %v1458
        %1609 = vmatprep.subr.mxu0 0.0
        %1610 = vmatpush1.msra.mxu0 %v1459
        %1611 = vmatprep.subr.mxu0 0.0
        %1612 = vmatpush1.msra.mxu0 %v1460
        %1613 = vmatprep.subr.mxu0 0.0
        %1614 = vmatpush1.msra.mxu0 %v1461
        %1615 = vmatprep.subr.mxu0 0.0
        %1616 = vmatpush1.msra.mxu0 %v1462
        %1617 = vmatprep.subr.mxu0 0.0
        %1618 = vmatpush1.msra.mxu0 %v1463
        %1619 = vmatprep.subr.mxu0 0.0
        %1620 = vmatpush1.msra.mxu0 %v1464
        %1621 = vmatprep.subr.mxu0 0.0
        %1622 = vmatpush1.msra.mxu0 %v1465
        %1623 = vmatprep.subr.mxu0 0.0
        %1624 = vmatpush1.msra.mxu0 %v1466
        %1625 = vmatprep.subr.mxu0 0.0
        %1626 = vmatpush1.msra.mxu0 0.0
        %1627 = vmatprep.subr.mxu0 0.0
        %1628 = vmatpush1.msra.mxu0 0.0
        %1629 = vmatprep.subr.mxu0 0.0
        %1630 = vmatpush1.msra.mxu0 0.0
        %1631 = vmatprep.subr.mxu0 0.0
        %1632 = vmatpush1.msra.mxu0 0.0
        %1633 = vmatprep.subr.mxu0 0.0
        %1634 = vmatpush1.msra.mxu0 0.0
        %1635 = vmatprep.subr.mxu0 0.0
        %1636 = vmatpush1.msra.mxu0 0.0
        %1637 = vmatprep.subr.mxu0 0.0
        %1638 = vmatpush1.msra.mxu0 0.0
        %1639 = vmatprep.subr.mxu0 0.0
        %1640 = vmatpush1.msra.mxu0 0.0
        %1641 = vmatprep.subr.mxu0 0.0
        %1642 = vmatpush1.msra.mxu0 0.0
        %1643 = vmatprep.subr.mxu0 0.0
        %1644 = vmatpush1.msra.mxu0 0.0
        %1645 = vmatprep.subr.mxu0 0.0
        %1646 = vmatpush1.msra.mxu0 0.0
        %1647 = vmatprep.subr.mxu0 0.0
        %1648 = vmatpush1.msra.mxu0 0.0
        %1649 = vmatprep.subr.mxu0 0.0
        %1650 = vmatpush1.msra.mxu0 0.0
        %1651 = vmatprep.subr.mxu0 0.0
        %1652 = vmatpush1.msra.mxu0 0.0
        %1653 = vmatprep.subr.mxu0 0.0
        %1654 = vmatpush1.msra.mxu0 0.0
        %1655 = vmatprep.subr.mxu0 0.0
        %1656 = vmatpush1.msra.mxu0 0.0
        %1657 = vmatprep.mubr.f32.mxu0 0.0
        %1658 = vmatmul.mubr.f32.gmra.mrb[0].mxu0 %v1567
        %v1659 = vpop.f32.mrb[0].mxu0
        %v1660 = vadd.f32 %v1591, %v1659
        %v1661 = vpop.f32.mrb[0].mxu0
        %1662 = vmatprep.mubr.f32.mxu0 0.0
        %1663 = vmatmul.mubr.f32.gmra.mrb[0].mxu0 %v1572
        %v1664 = vpop.f32.mrb[0].mxu0
        %v1665 = vadd.f32 %v1591, %v1664
        %v1666 = vpop.f32.mrb[0].mxu0
        %1667 = vmatprep.mubr.f32.mxu0 0.0
        %1668 = vmatmul.mubr.f32.gmra.mrb[0].mxu0 %v1577
        %v1669 = vpop.f32.mrb[0].mxu0
        %v1670 = vadd.f32 %v1591, %v1669
        %v1671 = vpop.f32.mrb[0].mxu0
        %1672 = vmatprep.mubr.f32.mxu0 0.0
        %1673 = vmatmul.mubr.f32.gmra.mrb[0].mxu0 %v1582
        %v1674 = vpop.f32.mrb[0].mxu0
        %v1675 = vadd.f32 %v1591, %v1674
        %v1676 = vpop.f32.mrb[0].mxu0
        %1677 = vdwg.mxu0
        %v1678 = vmax.f32 %v1660, 0.0
        %v1679 = vmax.f32 %v1665, 0.0
        %v1680 = vmax.f32 %v1670, 0.0
        %v1681 = vmax.f32 %v1675, 0.0
        %s1682 = scalar_lea.vmem %s5, 2
        %v1683 = vld [vmem:[%s1682] sm:$0x1]
        %v1685 = vlaneseq
        %v1686 = vshrl.u32 %v1685, 7
        %v1687 = vsub.s32 0, %v1686
        %v1688 = vrot.slane %v1683, %v1687
        %1690 = vmatprep.subr.mxu0 0.0
        %1691 = vmatpush1.msra.mxu0 %v1484
        %1692 = vmatprep.subr.mxu0 0.0
        %1693 = vmatpush1.msra.mxu0 %v1485
        %1694 = vmatprep.subr.mxu0 0.0
        %1695 = vmatpush1.msra.mxu0 %v1486
        %1696 = vmatprep.subr.mxu0 0.0
        %1697 = vmatpush1.msra.mxu0 %v1487
        %1698 = vmatprep.subr.mxu0 0.0
        %1699 = vmatpush1.msra.mxu0 %v1488
        %1700 = vmatprep.subr.mxu0 0.0
        %1701 = vmatpush1.msra.mxu0 %v1489
        %1702 = vmatprep.subr.mxu0 0.0
        %1703 = vmatpush1.msra.mxu0 %v1490
        %1704 = vmatprep.subr.mxu0 0.0
        %1705 = vmatpush1.msra.mxu0 %v1491
        %1706 = vmatprep.subr.mxu0 0.0
        %1707 = vmatpush1.msra.mxu0 %v1492
        %1708 = vmatprep.subr.mxu0 0.0
        %1709 = vmatpush1.msra.mxu0 %v1493
        %1710 = vmatprep.subr.mxu0 0.0
        %1711 = vmatpush1.msra.mxu0 %v1494
        %1712 = vmatprep.subr.mxu0 0.0
        %1713 = vmatpush1.msra.mxu0 %v1495
        %1714 = vmatprep.subr.mxu0 0.0
        %1715 = vmatpush1.msra.mxu0 %v1496
        %1716 = vmatprep.subr.mxu0 0.0
        %1717 = vmatpush1.msra.mxu0 %v1497
        %1718 = vmatprep.subr.mxu0 0.0
        %1719 = vmatpush1.msra.mxu0 %v1498
        %1720 = vmatprep.subr.mxu0 0.0
        %1721 = vmatpush1.msra.mxu0 %v1499
        %1722 = vmatprep.subr.mxu0 0.0
        %1723 = vmatpush1.msra.mxu0 0.0
        %1724 = vmatprep.subr.mxu0 0.0
        %1725 = vmatpush1.msra.mxu0 0.0
        %1726 = vmatprep.subr.mxu0 0.0
        %1727 = vmatpush1.msra.mxu0 0.0
        %1728 = vmatprep.subr.mxu0 0.0
        %1729 = vmatpush1.msra.mxu0 0.0
        %1730 = vmatprep.subr.mxu0 0.0
        %1731 = vmatpush1.msra.mxu0 0.0
        %1732 = vmatprep.subr.mxu0 0.0
        %1733 = vmatpush1.msra.mxu0 0.0
        %1734 = vmatprep.subr.mxu0 0.0
        %1735 = vmatpush1.msra.mxu0 0.0
        %1736 = vmatprep.subr.mxu0 0.0
        %1737 = vmatpush1.msra.mxu0 0.0
        %1738 = vmatprep.subr.mxu0 0.0
        %1739 = vmatpush1.msra.mxu0 0.0
        %1740 = vmatprep.subr.mxu0 0.0
        %1741 = vmatpush1.msra.mxu0 0.0
        %1742 = vmatprep.subr.mxu0 0.0
        %1743 = vmatpush1.msra.mxu0 0.0
        %1744 = vmatprep.subr.mxu0 0.0
        %1745 = vmatpush1.msra.mxu0 0.0
        %1746 = vmatprep.subr.mxu0 0.0
        %1747 = vmatpush1.msra.mxu0 0.0
        %1748 = vmatprep.subr.mxu0 0.0
        %1749 = vmatpush1.msra.mxu0 0.0
        %1750 = vmatprep.subr.mxu0 0.0
        %1751 = vmatpush1.msra.mxu0 0.0
        %1752 = vmatprep.subr.mxu0 0.0
        %1753 = vmatpush1.msra.mxu0 0.0
        %1754 = vmatprep.mubr.f32.mxu0 0.0
        %1755 = vmatmul.mubr.f32.gmra.mrb[0].mxu0 %v1678
        %v1756 = vpop.f32.mrb[0].mxu0
        %v1757 = vadd.f32 %v1688, %v1756
        %v1758 = vpop.f32.mrb[0].mxu0
        %1759 = vmatprep.mubr.f32.mxu0 0.0
        %1760 = vmatmul.mubr.f32.gmra.mrb[0].mxu0 %v1679
        %v1761 = vpop.f32.mrb[0].mxu0
        %v1762 = vadd.f32 %v1688, %v1761
        %v1763 = vpop.f32.mrb[0].mxu0
        %1764 = vmatprep.mubr.f32.mxu0 0.0
        %1765 = vmatmul.mubr.f32.gmra.mrb[0].mxu0 %v1680
        %v1766 = vpop.f32.mrb[0].mxu0
        %v1767 = vadd.f32 %v1688, %v1766
        %v1768 = vpop.f32.mrb[0].mxu0
        %1769 = vmatprep.mubr.f32.mxu0 0.0
        %1770 = vmatmul.mubr.f32.gmra.mrb[0].mxu0 %v1681
        %v1771 = vpop.f32.mrb[0].mxu0
        %v1772 = vadd.f32 %v1688, %v1771
        %v1773 = vpop.f32.mrb[0].mxu0
        %1774 = vdwg.mxu0
        %v1775 = vmax.f32 %v1757, 0.0
        %v1776 = vmax.f32 %v1762, 0.0
        %v1777 = vmax.f32 %v1767, 0.0
        %v1778 = vmax.f32 %v1772, 0.0
        %1779 = vmatprep.subr.mxu0 0.0
        %1780 = vmatpush1.msra.mxu0 %v1775
        %1781 = vmatprep.subr.mxu0 0.0
        %1782 = vmatpush1.msra.mxu0 %v1776
        %1783 = vmatprep.subr.mxu0 0.0
        %1784 = vmatpush1.msra.mxu0 %v1777
        %1785 = vmatprep.subr.mxu0 0.0
        %1786 = vmatpush1.msra.mxu0 %v1778
        %1787 = vmatprep.subr.mxu0 0.0
        %1788 = vmatpush1.msra.mxu0 0.0
        %1789 = vmatprep.subr.mxu0 0.0
        %1790 = vmatpush1.msra.mxu0 0.0
        %1791 = vmatprep.subr.mxu0 0.0
        %1792 = vmatpush1.msra.mxu0 0.0
        %1793 = vmatprep.subr.mxu0 0.0
        %1794 = vmatpush1.msra.mxu0 0.0
        %1795 = vmatprep.subr.mxu0 0.0
        %1796 = vmatpush1.msra.mxu0 0.0
        %1797 = vmatprep.subr.mxu0 0.0
        %1798 = vmatpush1.msra.mxu0 0.0
        %1799 = vmatprep.subr.mxu0 0.0
        %1800 = vmatpush1.msra.mxu0 0.0
        %1801 = vmatprep.subr.mxu0 0.0
        %1802 = vmatpush1.msra.mxu0 0.0
        %1803 = vmatprep.subr.mxu0 0.0
        %1804 = vmatpush1.msra.mxu0 0.0
        %1805 = vmatprep.subr.mxu0 0.0
        %1806 = vmatpush1.msra.mxu0 0.0
        %1807 = vmatprep.subr.mxu0 0.0
        %1808 = vmatpush1.msra.mxu0 0.0
        %1809 = vmatprep.subr.mxu0 0.0
        %1810 = vmatpush1.msra.mxu0 0.0
        %1811 = vmatprep.subr.mxu0 0.0
        %1812 = vmatpush1.msra.mxu0 0.0
        %1813 = vmatprep.subr.mxu0 0.0
        %1814 = vmatpush1.msra.mxu0 0.0
        %1815 = vmatprep.subr.mxu0 0.0
        %1816 = vmatpush1.msra.mxu0 0.0
        %1817 = vmatprep.subr.mxu0 0.0
        %1818 = vmatpush1.msra.mxu0 0.0
        %1819 = vmatprep.subr.mxu0 0.0
        %1820 = vmatpush1.msra.mxu0 0.0
        %1821 = vmatprep.subr.mxu0 0.0
        %1822 = vmatpush1.msra.mxu0 0.0
        %1823 = vmatprep.subr.mxu0 0.0
        %1824 = vmatpush1.msra.mxu0 0.0
        %1825 = vmatprep.subr.mxu0 0.0
        %1826 = vmatpush1.msra.mxu0 0.0
        %1827 = vmatprep.subr.mxu0 0.0
        %1828 = vmatpush1.msra.mxu0 0.0
        %1829 = vmatprep.subr.mxu0 0.0
        %1830 = vmatpush1.msra.mxu0 0.0
        %1831 = vmatprep.subr.mxu0 0.0
        %1832 = vmatpush1.msra.mxu0 0.0
        %1833 = vmatprep.subr.mxu0 0.0
        %1834 = vmatpush1.msra.mxu0 0.0
        %1835 = vmatprep.subr.mxu0 0.0
        %1836 = vmatpush1.msra.mxu0 0.0
        %1837 = vmatprep.subr.mxu0 0.0
        %1838 = vmatpush1.msra.mxu0 0.0
        %1839 = vmatprep.subr.mxu0 0.0
        %1840 = vmatpush1.msra.mxu0 0.0
        %1841 = vmatprep.subr.mxu0 0.0
        %1842 = vmatpush1.msra.mxu0 0.0
        %1843 = vmatprep.mubr.f32.mxu0 0.0
        %1844 = vmatmul.mubr.f32.gmra.mrb[0].mxu0 %v742
        %v1845 = vpop.f32.mrb[0].mxu0
        %v1846 = vadd.f32 0.0, %v1845
        %v1847 = vpop.f32.mrb[0].mxu0
        %1848 = vdwg.mxu0
        %s1849 = scalar_lea.vmem [#allocation10], 128
        %v1850 = vld [vmem:[%s1849] sm:$0xf]
        %v1851 = vld [vmem:[%s1849 + $0x4] sm:$0xf]
        %v1852 = vld [vmem:[%s1849 + $0x8] sm:$0xf]
        %v1853 = vld [vmem:[%s1849 + $0xc] sm:$0xf]
        %v1854 = vld [vmem:[%s1849 + $0x10] sm:$0xf]
        %v1855 = vld [vmem:[%s1849 + $0x14] sm:$0xf]
        %v1856 = vld [vmem:[%s1849 + $0x18] sm:$0xf]
        %v1857 = vld [vmem:[%s1849 + $0x1c] sm:$0xf]
        %v1858 = vld [vmem:[%s1849 + $0x20] sm:$0xf]
        %v1859 = vld [vmem:[%s1849 + $0x24] sm:$0xf]
        %v1860 = vld [vmem:[%s1849 + $0x28] sm:$0xf]
        %v1861 = vld [vmem:[%s1849 + $0x2c] sm:$0xf]
        %v1862 = vld [vmem:[%s1849 + $0x30] sm:$0xf]
        %v1863 = vld [vmem:[%s1849 + $0x34] sm:$0xf]
        %v1864 = vld [vmem:[%s1849 + $0x38] sm:$0xf]
        %v1865 = vld [vmem:[%s1849 + $0x3c] sm:$0xf]
        %v1866 = vunpack.c.l.bf16 %v1850
        %v1867 = vunpack.c.l.bf16 %v1851
        %v1868 = vunpack.c.l.bf16 %v1852
        %v1869 = vunpack.c.l.bf16 %v1853
        %v1870 = vunpack.c.l.bf16 %v1854
        %v1871 = vunpack.c.l.bf16 %v1855
        %v1872 = vunpack.c.l.bf16 %v1856
        %v1873 = vunpack.c.l.bf16 %v1857
        %v1874 = vunpack.c.l.bf16 %v1858
        %v1875 = vunpack.c.l.bf16 %v1859
        %v1876 = vunpack.c.l.bf16 %v1860
        %v1877 = vunpack.c.l.bf16 %v1861
        %v1878 = vunpack.c.l.bf16 %v1862
        %v1879 = vunpack.c.l.bf16 %v1863
        %v1880 = vunpack.c.l.bf16 %v1864
        %v1881 = vunpack.c.l.bf16 %v1865
        %1882 = vmatprep.subr.mxu0 0.0
        %1883 = vmatpush1.msra.mxu0 %v1866
        %1884 = vmatprep.subr.mxu0 0.0
        %1885 = vmatpush1.msra.mxu0 %v1867
        %1886 = vmatprep.subr.mxu0 0.0
        %1887 = vmatpush1.msra.mxu0 %v1868
        %1888 = vmatprep.subr.mxu0 0.0
        %1889 = vmatpush1.msra.mxu0 %v1869
        %1890 = vmatprep.subr.mxu0 0.0
        %1891 = vmatpush1.msra.mxu0 %v1870
        %1892 = vmatprep.subr.mxu0 0.0
        %1893 = vmatpush1.msra.mxu0 %v1871
        %1894 = vmatprep.subr.mxu0 0.0
        %1895 = vmatpush1.msra.mxu0 %v1872
        %1896 = vmatprep.subr.mxu0 0.0
        %1897 = vmatpush1.msra.mxu0 %v1873
        %1898 = vmatprep.subr.mxu0 0.0
        %1899 = vmatpush1.msra.mxu0 %v1874
        %1900 = vmatprep.subr.mxu0 0.0
        %1901 = vmatpush1.msra.mxu0 %v1875
        %1902 = vmatprep.subr.mxu0 0.0
        %1903 = vmatpush1.msra.mxu0 %v1876
        %1904 = vmatprep.subr.mxu0 0.0
        %1905 = vmatpush1.msra.mxu0 %v1877
        %1906 = vmatprep.subr.mxu0 0.0
        %1907 = vmatpush1.msra.mxu0 %v1878
        %1908 = vmatprep.subr.mxu0 0.0
        %1909 = vmatpush1.msra.mxu0 %v1879
        %1910 = vmatprep.subr.mxu0 0.0
        %1911 = vmatpush1.msra.mxu0 %v1880
        %1912 = vmatprep.subr.mxu0 0.0
        %1913 = vmatpush1.msra.mxu0 %v1881
        %1914 = vmatprep.subr.mxu0 0.0
        %1915 = vmatpush1.msra.mxu0 0.0
        %1916 = vmatprep.subr.mxu0 0.0
        %1917 = vmatpush1.msra.mxu0 0.0
        %1918 = vmatprep.subr.mxu0 0.0
        %1919 = vmatpush1.msra.mxu0 0.0
        %1920 = vmatprep.subr.mxu0 0.0
        %1921 = vmatpush1.msra.mxu0 0.0
        %1922 = vmatprep.subr.mxu0 0.0
        %1923 = vmatpush1.msra.mxu0 0.0
        %1924 = vmatprep.subr.mxu0 0.0
        %1925 = vmatpush1.msra.mxu0 0.0
        %1926 = vmatprep.subr.mxu0 0.0
        %1927 = vmatpush1.msra.mxu0 0.0
        %1928 = vmatprep.subr.mxu0 0.0
        %1929 = vmatpush1.msra.mxu0 0.0
        %1930 = vmatprep.subr.mxu0 0.0
        %1931 = vmatpush1.msra.mxu0 0.0
        %1932 = vmatprep.subr.mxu0 0.0
        %1933 = vmatpush1.msra.mxu0 0.0
        %1934 = vmatprep.subr.mxu0 0.0
        %1935 = vmatpush1.msra.mxu0 0.0
        %1936 = vmatprep.subr.mxu0 0.0
        %1937 = vmatpush1.msra.mxu0 0.0
        %1938 = vmatprep.subr.mxu0 0.0
        %1939 = vmatpush1.msra.mxu0 0.0
        %1940 = vmatprep.subr.mxu0 0.0
        %1941 = vmatpush1.msra.mxu0 0.0
        %1942 = vmatprep.subr.mxu0 0.0
        %1943 = vmatpush1.msra.mxu0 0.0
        %1944 = vmatprep.subr.mxu0 0.0
        %1945 = vmatpush1.msra.mxu0 0.0
        %1946 = vmatprep.mubr.f32.mxu0 0.0
        %1947 = vmatmul.mubr.f32.gmra.mrb[0].mxu0 %v1846
        %v1948 = vpop.f32.mrb[0].mxu0
        %v1949 = vadd.f32 0.0, %v1948
        %v1950 = vpop.f32.mrb[0].mxu0
        %1951 = vdwg.mxu0
        %v1952 = vadd.f32 %v1431, %v1949
        %s1953 = scalar_lea.vmem [#allocation7], 192
        %v1954 = vld [vmem:[%s1953] sm:$0xf]
        %v1955 = vld [vmem:[%s1953 + $0x4] sm:$0xf]
        %v1956 = vld [vmem:[%s1953 + $0x8] sm:$0xf]
        %v1957 = vld [vmem:[%s1953 + $0xc] sm:$0xf]
        %v1958 = vld [vmem:[%s1953 + $0x10] sm:$0xf]
        %v1959 = vld [vmem:[%s1953 + $0x14] sm:$0xf]
        %v1960 = vld [vmem:[%s1953 + $0x18] sm:$0xf]
        %v1961 = vld [vmem:[%s1953 + $0x1c] sm:$0xf]
        %v1962 = vld [vmem:[%s1953 + $0x20] sm:$0xf]
        %v1963 = vld [vmem:[%s1953 + $0x24] sm:$0xf]
        %v1964 = vld [vmem:[%s1953 + $0x28] sm:$0xf]
        %v1965 = vld [vmem:[%s1953 + $0x2c] sm:$0xf]
        %v1966 = vld [vmem:[%s1953 + $0x30] sm:$0xf]
        %v1967 = vld [vmem:[%s1953 + $0x34] sm:$0xf]
        %v1968 = vld [vmem:[%s1953 + $0x38] sm:$0xf]
        %v1969 = vld [vmem:[%s1953 + $0x3c] sm:$0xf]
        %v1970 = vunpack.c.l.bf16 %v1954
        %v1971 = vunpack.c.l.bf16 %v1955
        %v1972 = vunpack.c.l.bf16 %v1956
        %v1973 = vunpack.c.l.bf16 %v1957
        %v1974 = vunpack.c.l.bf16 %v1958
        %v1975 = vunpack.c.l.bf16 %v1959
        %v1976 = vunpack.c.l.bf16 %v1960
        %v1977 = vunpack.c.l.bf16 %v1961
        %v1978 = vunpack.c.l.bf16 %v1962
        %v1979 = vunpack.c.l.bf16 %v1963
        %v1980 = vunpack.c.l.bf16 %v1964
        %v1981 = vunpack.c.l.bf16 %v1965
        %v1982 = vunpack.c.l.bf16 %v1966
        %v1983 = vunpack.c.l.bf16 %v1967
        %v1984 = vunpack.c.l.bf16 %v1968
        %v1985 = vunpack.c.l.bf16 %v1969
        %s1986 = scalar_lea.vmem [#allocation8], 192
        %v1987 = vld [vmem:[%s1986] sm:$0xf]
        %v1988 = vld [vmem:[%s1986 + $0x4] sm:$0xf]
        %v1989 = vld [vmem:[%s1986 + $0x8] sm:$0xf]
        %v1990 = vld [vmem:[%s1986 + $0xc] sm:$0xf]
        %v1991 = vld [vmem:[%s1986 + $0x10] sm:$0xf]
        %v1992 = vld [vmem:[%s1986 + $0x14] sm:$0xf]
        %v1993 = vld [vmem:[%s1986 + $0x18] sm:$0xf]
        %v1994 = vld [vmem:[%s1986 + $0x1c] sm:$0xf]
        %v1995 = vld [vmem:[%s1986 + $0x20] sm:$0xf]
        %v1996 = vld [vmem:[%s1986 + $0x24] sm:$0xf]
        %v1997 = vld [vmem:[%s1986 + $0x28] sm:$0xf]
        %v1998 = vld [vmem:[%s1986 + $0x2c] sm:$0xf]
        %v1999 = vld [vmem:[%s1986 + $0x30] sm:$0xf]
        %v2000 = vld [vmem:[%s1986 + $0x34] sm:$0xf]
        %v2001 = vld [vmem:[%s1986 + $0x38] sm:$0xf]
        %v2002 = vld [vmem:[%s1986 + $0x3c] sm:$0xf]
        %v2003 = vunpack.c.l.bf16 %v1987
        %v2004 = vunpack.c.l.bf16 %v1988
        %v2005 = vunpack.c.l.bf16 %v1989
        %v2006 = vunpack.c.l.bf16 %v1990
        %v2007 = vunpack.c.l.bf16 %v1991
        %v2008 = vunpack.c.l.bf16 %v1992
        %v2009 = vunpack.c.l.bf16 %v1993
        %v2010 = vunpack.c.l.bf16 %v1994
        %v2011 = vunpack.c.l.bf16 %v1995
        %v2012 = vunpack.c.l.bf16 %v1996
        %v2013 = vunpack.c.l.bf16 %v1997
        %v2014 = vunpack.c.l.bf16 %v1998
        %v2015 = vunpack.c.l.bf16 %v1999
        %v2016 = vunpack.c.l.bf16 %v2000
        %v2017 = vunpack.c.l.bf16 %v2001
        %v2018 = vunpack.c.l.bf16 %v2002
        %2019 = vmatprep.subr.mxu0 0.0
        %2020 = vmatpush1.msra.mxu0 %v1775
        %2021 = vmatprep.subr.mxu0 0.0
        %2022 = vmatpush1.msra.mxu0 %v1776
        %2023 = vmatprep.subr.mxu0 0.0
        %2024 = vmatpush1.msra.mxu0 %v1777
        %2025 = vmatprep.subr.mxu0 0.0
        %2026 = vmatpush1.msra.mxu0 %v1778
        %2027 = vmatprep.subr.mxu0 0.0
        %2028 = vmatpush1.msra.mxu0 0.0
        %2029 = vmatprep.subr.mxu0 0.0
        %2030 = vmatpush1.msra.mxu0 0.0
        %2031 = vmatprep.subr.mxu0 0.0
        %2032 = vmatpush1.msra.mxu0 0.0
        %2033 = vmatprep.subr.mxu0 0.0
        %2034 = vmatpush1.msra.mxu0 0.0
        %2035 = vmatprep.subr.mxu0 0.0
        %2036 = vmatpush1.msra.mxu0 0.0
        %2037 = vmatprep.subr.mxu0 0.0
        %2038 = vmatpush1.msra.mxu0 0.0
        %2039 = vmatprep.subr.mxu0 0.0
        %2040 = vmatpush1.msra.mxu0 0.0
        %2041 = vmatprep.subr.mxu0 0.0
        %2042 = vmatpush1.msra.mxu0 0.0
        %2043 = vmatprep.subr.mxu0 0.0
        %2044 = vmatpush1.msra.mxu0 0.0
        %2045 = vmatprep.subr.mxu0 0.0
        %2046 = vmatpush1.msra.mxu0 0.0
        %2047 = vmatprep.subr.mxu0 0.0
        %2048 = vmatpush1.msra.mxu0 0.0
        %2049 = vmatprep.subr.mxu0 0.0
        %2050 = vmatpush1.msra.mxu0 0.0
        %2051 = vmatprep.subr.mxu0 0.0
        %2052 = vmatpush1.msra.mxu0 0.0
        %2053 = vmatprep.subr.mxu0 0.0
        %2054 = vmatpush1.msra.mxu0 0.0
        %2055 = vmatprep.subr.mxu0 0.0
        %2056 = vmatpush1.msra.mxu0 0.0
        %2057 = vmatprep.subr.mxu0 0.0
        %2058 = vmatpush1.msra.mxu0 0.0
        %2059 = vmatprep.subr.mxu0 0.0
        %2060 = vmatpush1.msra.mxu0 0.0
        %2061 = vmatprep.subr.mxu0 0.0
        %2062 = vmatpush1.msra.mxu0 0.0
        %2063 = vmatprep.subr.mxu0 0.0
        %2064 = vmatpush1.msra.mxu0 0.0
        %2065 = vmatprep.subr.mxu0 0.0
        %2066 = vmatpush1.msra.mxu0 0.0
        %2067 = vmatprep.subr.mxu0 0.0
        %2068 = vmatpush1.msra.mxu0 0.0
        %2069 = vmatprep.subr.mxu0 0.0
        %2070 = vmatpush1.msra.mxu0 0.0
        %2071 = vmatprep.subr.mxu0 0.0
        %2072 = vmatpush1.msra.mxu0 0.0
        %2073 = vmatprep.subr.mxu0 0.0
        %2074 = vmatpush1.msra.mxu0 0.0
        %2075 = vmatprep.subr.mxu0 0.0
        %2076 = vmatpush1.msra.mxu0 0.0
        %2077 = vmatprep.subr.mxu0 0.0
        %2078 = vmatpush1.msra.mxu0 0.0
        %2079 = vmatprep.subr.mxu0 0.0
        %2080 = vmatpush1.msra.mxu0 0.0
        %2081 = vmatprep.subr.mxu0 0.0
        %2082 = vmatpush1.msra.mxu0 0.0
        %2083 = vmatprep.mubr.f32.mxu0 0.0
        %2084 = vmatmul.mubr.f32.gmra.mrb[0].mxu0 %v453
        %v2085 = vpop.f32.mrb[0].mxu0
        %v2086 = vadd.f32 0.0, %v2085
        %v2087 = vpop.f32.mrb[0].mxu0
        %2088 = vmatprep.mubr.f32.mxu0 0.0
        %2089 = vmatmul.mubr.f32.gmra.mrb[0].mxu0 %v456
        %v2090 = vpop.f32.mrb[0].mxu0
        %v2091 = vadd.f32 0.0, %v2090
        %v2092 = vpop.f32.mrb[0].mxu0
        %2093 = vmatprep.mubr.f32.mxu0 0.0
        %2094 = vmatmul.mubr.f32.gmra.mrb[0].mxu0 %v459
        %v2095 = vpop.f32.mrb[0].mxu0
        %v2096 = vadd.f32 0.0, %v2095
        %v2097 = vpop.f32.mrb[0].mxu0
        %2098 = vmatprep.mubr.f32.mxu0 0.0
        %2099 = vmatmul.mubr.f32.gmra.mrb[0].mxu0 %v462
        %v2100 = vpop.f32.mrb[0].mxu0
        %v2101 = vadd.f32 0.0, %v2100
        %v2102 = vpop.f32.mrb[0].mxu0
        %2103 = vdwg.mxu0
        %s2104 = scalar_lea.vmem %s3, 3
        %v2105 = vld [vmem:[%s2104] sm:$0x1]
        %v2107 = vlaneseq
        %v2108 = vshrl.u32 %v2107, 7
        %v2109 = vsub.s32 0, %v2108
        %v2110 = vrot.slane %v2105, %v2109
        %2112 = vmatprep.subr.mxu0 0.0
        %2113 = vmatpush1.msra.mxu0 %v1970
        %2114 = vmatprep.subr.mxu0 0.0
        %2115 = vmatpush1.msra.mxu0 %v1971
        %2116 = vmatprep.subr.mxu0 0.0
        %2117 = vmatpush1.msra.mxu0 %v1972
        %2118 = vmatprep.subr.mxu0 0.0
        %2119 = vmatpush1.msra.mxu0 %v1973
        %2120 = vmatprep.subr.mxu0 0.0
        %2121 = vmatpush1.msra.mxu0 %v1974
        %2122 = vmatprep.subr.mxu0 0.0
        %2123 = vmatpush1.msra.mxu0 %v1975
        %2124 = vmatprep.subr.mxu0 0.0
        %2125 = vmatpush1.msra.mxu0 %v1976
        %2126 = vmatprep.subr.mxu0 0.0
        %2127 = vmatpush1.msra.mxu0 %v1977
        %2128 = vmatprep.subr.mxu0 0.0
        %2129 = vmatpush1.msra.mxu0 %v1978
        %2130 = vmatprep.subr.mxu0 0.0
        %2131 = vmatpush1.msra.mxu0 %v1979
        %2132 = vmatprep.subr.mxu0 0.0
        %2133 = vmatpush1.msra.mxu0 %v1980
        %2134 = vmatprep.subr.mxu0 0.0
        %2135 = vmatpush1.msra.mxu0 %v1981
        %2136 = vmatprep.subr.mxu0 0.0
        %2137 = vmatpush1.msra.mxu0 %v1982
        %2138 = vmatprep.subr.mxu0 0.0
        %2139 = vmatpush1.msra.mxu0 %v1983
        %2140 = vmatprep.subr.mxu0 0.0
        %2141 = vmatpush1.msra.mxu0 %v1984
        %2142 = vmatprep.subr.mxu0 0.0
        %2143 = vmatpush1.msra.mxu0 %v1985
        %2144 = vmatprep.subr.mxu0 0.0
        %2145 = vmatpush1.msra.mxu0 0.0
        %2146 = vmatprep.subr.mxu0 0.0
        %2147 = vmatpush1.msra.mxu0 0.0
        %2148 = vmatprep.subr.mxu0 0.0
        %2149 = vmatpush1.msra.mxu0 0.0
        %2150 = vmatprep.subr.mxu0 0.0
        %2151 = vmatpush1.msra.mxu0 0.0
        %2152 = vmatprep.subr.mxu0 0.0
        %2153 = vmatpush1.msra.mxu0 0.0
        %2154 = vmatprep.subr.mxu0 0.0
        %2155 = vmatpush1.msra.mxu0 0.0
        %2156 = vmatprep.subr.mxu0 0.0
        %2157 = vmatpush1.msra.mxu0 0.0
        %2158 = vmatprep.subr.mxu0 0.0
        %2159 = vmatpush1.msra.mxu0 0.0
        %2160 = vmatprep.subr.mxu0 0.0
        %2161 = vmatpush1.msra.mxu0 0.0
        %2162 = vmatprep.subr.mxu0 0.0
        %2163 = vmatpush1.msra.mxu0 0.0
        %2164 = vmatprep.subr.mxu0 0.0
        %2165 = vmatpush1.msra.mxu0 0.0
        %2166 = vmatprep.subr.mxu0 0.0
        %2167 = vmatpush1.msra.mxu0 0.0
        %2168 = vmatprep.subr.mxu0 0.0
        %2169 = vmatpush1.msra.mxu0 0.0
        %2170 = vmatprep.subr.mxu0 0.0
        %2171 = vmatpush1.msra.mxu0 0.0
        %2172 = vmatprep.subr.mxu0 0.0
        %2173 = vmatpush1.msra.mxu0 0.0
        %2174 = vmatprep.subr.mxu0 0.0
        %2175 = vmatpush1.msra.mxu0 0.0
        %2176 = vmatprep.mubr.f32.mxu0 0.0
        %2177 = vmatmul.mubr.f32.gmra.mrb[0].mxu0 %v2086
        %v2178 = vpop.f32.mrb[0].mxu0
        %v2179 = vadd.f32 %v2110, %v2178
        %v2180 = vpop.f32.mrb[0].mxu0
        %2181 = vmatprep.mubr.f32.mxu0 0.0
        %2182 = vmatmul.mubr.f32.gmra.mrb[0].mxu0 %v2091
        %v2183 = vpop.f32.mrb[0].mxu0
        %v2184 = vadd.f32 %v2110, %v2183
        %v2185 = vpop.f32.mrb[0].mxu0
        %2186 = vmatprep.mubr.f32.mxu0 0.0
        %2187 = vmatmul.mubr.f32.gmra.mrb[0].mxu0 %v2096
        %v2188 = vpop.f32.mrb[0].mxu0
        %v2189 = vadd.f32 %v2110, %v2188
        %v2190 = vpop.f32.mrb[0].mxu0
        %2191 = vmatprep.mubr.f32.mxu0 0.0
        %2192 = vmatmul.mubr.f32.gmra.mrb[0].mxu0 %v2101
        %v2193 = vpop.f32.mrb[0].mxu0
        %v2194 = vadd.f32 %v2110, %v2193
        %v2195 = vpop.f32.mrb[0].mxu0
        %2196 = vdwg.mxu0
        %v2197 = vmax.f32 %v2179, 0.0
        %v2198 = vmax.f32 %v2184, 0.0
        %v2199 = vmax.f32 %v2189, 0.0
        %v2200 = vmax.f32 %v2194, 0.0
        %s2201 = scalar_lea.vmem %s5, 3
        %v2202 = vld [vmem:[%s2201] sm:$0x1]
        %v2204 = vlaneseq
        %v2205 = vshrl.u32 %v2204, 7
        %v2206 = vsub.s32 0, %v2205
        %v2207 = vrot.slane %v2202, %v2206
        %2209 = vmatprep.subr.mxu0 0.0
        %2210 = vmatpush1.msra.mxu0 %v2003
        %2211 = vmatprep.subr.mxu0 0.0
        %2212 = vmatpush1.msra.mxu0 %v2004
        %2213 = vmatprep.subr.mxu0 0.0
        %2214 = vmatpush1.msra.mxu0 %v2005
        %2215 = vmatprep.subr.mxu0 0.0
        %2216 = vmatpush1.msra.mxu0 %v2006
        %2217 = vmatprep.subr.mxu0 0.0
        %2218 = vmatpush1.msra.mxu0 %v2007
        %2219 = vmatprep.subr.mxu0 0.0
        %2220 = vmatpush1.msra.mxu0 %v2008
        %2221 = vmatprep.subr.mxu0 0.0
        %2222 = vmatpush1.msra.mxu0 %v2009
        %2223 = vmatprep.subr.mxu0 0.0
        %2224 = vmatpush1.msra.mxu0 %v2010
        %2225 = vmatprep.subr.mxu0 0.0
        %2226 = vmatpush1.msra.mxu0 %v2011
        %2227 = vmatprep.subr.mxu0 0.0
        %2228 = vmatpush1.msra.mxu0 %v2012
        %2229 = vmatprep.subr.mxu0 0.0
        %2230 = vmatpush1.msra.mxu0 %v2013
        %2231 = vmatprep.subr.mxu0 0.0
        %2232 = vmatpush1.msra.mxu0 %v2014
        %2233 = vmatprep.subr.mxu0 0.0
        %2234 = vmatpush1.msra.mxu0 %v2015
        %2235 = vmatprep.subr.mxu0 0.0
        %2236 = vmatpush1.msra.mxu0 %v2016
        %2237 = vmatprep.subr.mxu0 0.0
        %2238 = vmatpush1.msra.mxu0 %v2017
        %2239 = vmatprep.subr.mxu0 0.0
        %2240 = vmatpush1.msra.mxu0 %v2018
        %2241 = vmatprep.subr.mxu0 0.0
        %2242 = vmatpush1.msra.mxu0 0.0
        %2243 = vmatprep.subr.mxu0 0.0
        %2244 = vmatpush1.msra.mxu0 0.0
        %2245 = vmatprep.subr.mxu0 0.0
        %2246 = vmatpush1.msra.mxu0 0.0
        %2247 = vmatprep.subr.mxu0 0.0
        %2248 = vmatpush1.msra.mxu0 0.0
        %2249 = vmatprep.subr.mxu0 0.0
        %2250 = vmatpush1.msra.mxu0 0.0
        %2251 = vmatprep.subr.mxu0 0.0
        %2252 = vmatpush1.msra.mxu0 0.0
        %2253 = vmatprep.subr.mxu0 0.0
        %2254 = vmatpush1.msra.mxu0 0.0
        %2255 = vmatprep.subr.mxu0 0.0
        %2256 = vmatpush1.msra.mxu0 0.0
        %2257 = vmatprep.subr.mxu0 0.0
        %2258 = vmatpush1.msra.mxu0 0.0
        %2259 = vmatprep.subr.mxu0 0.0
        %2260 = vmatpush1.msra.mxu0 0.0
        %2261 = vmatprep.subr.mxu0 0.0
        %2262 = vmatpush1.msra.mxu0 0.0
        %2263 = vmatprep.subr.mxu0 0.0
        %2264 = vmatpush1.msra.mxu0 0.0
        %2265 = vmatprep.subr.mxu0 0.0
        %2266 = vmatpush1.msra.mxu0 0.0
        %2267 = vmatprep.subr.mxu0 0.0
        %2268 = vmatpush1.msra.mxu0 0.0
        %2269 = vmatprep.subr.mxu0 0.0
        %2270 = vmatpush1.msra.mxu0 0.0
        %2271 = vmatprep.subr.mxu0 0.0
        %2272 = vmatpush1.msra.mxu0 0.0
        %2273 = vmatprep.mubr.f32.mxu0 0.0
        %2274 = vmatmul.mubr.f32.gmra.mrb[0].mxu0 %v2197
        %v2275 = vpop.f32.mrb[0].mxu0
        %v2276 = vadd.f32 %v2207, %v2275
        %v2277 = vpop.f32.mrb[0].mxu0
        %2278 = vmatprep.mubr.f32.mxu0 0.0
        %2279 = vmatmul.mubr.f32.gmra.mrb[0].mxu0 %v2198
        %v2280 = vpop.f32.mrb[0].mxu0
        %v2281 = vadd.f32 %v2207, %v2280
        %v2282 = vpop.f32.mrb[0].mxu0
        %2283 = vmatprep.mubr.f32.mxu0 0.0
        %2284 = vmatmul.mubr.f32.gmra.mrb[0].mxu0 %v2199
        %v2285 = vpop.f32.mrb[0].mxu0
        %v2286 = vadd.f32 %v2207, %v2285
        %v2287 = vpop.f32.mrb[0].mxu0
        %2288 = vmatprep.mubr.f32.mxu0 0.0
        %2289 = vmatmul.mubr.f32.gmra.mrb[0].mxu0 %v2200
        %v2290 = vpop.f32.mrb[0].mxu0
        %v2291 = vadd.f32 %v2207, %v2290
        %v2292 = vpop.f32.mrb[0].mxu0
        %2293 = vdwg.mxu0
        %v2294 = vmax.f32 %v2276, 0.0
        %v2295 = vmax.f32 %v2281, 0.0
        %v2296 = vmax.f32 %v2286, 0.0
        %v2297 = vmax.f32 %v2291, 0.0
        %2298 = vmatprep.subr.mxu0 0.0
        %2299 = vmatpush1.msra.mxu0 %v2294
        %2300 = vmatprep.subr.mxu0 0.0
        %2301 = vmatpush1.msra.mxu0 %v2295
        %2302 = vmatprep.subr.mxu0 0.0
        %2303 = vmatpush1.msra.mxu0 %v2296
        %2304 = vmatprep.subr.mxu0 0.0
        %2305 = vmatpush1.msra.mxu0 %v2297
        %2306 = vmatprep.subr.mxu0 0.0
        %2307 = vmatpush1.msra.mxu0 0.0
        %2308 = vmatprep.subr.mxu0 0.0
        %2309 = vmatpush1.msra.mxu0 0.0
        %2310 = vmatprep.subr.mxu0 0.0
        %2311 = vmatpush1.msra.mxu0 0.0
        %2312 = vmatprep.subr.mxu0 0.0
        %2313 = vmatpush1.msra.mxu0 0.0
        %2314 = vmatprep.subr.mxu0 0.0
        %2315 = vmatpush1.msra.mxu0 0.0
        %2316 = vmatprep.subr.mxu0 0.0
        %2317 = vmatpush1.msra.mxu0 0.0
        %2318 = vmatprep.subr.mxu0 0.0
        %2319 = vmatpush1.msra.mxu0 0.0
        %2320 = vmatprep.subr.mxu0 0.0
        %2321 = vmatpush1.msra.mxu0 0.0
        %2322 = vmatprep.subr.mxu0 0.0
        %2323 = vmatpush1.msra.mxu0 0.0
        %2324 = vmatprep.subr.mxu0 0.0
        %2325 = vmatpush1.msra.mxu0 0.0
        %2326 = vmatprep.subr.mxu0 0.0
        %2327 = vmatpush1.msra.mxu0 0.0
        %2328 = vmatprep.subr.mxu0 0.0
        %2329 = vmatpush1.msra.mxu0 0.0
        %2330 = vmatprep.subr.mxu0 0.0
        %2331 = vmatpush1.msra.mxu0 0.0
        %2332 = vmatprep.subr.mxu0 0.0
        %2333 = vmatpush1.msra.mxu0 0.0
        %2334 = vmatprep.subr.mxu0 0.0
        %2335 = vmatpush1.msra.mxu0 0.0
        %2336 = vmatprep.subr.mxu0 0.0
        %2337 = vmatpush1.msra.mxu0 0.0
        %2338 = vmatprep.subr.mxu0 0.0
        %2339 = vmatpush1.msra.mxu0 0.0
        %2340 = vmatprep.subr.mxu0 0.0
        %2341 = vmatpush1.msra.mxu0 0.0
        %2342 = vmatprep.subr.mxu0 0.0
        %2343 = vmatpush1.msra.mxu0 0.0
        %2344 = vmatprep.subr.mxu0 0.0
        %2345 = vmatpush1.msra.mxu0 0.0
        %2346 = vmatprep.subr.mxu0 0.0
        %2347 = vmatpush1.msra.mxu0 0.0
        %2348 = vmatprep.subr.mxu0 0.0
        %2349 = vmatpush1.msra.mxu0 0.0
        %2350 = vmatprep.subr.mxu0 0.0
        %2351 = vmatpush1.msra.mxu0 0.0
        %2352 = vmatprep.subr.mxu0 0.0
        %2353 = vmatpush1.msra.mxu0 0.0
        %2354 = vmatprep.subr.mxu0 0.0
        %2355 = vmatpush1.msra.mxu0 0.0
        %2356 = vmatprep.subr.mxu0 0.0
        %2357 = vmatpush1.msra.mxu0 0.0
        %2358 = vmatprep.subr.mxu0 0.0
        %2359 = vmatpush1.msra.mxu0 0.0
        %2360 = vmatprep.subr.mxu0 0.0
        %2361 = vmatpush1.msra.mxu0 0.0
        %2362 = vmatprep.mubr.f32.mxu0 0.0
        %2363 = vmatmul.mubr.f32.gmra.mrb[0].mxu0 %v742
        %v2364 = vpop.f32.mrb[0].mxu0
        %v2365 = vadd.f32 0.0, %v2364
        %v2366 = vpop.f32.mrb[0].mxu0
        %2367 = vdwg.mxu0
        %s2368 = scalar_lea.vmem [#allocation10], 192
        %v2369 = vld [vmem:[%s2368] sm:$0xf]
        %v2370 = vld [vmem:[%s2368 + $0x4] sm:$0xf]
        %v2371 = vld [vmem:[%s2368 + $0x8] sm:$0xf]
        %v2372 = vld [vmem:[%s2368 + $0xc] sm:$0xf]
        %v2373 = vld [vmem:[%s2368 + $0x10] sm:$0xf]
        %v2374 = vld [vmem:[%s2368 + $0x14] sm:$0xf]
        %v2375 = vld [vmem:[%s2368 + $0x18] sm:$0xf]
        %v2376 = vld [vmem:[%s2368 + $0x1c] sm:$0xf]
        %v2377 = vld [vmem:[%s2368 + $0x20] sm:$0xf]
        %v2378 = vld [vmem:[%s2368 + $0x24] sm:$0xf]
        %v2379 = vld [vmem:[%s2368 + $0x28] sm:$0xf]
        %v2380 = vld [vmem:[%s2368 + $0x2c] sm:$0xf]
        %v2381 = vld [vmem:[%s2368 + $0x30] sm:$0xf]
        %v2382 = vld [vmem:[%s2368 + $0x34] sm:$0xf]
        %v2383 = vld [vmem:[%s2368 + $0x38] sm:$0xf]
        %v2384 = vld [vmem:[%s2368 + $0x3c] sm:$0xf]
        %v2385 = vunpack.c.l.bf16 %v2369
        %v2386 = vunpack.c.l.bf16 %v2370
        %v2387 = vunpack.c.l.bf16 %v2371
        %v2388 = vunpack.c.l.bf16 %v2372
        %v2389 = vunpack.c.l.bf16 %v2373
        %v2390 = vunpack.c.l.bf16 %v2374
        %v2391 = vunpack.c.l.bf16 %v2375
        %v2392 = vunpack.c.l.bf16 %v2376
        %v2393 = vunpack.c.l.bf16 %v2377
        %v2394 = vunpack.c.l.bf16 %v2378
        %v2395 = vunpack.c.l.bf16 %v2379
        %v2396 = vunpack.c.l.bf16 %v2380
        %v2397 = vunpack.c.l.bf16 %v2381
        %v2398 = vunpack.c.l.bf16 %v2382
        %v2399 = vunpack.c.l.bf16 %v2383
        %v2400 = vunpack.c.l.bf16 %v2384
        %2401 = vmatprep.subr.mxu0 0.0
        %2402 = vmatpush1.msra.mxu0 %v2385
        %2403 = vmatprep.subr.mxu0 0.0
        %2404 = vmatpush1.msra.mxu0 %v2386
        %2405 = vmatprep.subr.mxu0 0.0
        %2406 = vmatpush1.msra.mxu0 %v2387
        %2407 = vmatprep.subr.mxu0 0.0
        %2408 = vmatpush1.msra.mxu0 %v2388
        %2409 = vmatprep.subr.mxu0 0.0
        %2410 = vmatpush1.msra.mxu0 %v2389
        %2411 = vmatprep.subr.mxu0 0.0
        %2412 = vmatpush1.msra.mxu0 %v2390
        %2413 = vmatprep.subr.mxu0 0.0
        %2414 = vmatpush1.msra.mxu0 %v2391
        %2415 = vmatprep.subr.mxu0 0.0
        %2416 = vmatpush1.msra.mxu0 %v2392
        %2417 = vmatprep.subr.mxu0 0.0
        %2418 = vmatpush1.msra.mxu0 %v2393
        %2419 = vmatprep.subr.mxu0 0.0
        %2420 = vmatpush1.msra.mxu0 %v2394
        %2421 = vmatprep.subr.mxu0 0.0
        %2422 = vmatpush1.msra.mxu0 %v2395
        %2423 = vmatprep.subr.mxu0 0.0
        %2424 = vmatpush1.msra.mxu0 %v2396
        %2425 = vmatprep.subr.mxu0 0.0
        %2426 = vmatpush1.msra.mxu0 %v2397
        %2427 = vmatprep.subr.mxu0 0.0
        %2428 = vmatpush1.msra.mxu0 %v2398
        %2429 = vmatprep.subr.mxu0 0.0
        %2430 = vmatpush1.msra.mxu0 %v2399
        %2431 = vmatprep.subr.mxu0 0.0
        %2432 = vmatpush1.msra.mxu0 %v2400
        %2433 = vmatprep.subr.mxu0 0.0
        %2434 = vmatpush1.msra.mxu0 0.0
        %2435 = vmatprep.subr.mxu0 0.0
        %2436 = vmatpush1.msra.mxu0 0.0
        %2437 = vmatprep.subr.mxu0 0.0
        %2438 = vmatpush1.msra.mxu0 0.0
        %2439 = vmatprep.subr.mxu0 0.0
        %2440 = vmatpush1.msra.mxu0 0.0
        %2441 = vmatprep.subr.mxu0 0.0
        %2442 = vmatpush1.msra.mxu0 0.0
        %2443 = vmatprep.subr.mxu0 0.0
        %2444 = vmatpush1.msra.mxu0 0.0
        %2445 = vmatprep.subr.mxu0 0.0
        %2446 = vmatpush1.msra.mxu0 0.0
        %2447 = vmatprep.subr.mxu0 0.0
        %2448 = vmatpush1.msra.mxu0 0.0
        %2449 = vmatprep.subr.mxu0 0.0
        %2450 = vmatpush1.msra.mxu0 0.0
        %2451 = vmatprep.subr.mxu0 0.0
        %2452 = vmatpush1.msra.mxu0 0.0
        %2453 = vmatprep.subr.mxu0 0.0
        %2454 = vmatpush1.msra.mxu0 0.0
        %2455 = vmatprep.subr.mxu0 0.0
        %2456 = vmatpush1.msra.mxu0 0.0
        %2457 = vmatprep.subr.mxu0 0.0
        %2458 = vmatpush1.msra.mxu0 0.0
        %2459 = vmatprep.subr.mxu0 0.0
        %2460 = vmatpush1.msra.mxu0 0.0
        %2461 = vmatprep.subr.mxu0 0.0
        %2462 = vmatpush1.msra.mxu0 0.0
        %2463 = vmatprep.subr.mxu0 0.0
        %2464 = vmatpush1.msra.mxu0 0.0
        %2465 = vmatprep.mubr.f32.mxu0 0.0
        %2466 = vmatmul.mubr.f32.gmra.mrb[0].mxu0 %v2365
        %v2467 = vpop.f32.mrb[0].mxu0
        %v2468 = vadd.f32 0.0, %v2467
        %v2469 = vpop.f32.mrb[0].mxu0
        %2470 = vdwg.mxu0
        %v2471 = vadd.f32 %v1952, %v2468
        %s2472 = scalar_lea.vmem [#allocation7], 256
        %v2473 = vld [vmem:[%s2472] sm:$0xf]
        %v2474 = vld [vmem:[%s2472 + $0x4] sm:$0xf]
        %v2475 = vld [vmem:[%s2472 + $0x8] sm:$0xf]
        %v2476 = vld [vmem:[%s2472 + $0xc] sm:$0xf]
        %v2477 = vld [vmem:[%s2472 + $0x10] sm:$0xf]
        %v2478 = vld [vmem:[%s2472 + $0x14] sm:$0xf]
        %v2479 = vld [vmem:[%s2472 + $0x18] sm:$0xf]
        %v2480 = vld [vmem:[%s2472 + $0x1c] sm:$0xf]
        %v2481 = vld [vmem:[%s2472 + $0x20] sm:$0xf]
        %v2482 = vld [vmem:[%s2472 + $0x24] sm:$0xf]
        %v2483 = vld [vmem:[%s2472 + $0x28] sm:$0xf]
        %v2484 = vld [vmem:[%s2472 + $0x2c] sm:$0xf]
        %v2485 = vld [vmem:[%s2472 + $0x30] sm:$0xf]
        %v2486 = vld [vmem:[%s2472 + $0x34] sm:$0xf]
        %v2487 = vld [vmem:[%s2472 + $0x38] sm:$0xf]
        %v2488 = vld [vmem:[%s2472 + $0x3c] sm:$0xf]
        %v2489 = vunpack.c.l.bf16 %v2473
        %v2490 = vunpack.c.l.bf16 %v2474
        %v2491 = vunpack.c.l.bf16 %v2475
        %v2492 = vunpack.c.l.bf16 %v2476
        %v2493 = vunpack.c.l.bf16 %v2477
        %v2494 = vunpack.c.l.bf16 %v2478
        %v2495 = vunpack.c.l.bf16 %v2479
        %v2496 = vunpack.c.l.bf16 %v2480
        %v2497 = vunpack.c.l.bf16 %v2481
        %v2498 = vunpack.c.l.bf16 %v2482
        %v2499 = vunpack.c.l.bf16 %v2483
        %v2500 = vunpack.c.l.bf16 %v2484
        %v2501 = vunpack.c.l.bf16 %v2485
        %v2502 = vunpack.c.l.bf16 %v2486
        %v2503 = vunpack.c.l.bf16 %v2487
        %v2504 = vunpack.c.l.bf16 %v2488
        %s2505 = scalar_lea.vmem [#allocation8], 256
        %v2506 = vld [vmem:[%s2505] sm:$0xf]
        %v2507 = vld [vmem:[%s2505 + $0x4] sm:$0xf]
        %v2508 = vld [vmem:[%s2505 + $0x8] sm:$0xf]
        %v2509 = vld [vmem:[%s2505 + $0xc] sm:$0xf]
        %v2510 = vld [vmem:[%s2505 + $0x10] sm:$0xf]
        %v2511 = vld [vmem:[%s2505 + $0x14] sm:$0xf]
        %v2512 = vld [vmem:[%s2505 + $0x18] sm:$0xf]
        %v2513 = vld [vmem:[%s2505 + $0x1c] sm:$0xf]
        %v2514 = vld [vmem:[%s2505 + $0x20] sm:$0xf]
        %v2515 = vld [vmem:[%s2505 + $0x24] sm:$0xf]
        %v2516 = vld [vmem:[%s2505 + $0x28] sm:$0xf]
        %v2517 = vld [vmem:[%s2505 + $0x2c] sm:$0xf]
        %v2518 = vld [vmem:[%s2505 + $0x30] sm:$0xf]
        %v2519 = vld [vmem:[%s2505 + $0x34] sm:$0xf]
        %v2520 = vld [vmem:[%s2505 + $0x38] sm:$0xf]
        %v2521 = vld [vmem:[%s2505 + $0x3c] sm:$0xf]
        %v2522 = vunpack.c.l.bf16 %v2506
        %v2523 = vunpack.c.l.bf16 %v2507
        %v2524 = vunpack.c.l.bf16 %v2508
        %v2525 = vunpack.c.l.bf16 %v2509
        %v2526 = vunpack.c.l.bf16 %v2510
        %v2527 = vunpack.c.l.bf16 %v2511
        %v2528 = vunpack.c.l.bf16 %v2512
        %v2529 = vunpack.c.l.bf16 %v2513
        %v2530 = vunpack.c.l.bf16 %v2514
        %v2531 = vunpack.c.l.bf16 %v2515
        %v2532 = vunpack.c.l.bf16 %v2516
        %v2533 = vunpack.c.l.bf16 %v2517
        %v2534 = vunpack.c.l.bf16 %v2518
        %v2535 = vunpack.c.l.bf16 %v2519
        %v2536 = vunpack.c.l.bf16 %v2520
        %v2537 = vunpack.c.l.bf16 %v2521
        %2538 = vmatprep.subr.mxu0 0.0
        %2539 = vmatpush1.msra.mxu0 %v2294
        %2540 = vmatprep.subr.mxu0 0.0
        %2541 = vmatpush1.msra.mxu0 %v2295
        %2542 = vmatprep.subr.mxu0 0.0
        %2543 = vmatpush1.msra.mxu0 %v2296
        %2544 = vmatprep.subr.mxu0 0.0
        %2545 = vmatpush1.msra.mxu0 %v2297
        %2546 = vmatprep.subr.mxu0 0.0
        %2547 = vmatpush1.msra.mxu0 0.0
        %2548 = vmatprep.subr.mxu0 0.0
        %2549 = vmatpush1.msra.mxu0 0.0
        %2550 = vmatprep.subr.mxu0 0.0
        %2551 = vmatpush1.msra.mxu0 0.0
        %2552 = vmatprep.subr.mxu0 0.0
        %2553 = vmatpush1.msra.mxu0 0.0
        %2554 = vmatprep.subr.mxu0 0.0
        %2555 = vmatpush1.msra.mxu0 0.0
        %2556 = vmatprep.subr.mxu0 0.0
        %2557 = vmatpush1.msra.mxu0 0.0
        %2558 = vmatprep.subr.mxu0 0.0
        %2559 = vmatpush1.msra.mxu0 0.0
        %2560 = vmatprep.subr.mxu0 0.0
        %2561 = vmatpush1.msra.mxu0 0.0
        %2562 = vmatprep.subr.mxu0 0.0
        %2563 = vmatpush1.msra.mxu0 0.0
        %2564 = vmatprep.subr.mxu0 0.0
        %2565 = vmatpush1.msra.mxu0 0.0
        %2566 = vmatprep.subr.mxu0 0.0
        %2567 = vmatpush1.msra.mxu0 0.0
        %2568 = vmatprep.subr.mxu0 0.0
        %2569 = vmatpush1.msra.mxu0 0.0
        %2570 = vmatprep.subr.mxu0 0.0
        %2571 = vmatpush1.msra.mxu0 0.0
        %2572 = vmatprep.subr.mxu0 0.0
        %2573 = vmatpush1.msra.mxu0 0.0
        %2574 = vmatprep.subr.mxu0 0.0
        %2575 = vmatpush1.msra.mxu0 0.0
        %2576 = vmatprep.subr.mxu0 0.0
        %2577 = vmatpush1.msra.mxu0 0.0
        %2578 = vmatprep.subr.mxu0 0.0
        %2579 = vmatpush1.msra.mxu0 0.0
        %2580 = vmatprep.subr.mxu0 0.0
        %2581 = vmatpush1.msra.mxu0 0.0
        %2582 = vmatprep.subr.mxu0 0.0
        %2583 = vmatpush1.msra.mxu0 0.0
        %2584 = vmatprep.subr.mxu0 0.0
        %2585 = vmatpush1.msra.mxu0 0.0
        %2586 = vmatprep.subr.mxu0 0.0
        %2587 = vmatpush1.msra.mxu0 0.0
        %2588 = vmatprep.subr.mxu0 0.0
        %2589 = vmatpush1.msra.mxu0 0.0
        %2590 = vmatprep.subr.mxu0 0.0
        %2591 = vmatpush1.msra.mxu0 0.0
        %2592 = vmatprep.subr.mxu0 0.0
        %2593 = vmatpush1.msra.mxu0 0.0
        %2594 = vmatprep.subr.mxu0 0.0
        %2595 = vmatpush1.msra.mxu0 0.0
        %2596 = vmatprep.subr.mxu0 0.0
        %2597 = vmatpush1.msra.mxu0 0.0
        %2598 = vmatprep.subr.mxu0 0.0
        %2599 = vmatpush1.msra.mxu0 0.0
        %2600 = vmatprep.subr.mxu0 0.0
        %2601 = vmatpush1.msra.mxu0 0.0
        %2602 = vmatprep.mubr.f32.mxu0 0.0
        %2603 = vmatmul.mubr.f32.gmra.mrb[0].mxu0 %v453
        %v2604 = vpop.f32.mrb[0].mxu0
        %v2605 = vadd.f32 0.0, %v2604
        %v2606 = vpop.f32.mrb[0].mxu0
        %2607 = vmatprep.mubr.f32.mxu0 0.0
        %2608 = vmatmul.mubr.f32.gmra.mrb[0].mxu0 %v456
        %v2609 = vpop.f32.mrb[0].mxu0
        %v2610 = vadd.f32 0.0, %v2609
        %v2611 = vpop.f32.mrb[0].mxu0
        %2612 = vmatprep.mubr.f32.mxu0 0.0
        %2613 = vmatmul.mubr.f32.gmra.mrb[0].mxu0 %v459
        %v2614 = vpop.f32.mrb[0].mxu0
        %v2615 = vadd.f32 0.0, %v2614
        %v2616 = vpop.f32.mrb[0].mxu0
        %2617 = vmatprep.mubr.f32.mxu0 0.0
        %2618 = vmatmul.mubr.f32.gmra.mrb[0].mxu0 %v462
        %v2619 = vpop.f32.mrb[0].mxu0
        %v2620 = vadd.f32 0.0, %v2619
        %v2621 = vpop.f32.mrb[0].mxu0
        %2622 = vdwg.mxu0
        %s2623 = scalar_lea.vmem %s3, 4
        %v2624 = vld [vmem:[%s2623] sm:$0x1]
        %v2626 = vlaneseq
        %v2627 = vshrl.u32 %v2626, 7
        %v2628 = vsub.s32 0, %v2627
        %v2629 = vrot.slane %v2624, %v2628
        %2631 = vmatprep.subr.mxu0 0.0
        %2632 = vmatpush1.msra.mxu0 %v2489
        %2633 = vmatprep.subr.mxu0 0.0
        %2634 = vmatpush1.msra.mxu0 %v2490
        %2635 = vmatprep.subr.mxu0 0.0
        %2636 = vmatpush1.msra.mxu0 %v2491
        %2637 = vmatprep.subr.mxu0 0.0
        %2638 = vmatpush1.msra.mxu0 %v2492
        %2639 = vmatprep.subr.mxu0 0.0
        %2640 = vmatpush1.msra.mxu0 %v2493
        %2641 = vmatprep.subr.mxu0 0.0
        %2642 = vmatpush1.msra.mxu0 %v2494
        %2643 = vmatprep.subr.mxu0 0.0
        %2644 = vmatpush1.msra.mxu0 %v2495
        %2645 = vmatprep.subr.mxu0 0.0
        %2646 = vmatpush1.msra.mxu0 %v2496
        %2647 = vmatprep.subr.mxu0 0.0
        %2648 = vmatpush1.msra.mxu0 %v2497
        %2649 = vmatprep.subr.mxu0 0.0
        %2650 = vmatpush1.msra.mxu0 %v2498
        %2651 = vmatprep.subr.mxu0 0.0
        %2652 = vmatpush1.msra.mxu0 %v2499
        %2653 = vmatprep.subr.mxu0 0.0
        %2654 = vmatpush1.msra.mxu0 %v2500
        %2655 = vmatprep.subr.mxu0 0.0
        %2656 = vmatpush1.msra.mxu0 %v2501
        %2657 = vmatprep.subr.mxu0 0.0
        %2658 = vmatpush1.msra.mxu0 %v2502
        %2659 = vmatprep.subr.mxu0 0.0
        %2660 = vmatpush1.msra.mxu0 %v2503
        %2661 = vmatprep.subr.mxu0 0.0
        %2662 = vmatpush1.msra.mxu0 %v2504
        %2663 = vmatprep.subr.mxu0 0.0
        %2664 = vmatpush1.msra.mxu0 0.0
        %2665 = vmatprep.subr.mxu0 0.0
        %2666 = vmatpush1.msra.mxu0 0.0
        %2667 = vmatprep.subr.mxu0 0.0
        %2668 = vmatpush1.msra.mxu0 0.0
        %2669 = vmatprep.subr.mxu0 0.0
        %2670 = vmatpush1.msra.mxu0 0.0
        %2671 = vmatprep.subr.mxu0 0.0
        %2672 = vmatpush1.msra.mxu0 0.0
        %2673 = vmatprep.subr.mxu0 0.0
        %2674 = vmatpush1.msra.mxu0 0.0
        %2675 = vmatprep.subr.mxu0 0.0
        %2676 = vmatpush1.msra.mxu0 0.0
        %2677 = vmatprep.subr.mxu0 0.0
        %2678 = vmatpush1.msra.mxu0 0.0
        %2679 = vmatprep.subr.mxu0 0.0
        %2680 = vmatpush1.msra.mxu0 0.0
        %2681 = vmatprep.subr.mxu0 0.0
        %2682 = vmatpush1.msra.mxu0 0.0
        %2683 = vmatprep.subr.mxu0 0.0
        %2684 = vmatpush1.msra.mxu0 0.0
        %2685 = vmatprep.subr.mxu0 0.0
        %2686 = vmatpush1.msra.mxu0 0.0
        %2687 = vmatprep.subr.mxu0 0.0
        %2688 = vmatpush1.msra.mxu0 0.0
        %2689 = vmatprep.subr.mxu0 0.0
        %2690 = vmatpush1.msra.mxu0 0.0
        %2691 = vmatprep.subr.mxu0 0.0
        %2692 = vmatpush1.msra.mxu0 0.0
        %2693 = vmatprep.subr.mxu0 0.0
        %2694 = vmatpush1.msra.mxu0 0.0
        %2695 = vmatprep.mubr.f32.mxu0 0.0
        %2696 = vmatmul.mubr.f32.gmra.mrb[0].mxu0 %v2605
        %v2697 = vpop.f32.mrb[0].mxu0
        %v2698 = vadd.f32 %v2629, %v2697
        %v2699 = vpop.f32.mrb[0].mxu0
        %2700 = vmatprep.mubr.f32.mxu0 0.0
        %2701 = vmatmul.mubr.f32.gmra.mrb[0].mxu0 %v2610
        %v2702 = vpop.f32.mrb[0].mxu0
        %v2703 = vadd.f32 %v2629, %v2702
        %v2704 = vpop.f32.mrb[0].mxu0
        %2705 = vmatprep.mubr.f32.mxu0 0.0
        %2706 = vmatmul.mubr.f32.gmra.mrb[0].mxu0 %v2615
        %v2707 = vpop.f32.mrb[0].mxu0
        %v2708 = vadd.f32 %v2629, %v2707
        %v2709 = vpop.f32.mrb[0].mxu0
        %2710 = vmatprep.mubr.f32.mxu0 0.0
        %2711 = vmatmul.mubr.f32.gmra.mrb[0].mxu0 %v2620
        %v2712 = vpop.f32.mrb[0].mxu0
        %v2713 = vadd.f32 %v2629, %v2712
        %v2714 = vpop.f32.mrb[0].mxu0
        %2715 = vdwg.mxu0
        %v2716 = vmax.f32 %v2698, 0.0
        %v2717 = vmax.f32 %v2703, 0.0
        %v2718 = vmax.f32 %v2708, 0.0
        %v2719 = vmax.f32 %v2713, 0.0
        %s2720 = scalar_lea.vmem %s5, 4
        %v2721 = vld [vmem:[%s2720] sm:$0x1]
        %v2723 = vlaneseq
        %v2724 = vshrl.u32 %v2723, 7
        %v2725 = vsub.s32 0, %v2724
        %v2726 = vrot.slane %v2721, %v2725
        %2728 = vmatprep.subr.mxu0 0.0
        %2729 = vmatpush1.msra.mxu0 %v2522
        %2730 = vmatprep.subr.mxu0 0.0
        %2731 = vmatpush1.msra.mxu0 %v2523
        %2732 = vmatprep.subr.mxu0 0.0
        %2733 = vmatpush1.msra.mxu0 %v2524
        %2734 = vmatprep.subr.mxu0 0.0
        %2735 = vmatpush1.msra.mxu0 %v2525
        %2736 = vmatprep.subr.mxu0 0.0
        %2737 = vmatpush1.msra.mxu0 %v2526
        %2738 = vmatprep.subr.mxu0 0.0
        %2739 = vmatpush1.msra.mxu0 %v2527
        %2740 = vmatprep.subr.mxu0 0.0
        %2741 = vmatpush1.msra.mxu0 %v2528
        %2742 = vmatprep.subr.mxu0 0.0
        %2743 = vmatpush1.msra.mxu0 %v2529
        %2744 = vmatprep.subr.mxu0 0.0
        %2745 = vmatpush1.msra.mxu0 %v2530
        %2746 = vmatprep.subr.mxu0 0.0
        %2747 = vmatpush1.msra.mxu0 %v2531
        %2748 = vmatprep.subr.mxu0 0.0
        %2749 = vmatpush1.msra.mxu0 %v2532
        %2750 = vmatprep.subr.mxu0 0.0
        %2751 = vmatpush1.msra.mxu0 %v2533
        %2752 = vmatprep.subr.mxu0 0.0
        %2753 = vmatpush1.msra.mxu0 %v2534
        %2754 = vmatprep.subr.mxu0 0.0
        %2755 = vmatpush1.msra.mxu0 %v2535
        %2756 = vmatprep.subr.mxu0 0.0
        %2757 = vmatpush1.msra.mxu0 %v2536
        %2758 = vmatprep.subr.mxu0 0.0
        %2759 = vmatpush1.msra.mxu0 %v2537
        %2760 = vmatprep.subr.mxu0 0.0
        %2761 = vmatpush1.msra.mxu0 0.0
        %2762 = vmatprep.subr.mxu0 0.0
        %2763 = vmatpush1.msra.mxu0 0.0
        %2764 = vmatprep.subr.mxu0 0.0
        %2765 = vmatpush1.msra.mxu0 0.0
        %2766 = vmatprep.subr.mxu0 0.0
        %2767 = vmatpush1.msra.mxu0 0.0
        %2768 = vmatprep.subr.mxu0 0.0
        %2769 = vmatpush1.msra.mxu0 0.0
        %2770 = vmatprep.subr.mxu0 0.0
        %2771 = vmatpush1.msra.mxu0 0.0
        %2772 = vmatprep.subr.mxu0 0.0
        %2773 = vmatpush1.msra.mxu0 0.0
        %2774 = vmatprep.subr.mxu0 0.0
        %2775 = vmatpush1.msra.mxu0 0.0
        %2776 = vmatprep.subr.mxu0 0.0
        %2777 = vmatpush1.msra.mxu0 0.0
        %2778 = vmatprep.subr.mxu0 0.0
        %2779 = vmatpush1.msra.mxu0 0.0
        %2780 = vmatprep.subr.mxu0 0.0
        %2781 = vmatpush1.msra.mxu0 0.0
        %2782 = vmatprep.subr.mxu0 0.0
        %2783 = vmatpush1.msra.mxu0 0.0
        %2784 = vmatprep.subr.mxu0 0.0
        %2785 = vmatpush1.msra.mxu0 0.0
        %2786 = vmatprep.subr.mxu0 0.0
        %2787 = vmatpush1.msra.mxu0 0.0
        %2788 = vmatprep.subr.mxu0 0.0
        %2789 = vmatpush1.msra.mxu0 0.0
        %2790 = vmatprep.subr.mxu0 0.0
        %2791 = vmatpush1.msra.mxu0 0.0
        %2792 = vmatprep.mubr.f32.mxu0 0.0
        %2793 = vmatmul.mubr.f32.gmra.mrb[0].mxu0 %v2716
        %v2794 = vpop.f32.mrb[0].mxu0
        %v2795 = vadd.f32 %v2726, %v2794
        %v2796 = vpop.f32.mrb[0].mxu0
        %2797 = vmatprep.mubr.f32.mxu0 0.0
        %2798 = vmatmul.mubr.f32.gmra.mrb[0].mxu0 %v2717
        %v2799 = vpop.f32.mrb[0].mxu0
        %v2800 = vadd.f32 %v2726, %v2799
        %v2801 = vpop.f32.mrb[0].mxu0
        %2802 = vmatprep.mubr.f32.mxu0 0.0
        %2803 = vmatmul.mubr.f32.gmra.mrb[0].mxu0 %v2718
        %v2804 = vpop.f32.mrb[0].mxu0
        %v2805 = vadd.f32 %v2726, %v2804
        %v2806 = vpop.f32.mrb[0].mxu0
        %2807 = vmatprep.mubr.f32.mxu0 0.0
        %2808 = vmatmul.mubr.f32.gmra.mrb[0].mxu0 %v2719
        %v2809 = vpop.f32.mrb[0].mxu0
        %v2810 = vadd.f32 %v2726, %v2809
        %v2811 = vpop.f32.mrb[0].mxu0
        %2812 = vdwg.mxu0
        %v2813 = vmax.f32 %v2795, 0.0
        %v2814 = vmax.f32 %v2800, 0.0
        %v2815 = vmax.f32 %v2805, 0.0
        %v2816 = vmax.f32 %v2810, 0.0
        %2817 = vmatprep.subr.mxu0 0.0
        %2818 = vmatpush1.msra.mxu0 %v2813
        %2819 = vmatprep.subr.mxu0 0.0
        %2820 = vmatpush1.msra.mxu0 %v2814
        %2821 = vmatprep.subr.mxu0 0.0
        %2822 = vmatpush1.msra.mxu0 %v2815
        %2823 = vmatprep.subr.mxu0 0.0
        %2824 = vmatpush1.msra.mxu0 %v2816
        %2825 = vmatprep.subr.mxu0 0.0
        %2826 = vmatpush1.msra.mxu0 0.0
        %2827 = vmatprep.subr.mxu0 0.0
        %2828 = vmatpush1.msra.mxu0 0.0
        %2829 = vmatprep.subr.mxu0 0.0
        %2830 = vmatpush1.msra.mxu0 0.0
        %2831 = vmatprep.subr.mxu0 0.0
        %2832 = vmatpush1.msra.mxu0 0.0
        %2833 = vmatprep.subr.mxu0 0.0
        %2834 = vmatpush1.msra.mxu0 0.0
        %2835 = vmatprep.subr.mxu0 0.0
        %2836 = vmatpush1.msra.mxu0 0.0
        %2837 = vmatprep.subr.mxu0 0.0
        %2838 = vmatpush1.msra.mxu0 0.0
        %2839 = vmatprep.subr.mxu0 0.0
        %2840 = vmatpush1.msra.mxu0 0.0
        %2841 = vmatprep.subr.mxu0 0.0
        %2842 = vmatpush1.msra.mxu0 0.0
        %2843 = vmatprep.subr.mxu0 0.0
        %2844 = vmatpush1.msra.mxu0 0.0
        %2845 = vmatprep.subr.mxu0 0.0
        %2846 = vmatpush1.msra.mxu0 0.0
        %2847 = vmatprep.subr.mxu0 0.0
        %2848 = vmatpush1.msra.mxu0 0.0
        %2849 = vmatprep.subr.mxu0 0.0
        %2850 = vmatpush1.msra.mxu0 0.0
        %2851 = vmatprep.subr.mxu0 0.0
        %2852 = vmatpush1.msra.mxu0 0.0
        %2853 = vmatprep.subr.mxu0 0.0
        %2854 = vmatpush1.msra.mxu0 0.0
        %2855 = vmatprep.subr.mxu0 0.0
        %2856 = vmatpush1.msra.mxu0 0.0
        %2857 = vmatprep.subr.mxu0 0.0
        %2858 = vmatpush1.msra.mxu0 0.0
        %2859 = vmatprep.subr.mxu0 0.0
        %2860 = vmatpush1.msra.mxu0 0.0
        %2861 = vmatprep.subr.mxu0 0.0
        %2862 = vmatpush1.msra.mxu0 0.0
        %2863 = vmatprep.subr.mxu0 0.0
        %2864 = vmatpush1.msra.mxu0 0.0
        %2865 = vmatprep.subr.mxu0 0.0
        %2866 = vmatpush1.msra.mxu0 0.0
        %2867 = vmatprep.subr.mxu0 0.0
        %2868 = vmatpush1.msra.mxu0 0.0
        %2869 = vmatprep.subr.mxu0 0.0
        %2870 = vmatpush1.msra.mxu0 0.0
        %2871 = vmatprep.subr.mxu0 0.0
        %2872 = vmatpush1.msra.mxu0 0.0
        %2873 = vmatprep.subr.mxu0 0.0
        %2874 = vmatpush1.msra.mxu0 0.0
        %2875 = vmatprep.subr.mxu0 0.0
        %2876 = vmatpush1.msra.mxu0 0.0
        %2877 = vmatprep.subr.mxu0 0.0
        %2878 = vmatpush1.msra.mxu0 0.0
        %2879 = vmatprep.subr.mxu0 0.0
        %2880 = vmatpush1.msra.mxu0 0.0
        %2881 = vmatprep.mubr.f32.mxu0 0.0
        %2882 = vmatmul.mubr.f32.gmra.mrb[0].mxu0 %v742
        %v2883 = vpop.f32.mrb[0].mxu0
        %v2884 = vadd.f32 0.0, %v2883
        %v2885 = vpop.f32.mrb[0].mxu0
        %2886 = vdwg.mxu0
        %s2887 = scalar_lea.vmem [#allocation10], 256
        %v2888 = vld [vmem:[%s2887] sm:$0xf]
        %v2889 = vld [vmem:[%s2887 + $0x4] sm:$0xf]
        %v2890 = vld [vmem:[%s2887 + $0x8] sm:$0xf]
        %v2891 = vld [vmem:[%s2887 + $0xc] sm:$0xf]
        %v2892 = vld [vmem:[%s2887 + $0x10] sm:$0xf]
        %v2893 = vld [vmem:[%s2887 + $0x14] sm:$0xf]
        %v2894 = vld [vmem:[%s2887 + $0x18] sm:$0xf]
        %v2895 = vld [vmem:[%s2887 + $0x1c] sm:$0xf]
        %v2896 = vld [vmem:[%s2887 + $0x20] sm:$0xf]
        %v2897 = vld [vmem:[%s2887 + $0x24] sm:$0xf]
        %v2898 = vld [vmem:[%s2887 + $0x28] sm:$0xf]
        %v2899 = vld [vmem:[%s2887 + $0x2c] sm:$0xf]
        %v2900 = vld [vmem:[%s2887 + $0x30] sm:$0xf]
        %v2901 = vld [vmem:[%s2887 + $0x34] sm:$0xf]
        %v2902 = vld [vmem:[%s2887 + $0x38] sm:$0xf]
        %v2903 = vld [vmem:[%s2887 + $0x3c] sm:$0xf]
        %v2904 = vunpack.c.l.bf16 %v2888
        %v2905 = vunpack.c.l.bf16 %v2889
        %v2906 = vunpack.c.l.bf16 %v2890
        %v2907 = vunpack.c.l.bf16 %v2891
        %v2908 = vunpack.c.l.bf16 %v2892
        %v2909 = vunpack.c.l.bf16 %v2893
        %v2910 = vunpack.c.l.bf16 %v2894
        %v2911 = vunpack.c.l.bf16 %v2895
        %v2912 = vunpack.c.l.bf16 %v2896
        %v2913 = vunpack.c.l.bf16 %v2897
        %v2914 = vunpack.c.l.bf16 %v2898
        %v2915 = vunpack.c.l.bf16 %v2899
        %v2916 = vunpack.c.l.bf16 %v2900
        %v2917 = vunpack.c.l.bf16 %v2901
        %v2918 = vunpack.c.l.bf16 %v2902
        %v2919 = vunpack.c.l.bf16 %v2903
        %2920 = vmatprep.subr.mxu0 0.0
        %2921 = vmatpush1.msra.mxu0 %v2904
        %2922 = vmatprep.subr.mxu0 0.0
        %2923 = vmatpush1.msra.mxu0 %v2905
        %2924 = vmatprep.subr.mxu0 0.0
        %2925 = vmatpush1.msra.mxu0 %v2906
        %2926 = vmatprep.subr.mxu0 0.0
        %2927 = vmatpush1.msra.mxu0 %v2907
        %2928 = vmatprep.subr.mxu0 0.0
        %2929 = vmatpush1.msra.mxu0 %v2908
        %2930 = vmatprep.subr.mxu0 0.0
        %2931 = vmatpush1.msra.mxu0 %v2909
        %2932 = vmatprep.subr.mxu0 0.0
        %2933 = vmatpush1.msra.mxu0 %v2910
        %2934 = vmatprep.subr.mxu0 0.0
        %2935 = vmatpush1.msra.mxu0 %v2911
        %2936 = vmatprep.subr.mxu0 0.0
        %2937 = vmatpush1.msra.mxu0 %v2912
        %2938 = vmatprep.subr.mxu0 0.0
        %2939 = vmatpush1.msra.mxu0 %v2913
        %2940 = vmatprep.subr.mxu0 0.0
        %2941 = vmatpush1.msra.mxu0 %v2914
        %2942 = vmatprep.subr.mxu0 0.0
        %2943 = vmatpush1.msra.mxu0 %v2915
        %2944 = vmatprep.subr.mxu0 0.0
        %2945 = vmatpush1.msra.mxu0 %v2916
        %2946 = vmatprep.subr.mxu0 0.0
        %2947 = vmatpush1.msra.mxu0 %v2917
        %2948 = vmatprep.subr.mxu0 0.0
        %2949 = vmatpush1.msra.mxu0 %v2918
        %2950 = vmatprep.subr.mxu0 0.0
        %2951 = vmatpush1.msra.mxu0 %v2919
        %2952 = vmatprep.subr.mxu0 0.0
        %2953 = vmatpush1.msra.mxu0 0.0
        %2954 = vmatprep.subr.mxu0 0.0
        %2955 = vmatpush1.msra.mxu0 0.0
        %2956 = vmatprep.subr.mxu0 0.0
        %2957 = vmatpush1.msra.mxu0 0.0
        %2958 = vmatprep.subr.mxu0 0.0
        %2959 = vmatpush1.msra.mxu0 0.0
        %2960 = vmatprep.subr.mxu0 0.0
        %2961 = vmatpush1.msra.mxu0 0.0
        %2962 = vmatprep.subr.mxu0 0.0
        %2963 = vmatpush1.msra.mxu0 0.0
        %2964 = vmatprep.subr.mxu0 0.0
        %2965 = vmatpush1.msra.mxu0 0.0
        %2966 = vmatprep.subr.mxu0 0.0
        %2967 = vmatpush1.msra.mxu0 0.0
        %2968 = vmatprep.subr.mxu0 0.0
        %2969 = vmatpush1.msra.mxu0 0.0
        %2970 = vmatprep.subr.mxu0 0.0
        %2971 = vmatpush1.msra.mxu0 0.0
        %2972 = vmatprep.subr.mxu0 0.0
        %2973 = vmatpush1.msra.mxu0 0.0
        %2974 = vmatprep.subr.mxu0 0.0
        %2975 = vmatpush1.msra.mxu0 0.0
        %2976 = vmatprep.subr.mxu0 0.0
        %2977 = vmatpush1.msra.mxu0 0.0
        %2978 = vmatprep.subr.mxu0 0.0
        %2979 = vmatpush1.msra.mxu0 0.0
        %2980 = vmatprep.subr.mxu0 0.0
        %2981 = vmatpush1.msra.mxu0 0.0
        %2982 = vmatprep.subr.mxu0 0.0
        %2983 = vmatpush1.msra.mxu0 0.0
        %2984 = vmatprep.mubr.f32.mxu0 0.0
        %2985 = vmatmul.mubr.f32.gmra.mrb[0].mxu0 %v2884
        %v2986 = vpop.f32.mrb[0].mxu0
        %v2987 = vadd.f32 0.0, %v2986
        %v2988 = vpop.f32.mrb[0].mxu0
        %2989 = vdwg.mxu0
        %v2990 = vadd.f32 %v2471, %v2987
        %v2991 = vtanh.pop %v2990
        %2992 = vst [vmem:[%s378] sm:$0x1] %v2991
        %s2993 = sand.u32 %s193, 1
        %s2994 = scalar_lea.sflag [#allocation4], %s2993
        %s2995 = sand.u32 %s193, 1
        %s2996 = scalar_lea.vmem [#allocation11], %s2995
        // Predicated region
        $region69: #{tpu_custom_call.1} parent=47 // pred_check
          %p2997 = pneg %p203
        $region70: #{tpu_custom_call.1} parent=47 // pred_check_branch
          %2999 = sbr.rel (%p2997) target = $region72
        $region71: #{tpu_custom_call.1} parent=47 // pred_region
          %s3001 = ssub.s32 16, 16
          %3002 = vsyncadd %s2994, %s3001
          %s3003 = smul.addr %s28, 16
          %s3004 = scalar_lea.hbm %s7, %s3003
          %s3006 = sshll.u32 %s2996, 4
          %s3007 = int_to_ptr.vmem [resolvable:$true] %s3006
          %3009 = dma.vmem_to_hbm [thread:$0]  %s3007, 16, %s3004, %s2994
        $region72: #{tpu_custom_call.1} parent=47 // pred_fallthru
          _
      $region48: #{tpu_custom_call.1} parent=5 // pred_fallthru
        _
      %p3010 = scmp.le.s32.totalorder 2, %s23
      // Predicated region
      $region73: #{tpu_custom_call.1} parent=5 // pred_check
        %p3011 = pneg %p3010
      $region74: #{tpu_custom_call.1} parent=5 // pred_check_branch
        %3013 = sbr.rel (%p3011) target = $region76
      $region75: #{tpu_custom_call.1} parent=5 // pred_region
        %s3014 = ssub.s32 %s23, 2
        // Predicated region
        $region77: #{tpu_custom_call.1} parent=75 // pred_check
          %p3015 = pneg %p209
        $region78: #{tpu_custom_call.1} parent=75 // pred_check_branch
          %3017 = sbr.rel (%p3015) target = $region80
        $region79: #{tpu_custom_call.1} parent=75 // pred_region
          %s3018 = sand.u32 %s194, 1
          %s3019 = scalar_lea.sflag [#allocation4], %s3018
          %s3020 = sand.u32 %s194, 1
          %s3021 = scalar_lea.vmem [#allocation11], %s3020
          %3022 = dma.done %s3019, 16
        $region80: #{tpu_custom_call.1} parent=75 // pred_fallthru
          _
      $region76: #{tpu_custom_call.1} parent=5 // pred_fallthru
        _
    $region6: #{tpu_custom_call.1} parent=1 // loop_footer
      %s27 = sadd.s32 1, %s23
    $region7: #{tpu_custom_call.1} parent=1 // loop_footer_branch
      %22 = sbr.rel target = $region3
    $region8: #{tpu_custom_call.1} parent=1 // loop_exit
      _
    %3023 = vsyncpa [#allocation3], 1
    %s3024 = scalar_lea.sflag [#allocation3], 1
    %3025 = vsyncpa %s3024, 1
    %3026 = vsyncpa [#allocation6], 1
    %s3027 = scalar_lea.sflag [#allocation6], 1
    %3028 = vsyncpa %s3027, 1
    %3029 = vsyncpa [#allocation9], 1
    %3030 = vsyncpa [#allocation4], 1
    %s3031 = scalar_lea.sflag [#allocation4], 1
    %3032 = vsyncpa %s3031, 1

</llo_original>
